<compile_context>
chip_gen: v6e
topology: v6e:2x2x1
jax: 0.10.0
libtpu: 0.0.40
codegen_flags: <defaults>
</compile_context>

<pallas_src>
import functools

import numpy as np
import jax
import jax.numpy as jnp
from jax import lax
from jax.experimental import pallas as pl
from jax.experimental.pallas import tpu as pltpu

EPS = 1e-07
FLOAT_MAX = 1e7
LANE = 128
VMEM_LIMIT = 48 * 1024 * 1024        # explicit scoped-VMEM budget (fits v5e/v6e/v7x)


def _round_up(x, m):
    return (x + m - 1) // m * m


def _row_tile(m, cap=512):
    """Largest row tile <= cap that evenly divides m (falls back to full m)."""
    t = min(m, cap)
    if m % t:
        t = m
    return t


# ---------------------------------------------------------------------------
# Kernel 1: encoder stand-in patch conv  ==  (M, K) @ (K, 128) + bias, ReLU.
# ---------------------------------------------------------------------------
def _enc_kernel(x_ref, w_ref, b_ref, o_ref):
    acc = jnp.dot(x_ref[...], w_ref[...], preferred_element_type=jnp.float32)
    acc = jnp.maximum(acc + b_ref[...], 0.0)
    o_ref[...] = acc.astype(o_ref.dtype)


def encoder_matmul(x_bf16, w_bf16, b_f32):
    m, k = x_bf16.shape
    n = w_bf16.shape[1]
    tile_m = _row_tile(m)
    return pl.pallas_call(
        _enc_kernel,
        out_shape=jax.ShapeDtypeStruct((m, n), jnp.bfloat16),
        grid=(m // tile_m,),
        in_specs=[
            pl.BlockSpec((tile_m, k), lambda i: (i, 0)),
            pl.BlockSpec((k, n), lambda i: (0, 0)),
            pl.BlockSpec((1, n), lambda i: (0, 0)),
        ],
        out_specs=pl.BlockSpec((tile_m, n), lambda i: (i, 0)),
        compiler_params=pltpu.CompilerParams(
            dimension_semantics=("parallel",),
            vmem_limit_bytes=VMEM_LIMIT),
    )(x_bf16, w_bf16, b_f32)


# ---------------------------------------------------------------------------
# Kernel 2: fused heads.  3x3 conv (app_mu | app_logvar | vis logits) done as
# 9 shift-matrix taps on the MXU, plus the RelaxedBernoulli probs / rsample
# epilogue.  Output column layout (lane-dense, width 128):
#   [0:PL]            app_mu
#   [PL:2PL]          app_logvar
#   [2PL:2PL+P]       vis_mean  = sigmoid(logits)
#   [2PL+P:2PL+2P]    z_vis     = sigmoid((logits + logistic_noise) / temp)
#   [2PL+2P:128]      zero padding
# ---------------------------------------------------------------------------
def _heads_kernel(x_ref, shift_ref, w_ref, b_ref, noise_ref, o_ref, *,
                  pl_dim, p, temp):
    x = x_ref[0]                                   # (S, Cp) bf16
    s_dim = o_ref.shape[1]
    n_out = o_ref.shape[2]
    acc = jnp.zeros((s_dim, n_out), jnp.float32)
    for t in range(9):                             # unrolled 3x3 taps
        # shift_ref[t] is a 0/1 row-gather (with zero padding) -> exact in bf16.
        xt = jnp.dot(shift_ref[t], x, preferred_element_type=jnp.float32)
        acc = acc + jnp.dot(xt.astype(jnp.bfloat16), w_ref[t],
                            preferred_element_type=jnp.float32)
    acc = acc + b_ref[...]
    col = lax.broadcasted_iota(jnp.int32, acc.shape, 1)
    probs = jax.nn.sigmoid(acc)                                    # q_z_vis.probs
    sample = jax.nn.sigmoid((acc + noise_ref[0]) * (1.0 / temp))   # rsample()
    is_probs = (col >= 2 * pl_dim) & (col < 2 * pl_dim + p)
    is_sample = (col >= 2 * pl_dim + p) & (col < 2 * pl_dim + 2 * p)
    o_ref[0] = jnp.where(is_probs, probs, jnp.where(is_sample, sample, acc))


def heads_conv(enc_bsc, shift_mats, w_heads, b_heads, noise, *, pl_dim, p, temp):
    B, S, Cp = enc_bsc.shape
    n_out = w_heads.shape[-1]
    return pl.pallas_call(
        functools.partial(_heads_kernel, pl_dim=pl_dim, p=p, temp=temp),
        out_shape=jax.ShapeDtypeStruct((B, S, n_out), jnp.float32),
        grid=(B,),
        in_specs=[
            pl.BlockSpec((1, S, Cp), lambda b: (b, 0, 0)),
            pl.BlockSpec((9, S, S), lambda b: (0, 0, 0)),
            pl.BlockSpec((9, Cp, n_out), lambda b: (0, 0, 0)),
            pl.BlockSpec((1, n_out), lambda b: (0, 0)),
            pl.BlockSpec((1, S, n_out), lambda b: (b, 0, 0)),
        ],
        out_specs=pl.BlockSpec((1, S, n_out), lambda b: (b, 0, 0)),
        compiler_params=pltpu.CompilerParams(
            dimension_semantics=("parallel",),
            vmem_limit_bytes=VMEM_LIMIT),
    )(enc_bsc, shift_mats, w_heads, b_heads, noise)


def build_shift_mats(BH, BW):
    """shift_mats[t] @ x applies 3x3-conv tap t = kh*3+kw as a zero-padded row
    gather on the (BH*BW, C) flattened spatial grid."""
    S = BH * BW
    mats = np.zeros((9, S, S), np.float32)
    for kh in range(3):
        for kw in range(3):
            dh, dw = kh - 1, kw - 1
            t = kh * 3 + kw
            for i in range(BH):
                for j in range(BW):
                    ii, jj = i + dh, j + dw
                    if 0 <= ii < BH and 0 <= jj < BW:
                        mats[t, i * BW + j, ii * BW + jj] = 1.0
    return mats


# ---------------------------------------------------------------------------
# Kernel 3: weighted appearance pooling + reparameterize.
# The P -> P*L expansion of vis_mean happens in-kernel (tiny MXU matmul with a
# 0/1 expansion matrix), so no L-times expanded arrays ever hit HBM.  The
# spatial (S) reduction is expressed as an MXU dot with a ones row.
# ---------------------------------------------------------------------------
def _pool_kernel(mu_ref, lv_ref, vis_ref, noise_ref, e_ref,
                 muw_ref, varw_ref, zapp_ref):
    mu = mu_ref[0]                                             # (S, PL) f32
    var = jnp.clip(jnp.exp(lv_ref[0]), EPS, FLOAT_MAX)         # (S, PL) f32
    vis_e = jnp.dot(vis_ref[0], e_ref[...],                    # (S, PL) = vis @ E
                    preferred_element_type=jnp.float32)
    ones = jnp.ones((1, mu.shape[0]), jnp.float32)
    vsum = jnp.dot(ones, vis_e, preferred_element_type=jnp.float32) + EPS
    mu_w = jnp.dot(ones, mu * vis_e, preferred_element_type=jnp.float32) / vsum
    var_w = (jnp.dot(ones, var * vis_e,
                     preferred_element_type=jnp.float32) + EPS) / vsum
    muw_ref[0] = mu_w
    varw_ref[0] = var_w
    zapp_ref[0] = mu_w + noise_ref[0] * jnp.sqrt(var_w)        # reparameterize


def pool_reparam(app_mu, app_logvar, vis_mean, noise, expand_mat):
    B, S, PL = app_mu.shape
    P = vis_mean.shape[-1]
    spec_bsl = pl.BlockSpec((1, S, PL), lambda b: (b, 0, 0))
    spec_vec = pl.BlockSpec((1, 1, PL), lambda b: (b, 0, 0))
    return pl.pallas_call(
        _pool_kernel,
        out_shape=(jax.ShapeDtypeStruct((B, 1, PL), jnp.float32),
                   jax.ShapeDtypeStruct((B, 1, PL), jnp.float32),
                   jax.ShapeDtypeStruct((B, 1, PL), jnp.float32)),
        grid=(B,),
        in_specs=[
            spec_bsl,
            spec_bsl,
            pl.BlockSpec((1, S, P), lambda b: (b, 0, 0)),
            spec_vec,
            pl.BlockSpec((P, PL), lambda b: (0, 0)),
        ],
        out_specs=(spec_vec, spec_vec, spec_vec),
        compiler_params=pltpu.CompilerParams(
            dimension_semantics=("parallel",),
            vmem_limit_bytes=VMEM_LIMIT),
    )(app_mu, app_logvar, vis_mean, noise, expand_mat)


# ---------------------------------------------------------------------------
# Kernel 4: decoder stand-in.  z_app_expand * z_vis_expand is fused into the
# decoder matmul, so the (B, S, PL) product stays in VMEM.
# ---------------------------------------------------------------------------
def _dec_kernel(zapp_ref, zvis_ref, e_ref, w_ref, b_ref, o_ref):
    zvis_e = jnp.dot(zvis_ref[0], e_ref[...],                  # (S, PL)
                     preferred_element_type=jnp.float32)
    zav = zapp_ref[0] * zvis_e                                 # z_app * z_vis (VMEM only)
    o_ref[0] = jnp.dot(zav.astype(jnp.bfloat16), w_ref[...],
                       preferred_element_type=jnp.float32) + b_ref[...]


def decoder_matmul(z_app, z_vis, expand_mat, w_dec, b_dec):
    B, S, P = z_vis.shape
    PL = z_app.shape[-1]
    n_out = w_dec.shape[-1]
    return pl.pallas_call(
        _dec_kernel,
        out_shape=jax.ShapeDtypeStruct((B, S, n_out), jnp.float32),
        grid=(B,),
        in_specs=[
            pl.BlockSpec((1, 1, PL), lambda b: (b, 0, 0)),
            pl.BlockSpec((1, S, P), lambda b: (b, 0, 0)),
            pl.BlockSpec((P, PL), lambda b: (0, 0)),
            pl.BlockSpec((PL, n_out), lambda b: (0, 0)),
            pl.BlockSpec((1, n_out), lambda b: (0, 0)),
        ],
        out_specs=pl.BlockSpec((1, S, n_out), lambda b: (b, 0, 0)),
        compiler_params=pltpu.CompilerParams(
            dimension_semantics=("parallel",),
            vmem_limit_bytes=VMEM_LIMIT),
    )(z_app, z_vis, expand_mat, w_dec, b_dec)


# ---------------------------------------------------------------------------
# Forward pass (wrapper glue: reshapes / transposes / RNG only)
# ---------------------------------------------------------------------------
def patchy_vae_forward(x, params, key, *, L, P, scale, temp=0.5):
    B, C, H, W = x.shape
    BH, BW = H // scale, W // scale
    S = BH * BW
    PL = P * L
    n_heads = params["w_heads"].shape[-1]

    # --- encoder stand-in: scale x scale patch conv (stride=scale) + ReLU ---
    patches = x.reshape(B, C, BH, scale, BW, scale)
    patches = patches.transpose(0, 2, 4, 1, 3, 5).reshape(B * S, C * scale * scale)
    encode = encoder_matmul(patches.astype(jnp.bfloat16),
                            params["w_enc"], params["b_enc"])        # (B*S, Cp) bf16
    encode = encode.reshape(B, S, encode.shape[-1])

    # --- fused heads: 3x3 conv + RelaxedBernoulli(temp, logits) epilogue ---
    shift_mats = jnp.asarray(build_shift_mats(BH, BW), jnp.bfloat16)
    k_u, k_n = jax.random.split(key)
    u = jnp.clip(jax.random.uniform(k_u, (B, S, n_heads), jnp.float32),
                 1e-6, 1.0 - 1e-6)
    logistic = jnp.log(u) - jnp.log1p(-u)        # only the z_vis columns are used
    heads = heads_conv(encode, shift_mats, params["w_heads"], params["b_heads"],
                       logistic, pl_dim=PL, p=P, temp=temp)          # (B, S, 128)

    app_mu = heads[:, :, :PL]
    app_logvar = heads[:, :, PL:2 * PL]
    vis_mean = heads[:, :, 2 * PL:2 * PL + P]        # q_z_vis.probs
    z_vis = heads[:, :, 2 * PL + P:2 * PL + 2 * P]   # q_z_vis.rsample()

    # --- weighted pooling + reparameterize (P -> P*L expansion in-kernel) ---
    expand_mat = jnp.repeat(jnp.eye(P, dtype=jnp.float32), L, axis=1)  # (P, PL)
    noise = jax.random.normal(k_n, (B, 1, PL), jnp.float32)
    mu_w, var_w, z_app = pool_reparam(app_mu, app_logvar, vis_mean, noise, expand_mat)

    # --- decoder stand-in: fused z_app*z_vis + per-location linear + depth-to-space ---
    dec = decoder_matmul(z_app, z_vis, expand_mat, params["w_dec"], params["b_dec"])
    dec = dec[:, :, :C * scale * scale]
    dec = dec.reshape(B, BH, BW, C, scale, scale).transpose(0, 3, 1, 4, 2, 5)
    recon_x = dec.reshape(B, C, H, W)

    vis_mean_nchw = vis_mean.reshape(B, BH, BW, P).transpose(0, 3, 1, 2)
    return recon_x, mu_w.reshape(B, PL), var_w.reshape(B, PL), vis_mean_nchw


# ---------------------------------------------------------------------------
# Parameter packing: pad every output width up to 128 lanes, duplicate the vis
# logit columns for the rsample path, cast matmul weights to bf16.
# ---------------------------------------------------------------------------
def prepare_params(raw, *, C, Ce, P, L, scale):
    PL = P * L
    k_enc = C * scale * scale
    cp = _round_up(Ce, LANE)
    n_heads = _round_up(2 * PL + 2 * P, LANE)
    n_dec = _round_up(k_enc, LANE)

    w_enc = jnp.zeros((k_enc, cp), jnp.float32).at[:, :Ce].set(raw["w_enc"])
    b_enc = jnp.zeros((1, cp), jnp.float32).at[0, :Ce].set(raw["b_enc"])

    w_heads = jnp.zeros((9, cp, n_heads), jnp.float32)
    w_heads = w_heads.at[:, :Ce, :PL].set(raw["w_mu"])
    w_heads = w_heads.at[:, :Ce, PL:2 * PL].set(raw["w_logvar"])
    w_heads = w_heads.at[:, :Ce, 2 * PL:2 * PL + P].set(raw["w_vis"])
    w_heads = w_heads.at[:, :Ce, 2 * PL + P:2 * PL + 2 * P].set(raw["w_vis"])
    b_heads = jnp.zeros((1, n_heads), jnp.float32)
    b_heads = b_heads.at[0, :PL].set(raw["b_mu"])
    b_heads = b_heads.at[0, PL:2 * PL].set(raw["b_logvar"])
    b_heads = b_heads.at[0, 2 * PL:2 * PL + P].set(raw["b_vis"])
    b_heads = b_heads.at[0, 2 * PL + P:2 * PL + 2 * P].set(raw["b_vis"])

    w_dec = jnp.zeros((PL, n_dec), jnp.float32).at[:, :k_enc].set(raw["w_dec"])
    b_dec = jnp.zeros((1, n_dec), jnp.float32).at[0, :k_enc].set(raw["b_dec"])

    return dict(
        w_enc=w_enc.astype(jnp.bfloat16), b_enc=b_enc,
        w_heads=w_heads.astype(jnp.bfloat16), b_heads=b_heads,
        w_dec=w_dec.astype(jnp.bfloat16), b_dec=b_dec,
    )


# ---------------------------------------------------------------------------
if __name__ == "__main__":
    B = 2
    C, H, W = 1, 32, 32           # input_size
    base_depth = 16
    L = 8                         # hidden_size
    P = 4                         # num_parts
    scale = 8
    BH, BW = H // scale, W // scale
    Ce = base_depth * scale // 2  # pyramid encoder_out_channels = 64
    PL = P * L

    key = jax.random.PRNGKey(0)
    ks = jax.random.split(key, 10)
    x = jax.random.normal(ks[0], (B, C, H, W), jnp.float32)
    raw = dict(
        w_enc=0.05 * jax.random.normal(ks[1], (C * scale * scale, Ce), jnp.float32),
        b_enc=0.05 * jax.random.normal(ks[2], (Ce,), jnp.float32),
        w_mu=0.05 * jax.random.normal(ks[3], (9, Ce, PL), jnp.float32),
        b_mu=0.05 * jax.random.normal(ks[4], (PL,), jnp.float32),
        w_logvar=0.05 * jax.random.normal(ks[5], (9, Ce, PL), jnp.float32),
        b_logvar=0.05 * jax.random.normal(ks[6], (PL,), jnp.float32),
        w_vis=0.05 * jax.random.normal(ks[7], (9, Ce, P), jnp.float32),
        b_vis=0.05 * jax.random.normal(ks[8], (P,), jnp.float32),
        w_dec=0.05 * jax.random.normal(ks[9], (PL, C * scale * scale), jnp.float32),
        b_dec=jnp.zeros((C * scale * scale,), jnp.float32),
    )
    params = prepare_params(raw, C=C, Ce=Ce, P=P, L=L, scale=scale)

    fwd = jax.jit(functools.partial(patchy_vae_forward,
                                    L=L, P=P, scale=scale, temp=0.5))
    outs = jax.block_until_ready(fwd(x, params, jax.random.PRNGKey(42)))

    recon_x, mu_w, var_w, vis_mean = outs
    assert recon_x.shape == (B, C, H, W)
    assert mu_w.shape == (B, PL)
    assert var_w.shape == (B, PL)
    assert vis_mean.shape == (B, P, BH, BW)
    assert bool(jnp.isfinite(recon_x).all())
    assert bool(jnp.isfinite(mu_w).all()) and bool(jnp.isfinite(var_w).all())
    print("KERNEL_OK")
</pallas_src>

<mosaic_0001>
module attributes {stable_mosaic.version = 11 : i64} {
  func.func @_heads_kernel(%arg0: i32, %arg1: memref<1x16x128xbf16, #tpu.memory_space<vmem>>, %arg2: memref<9x16x16xbf16, #tpu.memory_space<vmem>>, %arg3: memref<9x128x128xbf16, #tpu.memory_space<vmem>>, %arg4: memref<1x128xf32, #tpu.memory_space<vmem>>, %arg5: memref<1x16x128xf32, #tpu.memory_space<vmem>>, %arg6: memref<1x16x128xf32, #tpu.memory_space<vmem>>) attributes {dimension_semantics = [#tpu.dimension_semantics<parallel>], iteration_bounds = array<i64: 2>, scalar_prefetch = 0 : i64, scratch_operands = 0 : i64, tpu.core_type = #tpu.core_type<tc>, window_params = [{transform_indices = @transform_0, window_bounds = array<i64: 1, 16, 128>}, {pipeline_mode = #tpu.pipeline_mode<synchronous>, transform_indices = @transform_1, window_bounds = array<i64: 9, 16, 16>}, {pipeline_mode = #tpu.pipeline_mode<synchronous>, transform_indices = @transform_2, window_bounds = array<i64: 9, 128, 128>}, {pipeline_mode = #tpu.pipeline_mode<synchronous>, transform_indices = @transform_3, window_bounds = array<i64: 1, 128>}, {transform_indices = @transform_4, window_bounds = array<i64: 1, 16, 128>}, {transform_indices = @transform_5, window_bounds = array<i64: 1, 16, 128>}]} {
    %c0 = arith.constant 0 : index
    %c0_0 = arith.constant 0 : index
    %c0_1 = arith.constant 0 : index
    %0 = vector.load %arg1[%c0, %c0_0, %c0_1] : memref<1x16x128xbf16, #tpu.memory_space<vmem>>, vector<1x16x128xbf16>
    %1 = vector.shape_cast %0 : vector<1x16x128xbf16> to vector<16x128xbf16>
    %cst = arith.constant 0.000000e+00 : f32
    %2 = vector.broadcast %cst : f32 to vector<16x128xf32>
    %c0_2 = arith.constant 0 : index
    %c0_3 = arith.constant 0 : index
    %c0_4 = arith.constant 0 : index
    %3 = vector.load %arg2[%c0_2, %c0_3, %c0_4] : memref<9x16x16xbf16, #tpu.memory_space<vmem>>, vector<1x16x16xbf16>
    %4 = vector.shape_cast %3 : vector<1x16x16xbf16> to vector<16x16xbf16>
    %cst_5 = arith.constant dense<0.000000e+00> : vector<16x128xf32>
    %5 = tpu.matmul %4, %1, %cst_5 {dimension_numbers = #tpu.dot_dimension_numbers<[1], [0], [0], [1], [0, 0, 1, 1], [], []>} : vector<16x16xbf16>, vector<16x128xbf16>, vector<16x128xf32> -> vector<16x128xf32>
    %6 = arith.truncf %5 : vector<16x128xf32> to vector<16x128xbf16>
    %c0_6 = arith.constant 0 : index
    %c0_7 = arith.constant 0 : index
    %c0_8 = arith.constant 0 : index
    %7 = vector.load %arg3[%c0_6, %c0_7, %c0_8] : memref<9x128x128xbf16, #tpu.memory_space<vmem>>, vector<1x128x128xbf16>
    %8 = vector.shape_cast %7 : vector<1x128x128xbf16> to vector<128x128xbf16>
    %cst_9 = arith.constant dense<0.000000e+00> : vector<16x128xf32>
    %9 = tpu.matmul %6, %8, %cst_9 {dimension_numbers = #tpu.dot_dimension_numbers<[1], [0], [0], [1], [0, 0, 1, 1], [], []>} : vector<16x128xbf16>, vector<128x128xbf16>, vector<16x128xf32> -> vector<16x128xf32>
    %10 = arith.addf %2, %9 : vector<16x128xf32>
    %c1 = arith.constant 1 : index
    %c0_10 = arith.constant 0 : index
    %c0_11 = arith.constant 0 : index
    %11 = vector.load %arg2[%c1, %c0_10, %c0_11] : memref<9x16x16xbf16, #tpu.memory_space<vmem>>, vector<1x16x16xbf16>
    %12 = vector.shape_cast %11 : vector<1x16x16xbf16> to vector<16x16xbf16>
    %cst_12 = arith.constant dense<0.000000e+00> : vector<16x128xf32>
    %13 = tpu.matmul %12, %1, %cst_12 {dimension_numbers = #tpu.dot_dimension_numbers<[1], [0], [0], [1], [0, 0, 1, 1], [], []>} : vector<16x16xbf16>, vector<16x128xbf16>, vector<16x128xf32> -> vector<16x128xf32>
    %14 = arith.truncf %13 : vector<16x128xf32> to vector<16x128xbf16>
    %c1_13 = arith.constant 1 : index
    %c0_14 = arith.constant 0 : index
    %c0_15 = arith.constant 0 : index
    %15 = vector.load %arg3[%c1_13, %c0_14, %c0_15] : memref<9x128x128xbf16, #tpu.memory_space<vmem>>, vector<1x128x128xbf16>
    %16 = vector.shape_cast %15 : vector<1x128x128xbf16> to vector<128x128xbf16>
    %cst_16 = arith.constant dense<0.000000e+00> : vector<16x128xf32>
    %17 = tpu.matmul %14, %16, %cst_16 {dimension_numbers = #tpu.dot_dimension_numbers<[1], [0], [0], [1], [0, 0, 1, 1], [], []>} : vector<16x128xbf16>, vector<128x128xbf16>, vector<16x128xf32> -> vector<16x128xf32>
    %18 = arith.addf %10, %17 : vector<16x128xf32>
    %c2 = arith.constant 2 : index
    %c0_17 = arith.constant 0 : index
    %c0_18 = arith.constant 0 : index
    %19 = vector.load %arg2[%c2, %c0_17, %c0_18] : memref<9x16x16xbf16, #tpu.memory_space<vmem>>, vector<1x16x16xbf16>
    %20 = vector.shape_cast %19 : vector<1x16x16xbf16> to vector<16x16xbf16>
    %cst_19 = arith.constant dense<0.000000e+00> : vector<16x128xf32>
    %21 = tpu.matmul %20, %1, %cst_19 {dimension_numbers = #tpu.dot_dimension_numbers<[1], [0], [0], [1], [0, 0, 1, 1], [], []>} : vector<16x16xbf16>, vector<16x128xbf16>, vector<16x128xf32> -> vector<16x128xf32>
    %22 = arith.truncf %21 : vector<16x128xf32> to vector<16x128xbf16>
    %c2_20 = arith.constant 2 : index
    %c0_21 = arith.constant 0 : index
    %c0_22 = arith.constant 0 : index
    %23 = vector.load %arg3[%c2_20, %c0_21, %c0_22] : memref<9x128x128xbf16, #tpu.memory_space<vmem>>, vector<1x128x128xbf16>
    %24 = vector.shape_cast %23 : vector<1x128x128xbf16> to vector<128x128xbf16>
    %cst_23 = arith.constant dense<0.000000e+00> : vector<16x128xf32>
    %25 = tpu.matmul %22, %24, %cst_23 {dimension_numbers = #tpu.dot_dimension_numbers<[1], [0], [0], [1], [0, 0, 1, 1], [], []>} : vector<16x128xbf16>, vector<128x128xbf16>, vector<16x128xf32> -> vector<16x128xf32>
    %26 = arith.addf %18, %25 : vector<16x128xf32>
    %c3 = arith.constant 3 : index
    %c0_24 = arith.constant 0 : index
    %c0_25 = arith.constant 0 : index
    %27 = vector.load %arg2[%c3, %c0_24, %c0_25] : memref<9x16x16xbf16, #tpu.memory_space<vmem>>, vector<1x16x16xbf16>
    %28 = vector.shape_cast %27 : vector<1x16x16xbf16> to vector<16x16xbf16>
    %cst_26 = arith.constant dense<0.000000e+00> : vector<16x128xf32>
    %29 = tpu.matmul %28, %1, %cst_26 {dimension_numbers = #tpu.dot_dimension_numbers<[1], [0], [0], [1], [0, 0, 1, 1], [], []>} : vector<16x16xbf16>, vector<16x128xbf16>, vector<16x128xf32> -> vector<16x128xf32>
    %30 = arith.truncf %29 : vector<16x128xf32> to vector<16x128xbf16>
    %c3_27 = arith.constant 3 : index
    %c0_28 = arith.constant 0 : index
    %c0_29 = arith.constant 0 : index
    %31 = vector.load %arg3[%c3_27, %c0_28, %c0_29] : memref<9x128x128xbf16, #tpu.memory_space<vmem>>, vector<1x128x128xbf16>
    %32 = vector.shape_cast %31 : vector<1x128x128xbf16> to vector<128x128xbf16>
    %cst_30 = arith.constant dense<0.000000e+00> : vector<16x128xf32>
    %33 = tpu.matmul %30, %32, %cst_30 {dimension_numbers = #tpu.dot_dimension_numbers<[1], [0], [0], [1], [0, 0, 1, 1], [], []>} : vector<16x128xbf16>, vector<128x128xbf16>, vector<16x128xf32> -> vector<16x128xf32>
    %34 = arith.addf %26, %33 : vector<16x128xf32>
    %c4 = arith.constant 4 : index
    %c0_31 = arith.constant 0 : index
    %c0_32 = arith.constant 0 : index
    %35 = vector.load %arg2[%c4, %c0_31, %c0_32] : memref<9x16x16xbf16, #tpu.memory_space<vmem>>, vector<1x16x16xbf16>
    %36 = vector.shape_cast %35 : vector<1x16x16xbf16> to vector<16x16xbf16>
    %cst_33 = arith.constant dense<0.000000e+00> : vector<16x128xf32>
    %37 = tpu.matmul %36, %1, %cst_33 {dimension_numbers = #tpu.dot_dimension_numbers<[1], [0], [0], [1], [0, 0, 1, 1], [], []>} : vector<16x16xbf16>, vector<16x128xbf16>, vector<16x128xf32> -> vector<16x128xf32>
    %38 = arith.truncf %37 : vector<16x128xf32> to vector<16x128xbf16>
    %c4_34 = arith.constant 4 : index
    %c0_35 = arith.constant 0 : index
    %c0_36 = arith.constant 0 : index
    %39 = vector.load %arg3[%c4_34, %c0_35, %c0_36] : memref<9x128x128xbf16, #tpu.memory_space<vmem>>, vector<1x128x128xbf16>
    %40 = vector.shape_cast %39 : vector<1x128x128xbf16> to vector<128x128xbf16>
    %cst_37 = arith.constant dense<0.000000e+00> : vector<16x128xf32>
    %41 = tpu.matmul %38, %40, %cst_37 {dimension_numbers = #tpu.dot_dimension_numbers<[1], [0], [0], [1], [0, 0, 1, 1], [], []>} : vector<16x128xbf16>, vector<128x128xbf16>, vector<16x128xf32> -> vector<16x128xf32>
    %42 = arith.addf %34, %41 : vector<16x128xf32>
    %c5 = arith.constant 5 : index
    %c0_38 = arith.constant 0 : index
    %c0_39 = arith.constant 0 : index
    %43 = vector.load %arg2[%c5, %c0_38, %c0_39] : memref<9x16x16xbf16, #tpu.memory_space<vmem>>, vector<1x16x16xbf16>
    %44 = vector.shape_cast %43 : vector<1x16x16xbf16> to vector<16x16xbf16>
    %cst_40 = arith.constant dense<0.000000e+00> : vector<16x128xf32>
    %45 = tpu.matmul %44, %1, %cst_40 {dimension_numbers = #tpu.dot_dimension_numbers<[1], [0], [0], [1], [0, 0, 1, 1], [], []>} : vector<16x16xbf16>, vector<16x128xbf16>, vector<16x128xf32> -> vector<16x128xf32>
    %46 = arith.truncf %45 : vector<16x128xf32> to vector<16x128xbf16>
    %c5_41 = arith.constant 5 : index
    %c0_42 = arith.constant 0 : index
    %c0_43 = arith.constant 0 : index
    %47 = vector.load %arg3[%c5_41, %c0_42, %c0_43] : memref<9x128x128xbf16, #tpu.memory_space<vmem>>, vector<1x128x128xbf16>
    %48 = vector.shape_cast %47 : vector<1x128x128xbf16> to vector<128x128xbf16>
    %cst_44 = arith.constant dense<0.000000e+00> : vector<16x128xf32>
    %49 = tpu.matmul %46, %48, %cst_44 {dimension_numbers = #tpu.dot_dimension_numbers<[1], [0], [0], [1], [0, 0, 1, 1], [], []>} : vector<16x128xbf16>, vector<128x128xbf16>, vector<16x128xf32> -> vector<16x128xf32>
    %50 = arith.addf %42, %49 : vector<16x128xf32>
    %c6 = arith.constant 6 : index
    %c0_45 = arith.constant 0 : index
    %c0_46 = arith.constant 0 : index
    %51 = vector.load %arg2[%c6, %c0_45, %c0_46] : memref<9x16x16xbf16, #tpu.memory_space<vmem>>, vector<1x16x16xbf16>
    %52 = vector.shape_cast %51 : vector<1x16x16xbf16> to vector<16x16xbf16>
    %cst_47 = arith.constant dense<0.000000e+00> : vector<16x128xf32>
    %53 = tpu.matmul %52, %1, %cst_47 {dimension_numbers = #tpu.dot_dimension_numbers<[1], [0], [0], [1], [0, 0, 1, 1], [], []>} : vector<16x16xbf16>, vector<16x128xbf16>, vector<16x128xf32> -> vector<16x128xf32>
    %54 = arith.truncf %53 : vector<16x128xf32> to vector<16x128xbf16>
    %c6_48 = arith.constant 6 : index
    %c0_49 = arith.constant 0 : index
    %c0_50 = arith.constant 0 : index
    %55 = vector.load %arg3[%c6_48, %c0_49, %c0_50] : memref<9x128x128xbf16, #tpu.memory_space<vmem>>, vector<1x128x128xbf16>
    %56 = vector.shape_cast %55 : vector<1x128x128xbf16> to vector<128x128xbf16>
    %cst_51 = arith.constant dense<0.000000e+00> : vector<16x128xf32>
    %57 = tpu.matmul %54, %56, %cst_51 {dimension_numbers = #tpu.dot_dimension_numbers<[1], [0], [0], [1], [0, 0, 1, 1], [], []>} : vector<16x128xbf16>, vector<128x128xbf16>, vector<16x128xf32> -> vector<16x128xf32>
    %58 = arith.addf %50, %57 : vector<16x128xf32>
    %c7 = arith.constant 7 : index
    %c0_52 = arith.constant 0 : index
    %c0_53 = arith.constant 0 : index
    %59 = vector.load %arg2[%c7, %c0_52, %c0_53] : memref<9x16x16xbf16, #tpu.memory_space<vmem>>, vector<1x16x16xbf16>
    %60 = vector.shape_cast %59 : vector<1x16x16xbf16> to vector<16x16xbf16>
    %cst_54 = arith.constant dense<0.000000e+00> : vector<16x128xf32>
    %61 = tpu.matmul %60, %1, %cst_54 {dimension_numbers = #tpu.dot_dimension_numbers<[1], [0], [0], [1], [0, 0, 1, 1], [], []>} : vector<16x16xbf16>, vector<16x128xbf16>, vector<16x128xf32> -> vector<16x128xf32>
    %62 = arith.truncf %61 : vector<16x128xf32> to vector<16x128xbf16>
    %c7_55 = arith.constant 7 : index
    %c0_56 = arith.constant 0 : index
    %c0_57 = arith.constant 0 : index
    %63 = vector.load %arg3[%c7_55, %c0_56, %c0_57] : memref<9x128x128xbf16, #tpu.memory_space<vmem>>, vector<1x128x128xbf16>
    %64 = vector.shape_cast %63 : vector<1x128x128xbf16> to vector<128x128xbf16>
    %cst_58 = arith.constant dense<0.000000e+00> : vector<16x128xf32>
    %65 = tpu.matmul %62, %64, %cst_58 {dimension_numbers = #tpu.dot_dimension_numbers<[1], [0], [0], [1], [0, 0, 1, 1], [], []>} : vector<16x128xbf16>, vector<128x128xbf16>, vector<16x128xf32> -> vector<16x128xf32>
    %66 = arith.addf %58, %65 : vector<16x128xf32>
    %c8 = arith.constant 8 : index
    %c0_59 = arith.constant 0 : index
    %c0_60 = arith.constant 0 : index
    %67 = vector.load %arg2[%c8, %c0_59, %c0_60] : memref<9x16x16xbf16, #tpu.memory_space<vmem>>, vector<1x16x16xbf16>
    %68 = vector.shape_cast %67 : vector<1x16x16xbf16> to vector<16x16xbf16>
    %cst_61 = arith.constant dense<0.000000e+00> : vector<16x128xf32>
    %69 = tpu.matmul %68, %1, %cst_61 {dimension_numbers = #tpu.dot_dimension_numbers<[1], [0], [0], [1], [0, 0, 1, 1], [], []>} : vector<16x16xbf16>, vector<16x128xbf16>, vector<16x128xf32> -> vector<16x128xf32>
    %70 = arith.truncf %69 : vector<16x128xf32> to vector<16x128xbf16>
    %c8_62 = arith.constant 8 : index
    %c0_63 = arith.constant 0 : index
    %c0_64 = arith.constant 0 : index
    %71 = vector.load %arg3[%c8_62, %c0_63, %c0_64] : memref<9x128x128xbf16, #tpu.memory_space<vmem>>, vector<1x128x128xbf16>
    %72 = vector.shape_cast %71 : vector<1x128x128xbf16> to vector<128x128xbf16>
    %cst_65 = arith.constant dense<0.000000e+00> : vector<16x128xf32>
    %73 = tpu.matmul %70, %72, %cst_65 {dimension_numbers = #tpu.dot_dimension_numbers<[1], [0], [0], [1], [0, 0, 1, 1], [], []>} : vector<16x128xbf16>, vector<128x128xbf16>, vector<16x128xf32> -> vector<16x128xf32>
    %74 = arith.addf %66, %73 : vector<16x128xf32>
    %c0_66 = arith.constant 0 : index
    %c0_67 = arith.constant 0 : index
    %75 = vector.load %arg4[%c0_66, %c0_67] : memref<1x128xf32, #tpu.memory_space<vmem>>, vector<1x128xf32>
    %76 = vector.broadcast %75 : vector<1x128xf32> to vector<16x128xf32>
    %77 = arith.addf %74, %76 : vector<16x128xf32>
    %78 = tpu.iota {dimensions = array<i32: 1>} : vector<16x128xi32>
    %79 = arith.negf %77 : vector<16x128xf32>
    %80 = math.exp %79 : vector<16x128xf32>
    %cst_68 = arith.constant 1.000000e+00 : f32
    %81 = vector.broadcast %cst_68 : f32 to vector<16x128xf32>
    %82 = arith.addf %81, %80 : vector<16x128xf32>
    %83 = arith.divf %81, %82 : vector<16x128xf32>
    %c0_69 = arith.constant 0 : index
    %c0_70 = arith.constant 0 : index
    %c0_71 = arith.constant 0 : index
    %84 = vector.load %arg5[%c0_69, %c0_70, %c0_71] : memref<1x16x128xf32, #tpu.memory_space<vmem>>, vector<1x16x128xf32>
    %85 = vector.shape_cast %84 : vector<1x16x128xf32> to vector<16x128xf32>
    %86 = arith.addf %77, %85 : vector<16x128xf32>
    %cst_72 = arith.constant 2.000000e+00 : f32
    %87 = vector.broadcast %cst_72 : f32 to vector<16x128xf32>
    %88 = arith.mulf %86, %87 : vector<16x128xf32>
    %89 = arith.negf %88 : vector<16x128xf32>
    %90 = math.exp %89 : vector<16x128xf32>
    %cst_73 = arith.constant 1.000000e+00 : f32
    %91 = vector.broadcast %cst_73 : f32 to vector<16x128xf32>
    %92 = arith.addf %91, %90 : vector<16x128xf32>
    %93 = arith.divf %91, %92 : vector<16x128xf32>
    %c64_i32 = arith.constant 64 : i32
    %94 = vector.broadcast %c64_i32 : i32 to vector<16x128xi32>
    %95 = arith.cmpi sge, %78, %94 : vector<16x128xi32>
    %c68_i32 = arith.constant 68 : i32
    %96 = vector.broadcast %c68_i32 : i32 to vector<16x128xi32>
    %97 = arith.cmpi slt, %78, %96 : vector<16x128xi32>
    %98 = arith.andi %95, %97 : vector<16x128xi1>
    %c68_i32_74 = arith.constant 68 : i32
    %99 = vector.broadcast %c68_i32_74 : i32 to vector<16x128xi32>
    %100 = arith.cmpi sge, %78, %99 : vector<16x128xi32>
    %c72_i32 = arith.constant 72 : i32
    %101 = vector.broadcast %c72_i32 : i32 to vector<16x128xi32>
    %102 = arith.cmpi slt, %78, %101 : vector<16x128xi32>
    %103 = arith.andi %100, %102 : vector<16x128xi1>
    %104 = arith.select %103, %93, %77 : vector<16x128xi1>, vector<16x128xf32>
    %105 = arith.select %98, %83, %104 : vector<16x128xi1>, vector<16x128xf32>
    %c0_75 = arith.constant 0 : index
    %c0_76 = arith.constant 0 : index
    %c0_77 = arith.constant 0 : index
    %106 = vector.load %arg6[%c0_75, %c0_76, %c0_77] : memref<1x16x128xf32, #tpu.memory_space<vmem>>, vector<1x16x128xf32>
    %107 = vector.shape_cast %106 : vector<1x16x128xf32> to vector<16x128xf32>
    %108 = vector.shape_cast %105 : vector<16x128xf32> to vector<1x16x128xf32>
    tpu.vector_store %arg6[%c0_75, %c0_76, %c0_77], %108 {strides = array<i32>} : memref<1x16x128xf32, #tpu.memory_space<vmem>>, vector<1x16x128xf32>,
    return
  }
  func.func @transform_0(%arg0: i32) -> (i32, i32, i32) {
    %c0_i32 = arith.constant 0 : i32
    %c0_i32_0 = arith.constant 0 : i32
    %c0_i32_1 = arith.constant 0 : i32
    return %arg0, %c0_i32, %c0_i32_0 : i32, i32, i32
  }
  func.func @transform_1(%arg0: i32) -> (i32, i32, i32) {
    %c0_i32 = arith.constant 0 : i32
    %c0_i32_0 = arith.constant 0 : i32
    %c0_i32_1 = arith.constant 0 : i32
    %c0_i32_2 = arith.constant 0 : i32
    return %c0_i32, %c0_i32_0, %c0_i32_1 : i32, i32, i32
  }
  func.func @transform_2(%arg0: i32) -> (i32, i32, i32) {
    %c0_i32 = arith.constant 0 : i32
    %c0_i32_0 = arith.constant 0 : i32
    %c0_i32_1 = arith.constant 0 : i32
    %c0_i32_2 = arith.constant 0 : i32
    return %c0_i32, %c0_i32_0, %c0_i32_1 : i32, i32, i32
  }
  func.func @transform_3(%arg0: i32) -> (i32, i32) {
    %c0_i32 = arith.constant 0 : i32
    %c0_i32_0 = arith.constant 0 : i32
    %c0_i32_1 = arith.constant 0 : i32
    return %c0_i32, %c0_i32_0 : i32, i32
  }
  func.func @transform_4(%arg0: i32) -> (i32, i32, i32) {
    %c0_i32 = arith.constant 0 : i32
    %c0_i32_0 = arith.constant 0 : i32
    %c0_i32_1 = arith.constant 0 : i32
    return %arg0, %c0_i32, %c0_i32_0 : i32, i32, i32
  }
  func.func @transform_5(%arg0: i32) -> (i32, i32, i32) {
    %c0_i32 = arith.constant 0 : i32
    %c0_i32_0 = arith.constant 0 : i32
    %c0_i32_1 = arith.constant 0 : i32
    return %arg0, %c0_i32, %c0_i32_0 : i32, i32, i32
  }
}

module attributes {stable_mosaic.version = 11 : i64} {
  func.func @_pool_kernel(%arg0: i32, %arg1: memref<1x16x32xf32, #tpu.memory_space<vmem>>, %arg2: memref<1x16x32xf32, #tpu.memory_space<vmem>>, %arg3: memref<1x16x4xf32, #tpu.memory_space<vmem>>, %arg4: memref<1x1x32xf32, #tpu.memory_space<vmem>>, %arg5: memref<4x32xf32, #tpu.memory_space<vmem>>, %arg6: memref<1x1x32xf32, #tpu.memory_space<vmem>>, %arg7: memref<1x1x32xf32, #tpu.memory_space<vmem>>, %arg8: memref<1x1x32xf32, #tpu.memory_space<vmem>>) attributes {dimension_semantics = [#tpu.dimension_semantics<parallel>], iteration_bounds = array<i64: 2>, scalar_prefetch = 0 : i64, scratch_operands = 0 : i64, tpu.core_type = #tpu.core_type<tc>, window_params = [{transform_indices = @transform_0, window_bounds = array<i64: 1, 16, 32>}, {transform_indices = @transform_1, window_bounds = array<i64: 1, 16, 32>}, {transform_indices = @transform_2, window_bounds = array<i64: 1, 16, 4>}, {transform_indices = @transform_3, window_bounds = array<i64: 1, 1, 32>}, {pipeline_mode = #tpu.pipeline_mode<synchronous>, transform_indices = @transform_4, window_bounds = array<i64: 4, 32>}, {transform_indices = @transform_5, window_bounds = array<i64: 1, 1, 32>}, {transform_indices = @transform_6, window_bounds = array<i64: 1, 1, 32>}, {transform_indices = @transform_7, window_bounds = array<i64: 1, 1, 32>}]} {
    %c0 = arith.constant 0 : index
    %c0_0 = arith.constant 0 : index
    %c0_1 = arith.constant 0 : index
    %0 = vector.load %arg1[%c0, %c0_0, %c0_1] : memref<1x16x32xf32, #tpu.memory_space<vmem>>, vector<1x16x32xf32>
    %1 = vector.shape_cast %0 : vector<1x16x32xf32> to vector<16x32xf32>
    %c0_2 = arith.constant 0 : index
    %c0_3 = arith.constant 0 : index
    %c0_4 = arith.constant 0 : index
    %2 = vector.load %arg2[%c0_2, %c0_3, %c0_4] : memref<1x16x32xf32, #tpu.memory_space<vmem>>, vector<1x16x32xf32>
    %3 = vector.shape_cast %2 : vector<1x16x32xf32> to vector<16x32xf32>
    %4 = math.exp %3 : vector<16x32xf32>
    %cst = arith.constant 1.000000e-07 : f32
    %cst_5 = arith.constant 1.000000e+07 : f32
    %5 = vector.broadcast %cst : f32 to vector<16x32xf32>
    %6 = arith.maximumf %5, %4 : vector<16x32xf32>
    %7 = vector.broadcast %cst_5 : f32 to vector<16x32xf32>
    %8 = arith.minimumf %7, %6 : vector<16x32xf32>
    %c0_6 = arith.constant 0 : index
    %c0_7 = arith.constant 0 : index
    %c0_8 = arith.constant 0 : index
    %9 = vector.load %arg3[%c0_6, %c0_7, %c0_8] : memref<1x16x4xf32, #tpu.memory_space<vmem>>, vector<1x16x4xf32>
    %10 = vector.shape_cast %9 : vector<1x16x4xf32> to vector<16x4xf32>
    %c0_9 = arith.constant 0 : index
    %c0_10 = arith.constant 0 : index
    %11 = vector.load %arg5[%c0_9, %c0_10] : memref<4x32xf32, #tpu.memory_space<vmem>>, vector<4x32xf32>
    %cst_11 = arith.constant dense<0.000000e+00> : vector<16x32xf32>
    %12 = tpu.matmul %10, %11, %cst_11 {dimension_numbers = #tpu.dot_dimension_numbers<[1], [0], [0], [1], [0, 0, 1, 1], [], []>} : vector<16x4xf32>, vector<4x32xf32>, vector<16x32xf32> -> vector<16x32xf32>
    %cst_12 = arith.constant 1.000000e+00 : f32
    %13 = vector.broadcast %cst_12 : f32 to vector<1x16xf32>
    %cst_13 = arith.constant dense<0.000000e+00> : vector<1x32xf32>
    %14 = tpu.matmul %13, %12, %cst_13 {dimension_numbers = #tpu.dot_dimension_numbers<[1], [0], [0], [1], [0, 0, 1, 1], [], []>} : vector<1x16xf32>, vector<16x32xf32>, vector<1x32xf32> -> vector<1x32xf32>
    %cst_14 = arith.constant 1.000000e-07 : f32
    %15 = vector.broadcast %cst_14 : f32 to vector<1x32xf32>
    %16 = arith.addf %14, %15 : vector<1x32xf32>
    %17 = arith.mulf %1, %12 : vector<16x32xf32>
    %cst_15 = arith.constant dense<0.000000e+00> : vector<1x32xf32>
    %18 = tpu.matmul %13, %17, %cst_15 {dimension_numbers = #tpu.dot_dimension_numbers<[1], [0], [0], [1], [0, 0, 1, 1], [], []>} : vector<1x16xf32>, vector<16x32xf32>, vector<1x32xf32> -> vector<1x32xf32>
    %19 = arith.divf %18, %16 : vector<1x32xf32>
    %20 = arith.mulf %8, %12 : vector<16x32xf32>
    %cst_16 = arith.constant dense<0.000000e+00> : vector<1x32xf32>
    %21 = tpu.matmul %13, %20, %cst_16 {dimension_numbers = #tpu.dot_dimension_numbers<[1], [0], [0], [1], [0, 0, 1, 1], [], []>} : vector<1x16xf32>, vector<16x32xf32>, vector<1x32xf32> -> vector<1x32xf32>
    %cst_17 = arith.constant 1.000000e-07 : f32
    %22 = vector.broadcast %cst_17 : f32 to vector<1x32xf32>
    %23 = arith.addf %21, %22 : vector<1x32xf32>
    %24 = arith.divf %23, %16 : vector<1x32xf32>
    %c0_18 = arith.constant 0 : index
    %c0_19 = arith.constant 0 : index
    %c0_20 = arith.constant 0 : index
    %25 = vector.load %arg6[%c0_18, %c0_19, %c0_20] : memref<1x1x32xf32, #tpu.memory_space<vmem>>, vector<1x1x32xf32>
    %26 = vector.shape_cast %25 : vector<1x1x32xf32> to vector<1x32xf32>
    %27 = vector.shape_cast %19 : vector<1x32xf32> to vector<1x1x32xf32>
    tpu.vector_store %arg6[%c0_18, %c0_19, %c0_20], %27 {strides = array<i32>} : memref<1x1x32xf32, #tpu.memory_space<vmem>>, vector<1x1x32xf32>,
    %c0_21 = arith.constant 0 : index
    %c0_22 = arith.constant 0 : index
    %c0_23 = arith.constant 0 : index
    %28 = vector.load %arg7[%c0_21, %c0_22, %c0_23] : memref<1x1x32xf32, #tpu.memory_space<vmem>>, vector<1x1x32xf32>
    %29 = vector.shape_cast %28 : vector<1x1x32xf32> to vector<1x32xf32>
    %30 = vector.shape_cast %24 : vector<1x32xf32> to vector<1x1x32xf32>
    tpu.vector_store %arg7[%c0_21, %c0_22, %c0_23], %30 {strides = array<i32>} : memref<1x1x32xf32, #tpu.memory_space<vmem>>, vector<1x1x32xf32>,
    %c0_24 = arith.constant 0 : index
    %c0_25 = arith.constant 0 : index
    %c0_26 = arith.constant 0 : index
    %31 = vector.load %arg4[%c0_24, %c0_25, %c0_26] : memref<1x1x32xf32, #tpu.memory_space<vmem>>, vector<1x1x32xf32>
    %32 = vector.shape_cast %31 : vector<1x1x32xf32> to vector<1x32xf32>
    %33 = math.sqrt %24 : vector<1x32xf32>
    %34 = arith.mulf %32, %33 : vector<1x32xf32>
    %35 = arith.addf %19, %34 : vector<1x32xf32>
    %c0_27 = arith.constant 0 : index
    %c0_28 = arith.constant 0 : index
    %c0_29 = arith.constant 0 : index
    %36 = vector.load %arg8[%c0_27, %c0_28, %c0_29] : memref<1x1x32xf32, #tpu.memory_space<vmem>>, vector<1x1x32xf32>
    %37 = vector.shape_cast %36 : vector<1x1x32xf32> to vector<1x32xf32>
    %38 = vector.shape_cast %35 : vector<1x32xf32> to vector<1x1x32xf32>
    tpu.vector_store %arg8[%c0_27, %c0_28, %c0_29], %38 {strides = array<i32>} : memref<1x1x32xf32, #tpu.memory_space<vmem>>, vector<1x1x32xf32>,
    return
  }
  func.func @transform_0(%arg0: i32) -> (i32, i32, i32) {
    %c0_i32 = arith.constant 0 : i32
    %c0_i32_0 = arith.constant 0 : i32
    %c0_i32_1 = arith.constant 0 : i32
    return %arg0, %c0_i32, %c0_i32_0 : i32, i32, i32
  }
  func.func @transform_1(%arg0: i32) -> (i32, i32, i32) {
    %c0_i32 = arith.constant 0 : i32
    %c0_i32_0 = arith.constant 0 : i32
    %c0_i32_1 = arith.constant 0 : i32
    return %arg0, %c0_i32, %c0_i32_0 : i32, i32, i32
  }
  func.func @transform_2(%arg0: i32) -> (i32, i32, i32) {
    %c0_i32 = arith.constant 0 : i32
    %c0_i32_0 = arith.constant 0 : i32
    %c0_i32_1 = arith.constant 0 : i32
    return %arg0, %c0_i32, %c0_i32_0 : i32, i32, i32
  }
  func.func @transform_3(%arg0: i32) -> (i32, i32, i32) {
    %c0_i32 = arith.constant 0 : i32
    %c0_i32_0 = arith.constant 0 : i32
    %c0_i32_1 = arith.constant 0 : i32
    return %arg0, %c0_i32, %c0_i32_0 : i32, i32, i32
  }
  func.func @transform_4(%arg0: i32) -> (i32, i32) {
    %c0_i32 = arith.constant 0 : i32
    %c0_i32_0 = arith.constant 0 : i32
    %c0_i32_1 = arith.constant 0 : i32
    return %c0_i32, %c0_i32_0 : i32, i32
  }
  func.func @transform_5(%arg0: i32) -> (i32, i32, i32) {
    %c0_i32 = arith.constant 0 : i32
    %c0_i32_0 = arith.constant 0 : i32
    %c0_i32_1 = arith.constant 0 : i32
    return %arg0, %c0_i32, %c0_i32_0 : i32, i32, i32
  }
  func.func @transform_6(%arg0: i32) -> (i32, i32, i32) {
    %c0_i32 = arith.constant 0 : i32
    %c0_i32_0 = arith.constant 0 : i32
    %c0_i32_1 = arith.constant 0 : i32
    return %arg0, %c0_i32, %c0_i32_0 : i32, i32, i32
  }
  func.func @transform_7(%arg0: i32) -> (i32, i32, i32) {
    %c0_i32 = arith.constant 0 : i32
    %c0_i32_0 = arith.constant 0 : i32
    %c0_i32_1 = arith.constant 0 : i32
    return %arg0, %c0_i32, %c0_i32_0 : i32, i32, i32
  }
}

module attributes {stable_mosaic.version = 11 : i64} {
  func.func @_enc_kernel(%arg0: i32, %arg1: memref<32x64xbf16, #tpu.memory_space<vmem>>, %arg2: memref<64x128xbf16, #tpu.memory_space<vmem>>, %arg3: memref<1x128xf32, #tpu.memory_space<vmem>>, %arg4: memref<32x128xbf16, #tpu.memory_space<vmem>>) attributes {dimension_semantics = [#tpu.dimension_semantics<parallel>], iteration_bounds = array<i64: 1>, scalar_prefetch = 0 : i64, scratch_operands = 0 : i64, tpu.core_type = #tpu.core_type<tc>, window_params = [{transform_indices = @transform_0, window_bounds = array<i64: 32, 64>}, {pipeline_mode = #tpu.pipeline_mode<synchronous>, transform_indices = @transform_1, window_bounds = array<i64: 64, 128>}, {pipeline_mode = #tpu.pipeline_mode<synchronous>, transform_indices = @transform_2, window_bounds = array<i64: 1, 128>}, {transform_indices = @transform_3, window_bounds = array<i64: 32, 128>}]} {
    %c0 = arith.constant 0 : index
    %c0_0 = arith.constant 0 : index
    %0 = vector.load %arg1[%c0, %c0_0] : memref<32x64xbf16, #tpu.memory_space<vmem>>, vector<32x64xbf16>
    %c0_1 = arith.constant 0 : index
    %c0_2 = arith.constant 0 : index
    %1 = vector.load %arg2[%c0_1, %c0_2] : memref<64x128xbf16, #tpu.memory_space<vmem>>, vector<64x128xbf16>
    %cst = arith.constant dense<0.000000e+00> : vector<32x128xf32>
    %2 = tpu.matmul %0, %1, %cst {dimension_numbers = #tpu.dot_dimension_numbers<[1], [0], [0], [1], [0, 0, 1, 1], [], []>} : vector<32x64xbf16>, vector<64x128xbf16>, vector<32x128xf32> -> vector<32x128xf32>
    %c0_3 = arith.constant 0 : index
    %c0_4 = arith.constant 0 : index
    %3 = vector.load %arg3[%c0_3, %c0_4] : memref<1x128xf32, #tpu.memory_space<vmem>>, vector<1x128xf32>
    %4 = vector.broadcast %3 : vector<1x128xf32> to vector<32x128xf32>
    %5 = arith.addf %2, %4 : vector<32x128xf32>
    %cst_5 = arith.constant 0.000000e+00 : f32
    %6 = vector.broadcast %cst_5 : f32 to vector<32x128xf32>
    %7 = arith.maximumf %5, %6 : vector<32x128xf32>
    %8 = arith.truncf %7 : vector<32x128xf32> to vector<32x128xbf16>
    %c0_6 = arith.constant 0 : index
    %c0_7 = arith.constant 0 : index
    %9 = vector.load %arg4[%c0_6, %c0_7] : memref<32x128xbf16, #tpu.memory_space<vmem>>, vector<32x128xbf16>
    tpu.vector_store %arg4[%c0_6, %c0_7], %8 {strides = array<i32>} : memref<32x128xbf16, #tpu.memory_space<vmem>>, vector<32x128xbf16>,
    return
  }
  func.func @transform_0(%arg0: i32) -> (i32, i32) {
    %c0_i32 = arith.constant 0 : i32
    %c0_i32_0 = arith.constant 0 : i32
    return %arg0, %c0_i32 : i32, i32
  }
  func.func @transform_1(%arg0: i32) -> (i32, i32) {
    %c0_i32 = arith.constant 0 : i32
    %c0_i32_0 = arith.constant 0 : i32
    %c0_i32_1 = arith.constant 0 : i32
    return %c0_i32, %c0_i32_0 : i32, i32
  }
  func.func @transform_2(%arg0: i32) -> (i32, i32) {
    %c0_i32 = arith.constant 0 : i32
    %c0_i32_0 = arith.constant 0 : i32
    %c0_i32_1 = arith.constant 0 : i32
    return %c0_i32, %c0_i32_0 : i32, i32
  }
  func.func @transform_3(%arg0: i32) -> (i32, i32) {
    %c0_i32 = arith.constant 0 : i32
    %c0_i32_0 = arith.constant 0 : i32
    return %arg0, %c0_i32 : i32, i32
  }
}

module attributes {stable_mosaic.version = 11 : i64} {
  func.func @_dec_kernel(%arg0: i32, %arg1: memref<1x1x32xf32, #tpu.memory_space<vmem>>, %arg2: memref<1x16x4xf32, #tpu.memory_space<vmem>>, %arg3: memref<4x32xf32, #tpu.memory_space<vmem>>, %arg4: memref<32x128xbf16, #tpu.memory_space<vmem>>, %arg5: memref<1x128xf32, #tpu.memory_space<vmem>>, %arg6: memref<1x16x128xf32, #tpu.memory_space<vmem>>) attributes {dimension_semantics = [#tpu.dimension_semantics<parallel>], iteration_bounds = array<i64: 2>, scalar_prefetch = 0 : i64, scratch_operands = 0 : i64, tpu.core_type = #tpu.core_type<tc>, window_params = [{transform_indices = @transform_0, window_bounds = array<i64: 1, 1, 32>}, {transform_indices = @transform_1, window_bounds = array<i64: 1, 16, 4>}, {pipeline_mode = #tpu.pipeline_mode<synchronous>, transform_indices = @transform_2, window_bounds = array<i64: 4, 32>}, {pipeline_mode = #tpu.pipeline_mode<synchronous>, transform_indices = @transform_3, window_bounds = array<i64: 32, 128>}, {pipeline_mode = #tpu.pipeline_mode<synchronous>, transform_indices = @transform_4, window_bounds = array<i64: 1, 128>}, {transform_indices = @transform_5, window_bounds = array<i64: 1, 16, 128>}]} {
    %c0 = arith.constant 0 : index
    %c0_0 = arith.constant 0 : index
    %c0_1 = arith.constant 0 : index
    %0 = vector.load %arg2[%c0, %c0_0, %c0_1] : memref<1x16x4xf32, #tpu.memory_space<vmem>>, vector<1x16x4xf32>
    %1 = vector.shape_cast %0 : vector<1x16x4xf32> to vector<16x4xf32>
    %c0_2 = arith.constant 0 : index
    %c0_3 = arith.constant 0 : index
    %2 = vector.load %arg3[%c0_2, %c0_3] : memref<4x32xf32, #tpu.memory_space<vmem>>, vector<4x32xf32>
    %cst = arith.constant dense<0.000000e+00> : vector<16x32xf32>
    %3 = tpu.matmul %1, %2, %cst {dimension_numbers = #tpu.dot_dimension_numbers<[1], [0], [0], [1], [0, 0, 1, 1], [], []>} : vector<16x4xf32>, vector<4x32xf32>, vector<16x32xf32> -> vector<16x32xf32>
    %c0_4 = arith.constant 0 : index
    %c0_5 = arith.constant 0 : index
    %c0_6 = arith.constant 0 : index
    %4 = vector.load %arg1[%c0_4, %c0_5, %c0_6] : memref<1x1x32xf32, #tpu.memory_space<vmem>>, vector<1x1x32xf32>
    %5 = vector.shape_cast %4 : vector<1x1x32xf32> to vector<1x32xf32>
    %6 = vector.broadcast %5 : vector<1x32xf32> to vector<16x32xf32>
    %7 = arith.mulf %6, %3 : vector<16x32xf32>
    %8 = arith.truncf %7 : vector<16x32xf32> to vector<16x32xbf16>
    %c0_7 = arith.constant 0 : index
    %c0_8 = arith.constant 0 : index
    %9 = vector.load %arg4[%c0_7, %c0_8] : memref<32x128xbf16, #tpu.memory_space<vmem>>, vector<32x128xbf16>
    %cst_9 = arith.constant dense<0.000000e+00> : vector<16x128xf32>
    %10 = tpu.matmul %8, %9, %cst_9 {dimension_numbers = #tpu.dot_dimension_numbers<[1], [0], [0], [1], [0, 0, 1, 1], [], []>} : vector<16x32xbf16>, vector<32x128xbf16>, vector<16x128xf32> -> vector<16x128xf32>
    %c0_10 = arith.constant 0 : index
    %c0_11 = arith.constant 0 : index
    %11 = vector.load %arg5[%c0_10, %c0_11] : memref<1x128xf32, #tpu.memory_space<vmem>>, vector<1x128xf32>
    %12 = vector.broadcast %11 : vector<1x128xf32> to vector<16x128xf32>
    %13 = arith.addf %10, %12 : vector<16x128xf32>
    %c0_12 = arith.constant 0 : index
    %c0_13 = arith.constant 0 : index
    %c0_14 = arith.constant 0 : index
    %14 = vector.load %arg6[%c0_12, %c0_13, %c0_14] : memref<1x16x128xf32, #tpu.memory_space<vmem>>, vector<1x16x128xf32>
    %15 = vector.shape_cast %14 : vector<1x16x128xf32> to vector<16x128xf32>
    %16 = vector.shape_cast %13 : vector<16x128xf32> to vector<1x16x128xf32>
    tpu.vector_store %arg6[%c0_12, %c0_13, %c0_14], %16 {strides = array<i32>} : memref<1x16x128xf32, #tpu.memory_space<vmem>>, vector<1x16x128xf32>,
    return
  }
  func.func @transform_0(%arg0: i32) -> (i32, i32, i32) {
    %c0_i32 = arith.constant 0 : i32
    %c0_i32_0 = arith.constant 0 : i32
    %c0_i32_1 = arith.constant 0 : i32
    return %arg0, %c0_i32, %c0_i32_0 : i32, i32, i32
  }
  func.func @transform_1(%arg0: i32) -> (i32, i32, i32) {
    %c0_i32 = arith.constant 0 : i32
    %c0_i32_0 = arith.constant 0 : i32
    %c0_i32_1 = arith.constant 0 : i32
    return %arg0, %c0_i32, %c0_i32_0 : i32, i32, i32
  }
  func.func @transform_2(%arg0: i32) -> (i32, i32) {
    %c0_i32 = arith.constant 0 : i32
    %c0_i32_0 = arith.constant 0 : i32
    %c0_i32_1 = arith.constant 0 : i32
    return %c0_i32, %c0_i32_0 : i32, i32
  }
  func.func @transform_3(%arg0: i32) -> (i32, i32) {
    %c0_i32 = arith.constant 0 : i32
    %c0_i32_0 = arith.constant 0 : i32
    %c0_i32_1 = arith.constant 0 : i32
    return %c0_i32, %c0_i32_0 : i32, i32
  }
  func.func @transform_4(%arg0: i32) -> (i32, i32) {
    %c0_i32 = arith.constant 0 : i32
    %c0_i32_0 = arith.constant 0 : i32
    %c0_i32_1 = arith.constant 0 : i32
    return %c0_i32, %c0_i32_0 : i32, i32
  }
  func.func @transform_5(%arg0: i32) -> (i32, i32, i32) {
    %c0_i32 = arith.constant 0 : i32
    %c0_i32_0 = arith.constant 0 : i32
    %c0_i32_1 = arith.constant 0 : i32
    return %arg0, %c0_i32, %c0_i32_0 : i32, i32, i32
  }
}

</mosaic_0001>

<llo_original>
// kernel: patchy_vae_forward.9
$region0: #{patchy_vae_forward.9}
  #allocation0 [shape = 'u32[]', space=smem, size = 0x4, offset = 0x4, fixed_abs, tag = 'smem constant byte address 0x4 - core index']
  #allocation1 [shape = 'u32[144,128]{1,0:T(1,128)}', space=vmem, size = 0x12000, scoped, tag = 'internal scratch']
  %s0 = inlined_call_operand.vmem [shape: f32[2,1,32], index: 0, kind: input, shape index: {}]
  %s1 = inlined_call_operand.vmem [shape: f32[2,16,4], index: 1, kind: input, shape index: {}]
  %s2 = inlined_call_operand.vmem [shape: f32[4,32], index: 2, kind: input, shape index: {}]
  %s3 = inlined_call_operand.vmem [shape: bf16[32,128], index: 3, kind: input, shape index: {}]
  %s4 = inlined_call_operand.vmem [shape: f32[1,128], index: 4, kind: input, shape index: {}]
  %s5 = inlined_call_operand.vmem [shape: f32[2,16,128], index: 5, kind: output, shape index: {}]
  %s6 = sld [smem:[#allocation0]]
  $region53: #{patchy_vae_forward.9} parent=0
    _
  %s8 = ssub.s32 1, %s6
  %s9 = scalar_select 0, %s8, %s6
  loop: start=0, step=1, limit=4
  $region2: #{patchy_vae_forward.9} parent=0 // loop_pre_header
    _
  $region3: #{patchy_vae_forward.9} parent=0 // loop_header
    %s11 = sphi 0, %s15
    %p12 = scmp.ge.s32.totalorder %s11, 4
    %s21 = sphi 0, %s23
    %s24 = sphi 0, %s21
    %s25 = sphi 0, %s24
    %s41 = sphi 0, %s25
    %s47 = sphi 0, %s49
    %s50 = sphi 0, %s47
    %s51 = sphi 0, %s50
    %s67 = sphi 0, %s51
    %s71 = sphi 0, %s71
    %s73 = sphi 0, %s71
    %s74 = sphi 0, %s73
    %s88 = sphi 0, %s74
    %s92 = sphi 0, %s92
    %s94 = sphi 0, %s92
    %s95 = sphi 0, %s94
    %s109 = sphi 0, %s95
    %s113 = sphi 0, %s113
    %s115 = sphi 0, %s113
    %s116 = sphi 0, %s115
    %s130 = sphi 0, %s116
    %s136 = sphi 0, %s138
    %s139 = sphi 0, %s136
    %s140 = sphi 0, %s139
    %s156 = sphi 0, %s140
  $region4: #{patchy_vae_forward.9} parent=0 // loop_header_branch
    %14 = sbr.rel (%p12) target = $region8
  $region5: #{patchy_vae_forward.9} parent=0 // loop_body
    %s16 = ssub.s32 %s11, 1
    %s17 = ssub.s32 %s11, 2
    %s18 = sadd.s32 %s11, 1
    %s19 = ssub.s32 %s11, %s18
    %p20 = scmp.eq.s32.totalorder %s19, 0
    %s22 = sadd.s32 %s21, 1
    %s23 = scalar_select %p20, %s21, %s22
    %p26 = pneg %p20
    %p27 = scmp.eq.s32.totalorder %s11, 1
    %p28 = por %p26, %p27
    %p29 = scmp.ne.s32.totalorder %s21, %s24
    %p30 = scmp.eq.s32.totalorder %s11, 0
    %p31 = por %p29, %p30
    %p32 = scmp.ne.s32.totalorder %s21, %s24
    %p33 = scmp.eq.s32.totalorder %s16, 1
    %p34 = por %p32, %p33
    %p35 = scmp.ne.s32.totalorder %s24, %s25
    %p36 = scmp.eq.s32.totalorder %s16, 0
    %p37 = por %p35, %p36
    %p38 = scmp.ne.s32.totalorder %s24, %s25
    %p39 = scmp.eq.s32.totalorder %s17, 1
    %p40 = por %p38, %p39
    %p42 = scmp.ne.s32.totalorder %s25, %s41
    %p43 = scmp.eq.s32.totalorder %s17, 0
    %p44 = por %p42, %p43
    %s45 = ssub.s32 %s11, %s18
    %p46 = scmp.eq.s32.totalorder %s45, 0
    %s48 = sadd.s32 %s47, 1
    %s49 = scalar_select %p46, %s47, %s48
    %p52 = pneg %p46
    %p53 = scmp.eq.s32.totalorder %s11, 1
    %p54 = por %p52, %p53
    %p55 = scmp.ne.s32.totalorder %s47, %s50
    %p56 = scmp.eq.s32.totalorder %s11, 0
    %p57 = por %p55, %p56
    %p58 = scmp.ne.s32.totalorder %s47, %s50
    %p59 = scmp.eq.s32.totalorder %s16, 1
    %p60 = por %p58, %p59
    %p61 = scmp.ne.s32.totalorder %s50, %s51
    %p62 = scmp.eq.s32.totalorder %s16, 0
    %p63 = por %p61, %p62
    %p64 = scmp.ne.s32.totalorder %s50, %s51
    %p65 = scmp.eq.s32.totalorder %s17, 1
    %p66 = por %p64, %p65
    %p68 = scmp.ne.s32.totalorder %s51, %s67
    %p69 = scmp.eq.s32.totalorder %s17, 0
    %p70 = por %p68, %p69
    %s72 = sadd.s32 %s71, 1
    %p75 = scmp.eq.s32.totalorder %s11, 1
    %p76 = scmp.ne.s32.totalorder %s71, %s73
    %p77 = scmp.eq.s32.totalorder %s11, 0
    %p78 = por %p76, %p77
    %p79 = scmp.ne.s32.totalorder %s71, %s73
    %p80 = scmp.eq.s32.totalorder %s16, 1
    %p81 = por %p79, %p80
    %p82 = scmp.ne.s32.totalorder %s73, %s74
    %p83 = scmp.eq.s32.totalorder %s16, 0
    %p84 = por %p82, %p83
    %p85 = scmp.ne.s32.totalorder %s73, %s74
    %p86 = scmp.eq.s32.totalorder %s17, 1
    %p87 = por %p85, %p86
    %p89 = scmp.ne.s32.totalorder %s74, %s88
    %p90 = scmp.eq.s32.totalorder %s17, 0
    %p91 = por %p89, %p90
    %s93 = sadd.s32 %s92, 1
    %p96 = scmp.eq.s32.totalorder %s11, 1
    %p97 = scmp.ne.s32.totalorder %s92, %s94
    %p98 = scmp.eq.s32.totalorder %s11, 0
    %p99 = por %p97, %p98
    %p100 = scmp.ne.s32.totalorder %s92, %s94
    %p101 = scmp.eq.s32.totalorder %s16, 1
    %p102 = por %p100, %p101
    %p103 = scmp.ne.s32.totalorder %s94, %s95
    %p104 = scmp.eq.s32.totalorder %s16, 0
    %p105 = por %p103, %p104
    %p106 = scmp.ne.s32.totalorder %s94, %s95
    %p107 = scmp.eq.s32.totalorder %s17, 1
    %p108 = por %p106, %p107
    %p110 = scmp.ne.s32.totalorder %s95, %s109
    %p111 = scmp.eq.s32.totalorder %s17, 0
    %p112 = por %p110, %p111
    %s114 = sadd.s32 %s113, 1
    %p117 = scmp.eq.s32.totalorder %s11, 1
    %p118 = scmp.ne.s32.totalorder %s113, %s115
    %p119 = scmp.eq.s32.totalorder %s11, 0
    %p120 = por %p118, %p119
    %p121 = scmp.ne.s32.totalorder %s113, %s115
    %p122 = scmp.eq.s32.totalorder %s16, 1
    %p123 = por %p121, %p122
    %p124 = scmp.ne.s32.totalorder %s115, %s116
    %p125 = scmp.eq.s32.totalorder %s16, 0
    %p126 = por %p124, %p125
    %p127 = scmp.ne.s32.totalorder %s115, %s116
    %p128 = scmp.eq.s32.totalorder %s17, 1
    %p129 = por %p127, %p128
    %p131 = scmp.ne.s32.totalorder %s116, %s130
    %p132 = scmp.eq.s32.totalorder %s17, 0
    %p133 = por %p131, %p132
    %s134 = ssub.s32 %s11, %s18
    %p135 = scmp.eq.s32.totalorder %s134, 0
    %s137 = sadd.s32 %s136, 1
    %s138 = scalar_select %p135, %s136, %s137
    %p141 = pneg %p135
    %p142 = scmp.eq.s32.totalorder %s11, 1
    %p143 = por %p141, %p142
    %p144 = scmp.ne.s32.totalorder %s136, %s139
    %p145 = scmp.eq.s32.totalorder %s11, 0
    %p146 = por %p144, %p145
    %p147 = scmp.ne.s32.totalorder %s136, %s139
    %p148 = scmp.eq.s32.totalorder %s16, 1
    %p149 = por %p147, %p148
    %p150 = scmp.ne.s32.totalorder %s139, %s140
    %p151 = scmp.eq.s32.totalorder %s16, 0
    %p152 = por %p150, %p151
    %p153 = scmp.ne.s32.totalorder %s139, %s140
    %p154 = scmp.eq.s32.totalorder %s17, 1
    %p155 = por %p153, %p154
    %p157 = scmp.ne.s32.totalorder %s140, %s156
    %p158 = scmp.eq.s32.totalorder %s17, 0
    %p159 = por %p157, %p158
    %p160 = scmp.le.s32.totalorder 1, %s11
    %p161 = scmp.lt.s32.totalorder %s11, 3
    %p162 = pnand %p160, %p161
    %p163 = pneg %p162
    // Predicated region
    $region9: #{patchy_vae_forward.9} parent=5 // pred_check
      _
    $region10: #{patchy_vae_forward.9} parent=5 // pred_check_branch
      %165 = sbr.rel (%p162) target = $region12
    $region11: #{patchy_vae_forward.9} parent=5 // pred_region
      %s166 = ssub.s32 %s11, 1
      // Predicated region
      $region13: #{patchy_vae_forward.9} parent=11 // pred_check
        %p167 = pneg %p84
      $region14: #{patchy_vae_forward.9} parent=11 // pred_check_branch
        %169 = sbr.rel (%p167) target = $region16
      $region15: #{patchy_vae_forward.9} parent=11 // pred_region
        _
      $region16: #{patchy_vae_forward.9} parent=11 // pred_fallthru
        _
      // Predicated region
      $region17: #{patchy_vae_forward.9} parent=11 // pred_check
        %p170 = pneg %p105
      $region18: #{patchy_vae_forward.9} parent=11 // pred_check_branch
        %172 = sbr.rel (%p170) target = $region20
      $region19: #{patchy_vae_forward.9} parent=11 // pred_region
        _
      $region20: #{patchy_vae_forward.9} parent=11 // pred_fallthru
        _
      // Predicated region
      $region21: #{patchy_vae_forward.9} parent=11 // pred_check
        %p173 = pneg %p126
      $region22: #{patchy_vae_forward.9} parent=11 // pred_check_branch
        %175 = sbr.rel (%p173) target = $region24
      $region23: #{patchy_vae_forward.9} parent=11 // pred_region
        _
      $region24: #{patchy_vae_forward.9} parent=11 // pred_fallthru
        _
    $region12: #{patchy_vae_forward.9} parent=5 // pred_fallthru
      _
    %p176 = scmp.lt.s32.totalorder %s11, 2
    // Predicated region
    $region25: #{patchy_vae_forward.9} parent=5 // pred_check
      %p177 = pneg %p176
    $region26: #{patchy_vae_forward.9} parent=5 // pred_check_branch
      %179 = sbr.rel (%p177) target = $region28
    $region27: #{patchy_vae_forward.9} parent=5 // pred_region
      // Predicated region
      $region29: #{patchy_vae_forward.9} parent=27 // pred_check
        %p180 = pneg %p31
      $region30: #{patchy_vae_forward.9} parent=27 // pred_check_branch
        %182 = sbr.rel (%p180) target = $region32
      $region31: #{patchy_vae_forward.9} parent=27 // pred_region
        %p183 = scmp.lt.s32.totalorder %s11, 1
        %s184 = scalar_select %p183, %s11, 1
        %s185 = scalar_lea.vmem %s0, %s184
      $region32: #{patchy_vae_forward.9} parent=27 // pred_fallthru
        _
      // Predicated region
      $region33: #{patchy_vae_forward.9} parent=27 // pred_check
        %p186 = pneg %p57
      $region34: #{patchy_vae_forward.9} parent=27 // pred_check_branch
        %188 = sbr.rel (%p186) target = $region36
      $region35: #{patchy_vae_forward.9} parent=27 // pred_region
        %p189 = scmp.lt.s32.totalorder %s11, 1
        %s190 = scalar_select %p189, %s11, 1
        %s191 = smul.addr %s190, 2
        %s192 = smul.addr %s191, 8
        %s193 = scalar_lea.vmem %s1, %s192
      $region36: #{patchy_vae_forward.9} parent=27 // pred_fallthru
        _
    $region28: #{patchy_vae_forward.9} parent=5 // pred_fallthru
      _
    %p194 = scmp.le.s32.totalorder 1, %s11
    %p195 = scmp.lt.s32.totalorder %s11, 3
    %p196 = pnand %p194, %p195
    %p197 = pneg %p196
    // Predicated region
    $region37: #{patchy_vae_forward.9} parent=5 // pred_check
      _
    $region38: #{patchy_vae_forward.9} parent=5 // pred_check_branch
      %199 = sbr.rel (%p196) target = $region40
    $region39: #{patchy_vae_forward.9} parent=5 // pred_region
      %s200 = ssub.s32 %s11, 1
      %p201 = scmp.lt.s32.totalorder %s16, 1
      %s202 = scalar_select %p201, %s16, 1
      %s203 = scalar_lea.vmem %s0, %s202
      %p204 = pneg %p37
      %p205 = pneg %p34
      %p206 = scmp.lt.s32.totalorder %s16, 1
      %s207 = scalar_select %p206, %s16, 1
      %s208 = smul.addr %s207, 2
      %s209 = smul.addr %s208, 8
      %s210 = scalar_lea.vmem %s1, %s209
      %p211 = pneg %p63
      %p212 = pneg %p60
      %p213 = pneg %p84
      %p214 = pneg %p81
      %p215 = pneg %p105
      %p216 = pneg %p102
      %p217 = pneg %p126
      %p218 = pneg %p123
      %p219 = pneg %p152
      %p220 = pneg %p149
      %p221 = scmp.lt.s32.totalorder %s16, 1
      %s222 = scalar_select %p221, %s16, 1
      %s223 = smul.addr %s222, 2
      %s224 = smul.addr %s223, 8
      %s225 = scalar_lea.vmem %s5, %s224
      %p226 = scmp.lt.s32.totalorder %s16, 1
      %s227 = scalar_select %p226, %s16, 1
      %s228 = scalar_lea.vmem %s0, %s227
      %p229 = scmp.lt.s32.totalorder %s16, 1
      %s230 = scalar_select %p229, %s16, 1
      %s231 = smul.addr %s230, 2
      %s232 = smul.addr %s231, 8
      %s233 = scalar_lea.vmem %s1, %s232
      %p234 = scmp.lt.s32.totalorder %s16, 1
      %s235 = scalar_select %p234, %s16, 1
      %s236 = smul.addr %s235, 2
      %s237 = smul.addr %s236, 8
      %s238 = scalar_lea.vmem %s5, %s237
      %v240 = vld [vmem:[%s233] sm:$0xff]
      %v241 = vld [vmem:[%s233 + $0x8] sm:$0xff]
      %v242 = vld [vmem:[%s2] sm:$0xf]
      %vm243 = vcmask 31744
      %v245 = vsel %vm243, %v240, 0
      %v248 = vsel %vm243, %v241, 0
      %vm250 = vcmask 1043456
      %v252 = vsel %vm250, %v242, 0
      %254 = vmatprep.subr.mxu0 0.0
      %255 = vmatpush1.msra.mxu0 0.0
      %256 = vmatprep.subr.mxu0 0.0
      %257 = vmatpush1.msra.mxu0 0.0
      %258 = vmatprep.subr.mxu0 0.0
      %259 = vmatpush1.msra.mxu0 0.0
      %260 = vmatprep.subr.mxu0 0.0
      %261 = vmatpush1.msra.mxu0 0.0
      %262 = vmatprep.subr.mxu0 0.0
      %263 = vmatpush1.msra.mxu0 0.0
      %264 = vmatprep.subr.mxu0 0.0
      %265 = vmatpush1.msra.mxu0 0.0
      %266 = vmatprep.subr.mxu0 0.0
      %267 = vmatpush1.msra.mxu0 0.0
      %268 = vmatprep.subr.mxu0 0.0
      %269 = vmatpush1.msra.mxu0 0.0
      %270 = vmatprep.subr.mxu0 0.0
      %271 = vmatpush1.msra.mxu0 0.0
      %272 = vmatprep.subr.mxu0 0.0
      %273 = vmatpush1.msra.mxu0 0.0
      %274 = vmatprep.subr.mxu0 0.0
      %275 = vmatpush1.msra.mxu0 0.0
      %276 = vmatprep.subr.mxu0 0.0
      %277 = vmatpush1.msra.mxu0 0.0
      %278 = vmatprep.subr.mxu0 0.0
      %279 = vmatpush1.msra.mxu0 0.0
      %280 = vmatprep.subr.mxu0 0.0
      %281 = vmatpush1.msra.mxu0 0.0
      %282 = vmatprep.subr.mxu0 0.0
      %283 = vmatpush1.msra.mxu0 0.0
      %284 = vmatprep.subr.mxu0 0.0
      %285 = vmatpush1.msra.mxu0 %v252
      %286 = vmatprep.subr.mxu0 0.0
      %287 = vmatpush2.msra.mxu0 0.0
      %288 = vmatprep.subr.mxu0 0.0
      %289 = vmatpush2.msra.mxu0 0.0
      %290 = vmatprep.subr.mxu0 0.0
      %291 = vmatpush2.msra.mxu0 0.0
      %292 = vmatprep.subr.mxu0 0.0
      %293 = vmatpush2.msra.mxu0 0.0
      %294 = vmatprep.subr.mxu0 0.0
      %295 = vmatpush2.msra.mxu0 0.0
      %296 = vmatprep.subr.mxu0 0.0
      %297 = vmatpush2.msra.mxu0 0.0
      %298 = vmatprep.subr.mxu0 0.0
      %299 = vmatpush2.msra.mxu0 0.0
      %300 = vmatprep.subr.mxu0 0.0
      %301 = vmatpush2.msra.mxu0 0.0
      %302 = vmatprep.subr.mxu0 0.0
      %303 = vmatpush2.msra.mxu0 0.0
      %304 = vmatprep.subr.mxu0 0.0
      %305 = vmatpush2.msra.mxu0 0.0
      %306 = vmatprep.subr.mxu0 0.0
      %307 = vmatpush2.msra.mxu0 0.0
      %308 = vmatprep.subr.mxu0 0.0
      %309 = vmatpush2.msra.mxu0 0.0
      %310 = vmatprep.subr.mxu0 0.0
      %311 = vmatpush2.msra.mxu0 0.0
      %312 = vmatprep.subr.mxu0 0.0
      %313 = vmatpush2.msra.mxu0 0.0
      %314 = vmatprep.subr.mxu0 0.0
      %315 = vmatpush2.msra.mxu0 0.0
      %316 = vmatprep.subr.mxu0 0.0
      %317 = vmatpush2.msra.mxu0 0.0
      %318 = vmatprep.mubr.f32.mxu0 0.0
      %319 = vmatmul.mubr.f32.gmra.mxu0 %v245
      %v320 = vpop.f32.mrf.mxu0
      %v321 = vadd.f32 0.0, %v320
      %v322 = vpop.f32.mrf.mxu0
      %323 = vmatprep.mubr.f32.mxu0 0.0
      %324 = vmatmul.mubr.f32.gmra.mxu0 %v248
      %v325 = vpop.f32.mrf.mxu0
      %v326 = vadd.f32 0.0, %v325
      %v327 = vpop.f32.mrf.mxu0
      %328 = vdwg.mxu0
      %v329 = vld [vmem:[%s228] sm:$0x1]
      %v331 = vlaneseq
      %v332 = vshrl.u32 %v331, 7
      %v333 = vsub.s32 0, %v332
      %v334 = vrot.slane %v329, %v333
      %v336 = vmul.f32 %v334, %v321
      %v337 = vmul.f32 %v334, %v326
      %v338 = vpack.c.bf16 %v337, %v336
      %v339 = vld [vmem:[%s3] sm:$0xf]
      %v340 = vld [vmem:[%s3 + $0x4] sm:$0xf]
      %v341 = vld [vmem:[%s3 + $0x8] sm:$0xf]
      %v342 = vld [vmem:[%s3 + $0xc] sm:$0xf]
      %v343 = vld [vmem:[%s4] sm:$0x1]
      %v345 = vlaneseq
      %v346 = vshrl.u32 %v345, 7
      %v347 = vsub.s32 0, %v346
      %v348 = vrot.slane %v343, %v347
      %v354 = vunpack.c.l.b16 %v339
      %v355 = vunpack.c.l.b16 %v340
      %v356 = vunpack.c.l.b16 %v341
      %v357 = vunpack.c.l.b16 %v342
      %v358 = vpack.c.b16 %v355, %v354
      %v359 = vpack.c.b16 %v357, %v356
      %vm362 = vcmask 261120
      %v364 = vsel %vm362, %v338, 0
      %366 = vmatprep.subr.bf16.mxu0 0
      %367 = vmatpush1.bf16.msra.mxu0 0
      %368 = vmatprep.subr.bf16.mxu0 0
      %369 = vmatpush1.bf16.msra.mxu0 0
      %370 = vmatprep.subr.bf16.mxu0 0
      %371 = vmatpush1.bf16.msra.mxu0 0
      %372 = vmatprep.subr.bf16.mxu0 0
      %373 = vmatpush1.bf16.msra.mxu0 0
      %374 = vmatprep.subr.bf16.mxu0 0
      %375 = vmatpush1.bf16.msra.mxu0 0
      %376 = vmatprep.subr.bf16.mxu0 0
      %377 = vmatpush1.bf16.msra.mxu0 0
      %378 = vmatprep.subr.bf16.mxu0 0
      %379 = vmatpush1.bf16.msra.mxu0 %v359
      %380 = vmatprep.subr.bf16.mxu0 0
      %381 = vmatpush1.bf16.msra.mxu0 %v358
      %382 = vmatprep.subr.bf16.mxu0 0
      %383 = vmatpush2.bf16.msra.mxu0 0
      %384 = vmatprep.subr.bf16.mxu0 0
      %385 = vmatpush2.bf16.msra.mxu0 0
      %386 = vmatprep.subr.bf16.mxu0 0
      %387 = vmatpush2.bf16.msra.mxu0 0
      %388 = vmatprep.subr.bf16.mxu0 0
      %389 = vmatpush2.bf16.msra.mxu0 0
      %390 = vmatprep.subr.bf16.mxu0 0
      %391 = vmatpush2.bf16.msra.mxu0 0
      %392 = vmatprep.subr.bf16.mxu0 0
      %393 = vmatpush2.bf16.msra.mxu0 0
      %394 = vmatprep.subr.bf16.mxu0 0
      %395 = vmatpush2.bf16.msra.mxu0 0
      %396 = vmatprep.subr.bf16.mxu0 0
      %397 = vmatpush2.bf16.msra.mxu0 0
      %398 = vmatprep.mubr.bf16.mxu0 0
      %399 = vmatmul.mubr.bf16.gmra.mxu0 %v364
      %v400 = vpop.f32.mrf.mxu0
      %v401 = vadd.f32 %v348, %v400
      %v402 = vpop.f32.mrf.mxu0
      %v403 = vpop.f32.mrf.mxu0
      %v404 = vadd.f32 %v348, %v403
      %v405 = vpop.f32.mrf.mxu0
      %406 = vdwg.mxu0
      %407 = vst [vmem:[%s238] sm:$0xff] %v401
      %408 = vst [vmem:[%s238 + $0x8] sm:$0xff] %v404
      %p409 = scmp.lt.s32.totalorder %s16, 1
      %s410 = scalar_select %p409, %s16, 1
      %s411 = smul.addr %s410, 2
      %s412 = smul.addr %s411, 8
      %s413 = scalar_lea.vmem %s5, %s412
      // Predicated region
      $region41: #{patchy_vae_forward.9} parent=39 // pred_check
        %p414 = pneg %p149
      $region42: #{patchy_vae_forward.9} parent=39 // pred_check_branch
        %416 = sbr.rel (%p414) target = $region44
      $region43: #{patchy_vae_forward.9} parent=39 // pred_region
        _
      $region44: #{patchy_vae_forward.9} parent=39 // pred_fallthru
        _
    $region40: #{patchy_vae_forward.9} parent=5 // pred_fallthru
      _
    %p417 = scmp.le.s32.totalorder 2, %s11
    // Predicated region
    $region45: #{patchy_vae_forward.9} parent=5 // pred_check
      %p418 = pneg %p417
    $region46: #{patchy_vae_forward.9} parent=5 // pred_check_branch
      %420 = sbr.rel (%p418) target = $region48
    $region47: #{patchy_vae_forward.9} parent=5 // pred_region
      %s421 = ssub.s32 %s11, 2
      // Predicated region
      $region49: #{patchy_vae_forward.9} parent=47 // pred_check
        %p422 = pneg %p155
      $region50: #{patchy_vae_forward.9} parent=47 // pred_check_branch
        %424 = sbr.rel (%p422) target = $region52
      $region51: #{patchy_vae_forward.9} parent=47 // pred_region
        %p425 = scmp.lt.s32.totalorder %s17, 1
        %s426 = scalar_select %p425, %s17, 1
        %s427 = smul.addr %s426, 2
        %s428 = smul.addr %s427, 8
        %s429 = scalar_lea.vmem %s5, %s428
      $region52: #{patchy_vae_forward.9} parent=47 // pred_fallthru
        _
    $region48: #{patchy_vae_forward.9} parent=5 // pred_fallthru
      _
  $region6: #{patchy_vae_forward.9} parent=0 // loop_footer
    %s15 = sadd.s32 1, %s11
  $region7: #{patchy_vae_forward.9} parent=0 // loop_footer_branch
    %10 = sbr.rel target = $region3
  $region8: #{patchy_vae_forward.9} parent=0 // loop_exit
    _

// kernel: patchy_vae_forward.8
$region0: #{patchy_vae_forward.8}
  #allocation0 [shape = 'u32[]', space=smem, size = 0x4, offset = 0x4, fixed_abs, tag = 'smem constant byte address 0x4 - core index']
  #allocation1 [shape = 'u32[144,128]{1,0:T(1,128)}', space=vmem, size = 0x12000, scoped, tag = 'internal scratch']
  %s0 = inlined_call_operand.vmem [shape: f32[2,16,32], index: 0, kind: input, shape index: {}]
  %s1 = inlined_call_operand.vmem [shape: f32[2,16,32], index: 1, kind: input, shape index: {}]
  %s2 = inlined_call_operand.vmem [shape: f32[2,16,4], index: 2, kind: input, shape index: {}]
  %s3 = inlined_call_operand.vmem [shape: f32[2,1,32], index: 3, kind: input, shape index: {}]
  %s4 = inlined_call_operand.vmem [shape: f32[4,32], index: 4, kind: input, shape index: {}]
  %s5 = inlined_call_operand.hbm [shape: f32[2,1,32], index: 5, kind: output, shape index: {0}]
  %s6 = inlined_call_operand.hbm [shape: f32[2,1,32], index: 6, kind: output, shape index: {1}]
  %s7 = inlined_call_operand.vmem [shape: f32[2,1,32], index: 7, kind: output, shape index: {2}]
  %8 = xla_tuple %s5, %s6, %s7
  %s9 = sld [smem:[#allocation0]]
  $region69: #{patchy_vae_forward.8} parent=0
    _
  %s11 = ssub.s32 1, %s9
  %s12 = scalar_select 0, %s11, %s9
  $region1: #{patchy_vae_forward.8} parent=0
    #allocation2 [shape = 'u8[1024]{0}', space=vmem, size = 0x400, scoped, tag = 'output window, operand 0']
    #allocation3 [shape = 's32[2]{0}', space=sflag, size = 0x8, scoped, tag = 'scoped memory for patchy_vae_forward.8']
    #allocation4 [shape = 'u8[1024]{0}', space=vmem, size = 0x400, scoped, tag = 'output window, operand 1']
    #allocation5 [shape = 's32[2]{0}', space=sflag, size = 0x8, scoped, tag = 'scoped memory for patchy_vae_forward.8']
    %13 = vsyncpa [#allocation3], 0
    %s14 = scalar_lea.sflag [#allocation3], 1
    %15 = vsyncpa %s14, 0
    %16 = vsyncpa [#allocation5], 0
    %s17 = scalar_lea.sflag [#allocation5], 1
    %18 = vsyncpa %s17, 0
    loop: start=0, step=1, limit=4
    $region2: #{patchy_vae_forward.8} parent=1 // loop_pre_header
      _
    $region3: #{patchy_vae_forward.8} parent=1 // loop_header
      %s20 = sphi 0, %s24
      %p21 = scmp.ge.s32.totalorder %s20, 4
      %s30 = sphi 0, %s32
      %s33 = sphi 0, %s30
      %s34 = sphi 0, %s33
      %s50 = sphi 0, %s34
      %s56 = sphi 0, %s58
      %s59 = sphi 0, %s56
      %s60 = sphi 0, %s59
      %s76 = sphi 0, %s60
      %s82 = sphi 0, %s84
      %s85 = sphi 0, %s82
      %s86 = sphi 0, %s85
      %s102 = sphi 0, %s86
      %s108 = sphi 0, %s110
      %s111 = sphi 0, %s108
      %s112 = sphi 0, %s111
      %s128 = sphi 0, %s112
      %s132 = sphi 0, %s132
      %s134 = sphi 0, %s132
      %s135 = sphi 0, %s134
      %s149 = sphi 0, %s135
      %s155 = sphi 0, %s157
      %s158 = sphi 0, %s155
      %s159 = sphi 0, %s158
      %s175 = sphi 0, %s159
      %s181 = sphi 0, %s183
      %s184 = sphi 0, %s181
      %s185 = sphi 0, %s184
      %s201 = sphi 0, %s185
      %s207 = sphi 0, %s209
      %s210 = sphi 0, %s207
      %s211 = sphi 0, %s210
      %s227 = sphi 0, %s211
    $region4: #{patchy_vae_forward.8} parent=1 // loop_header_branch
      %23 = sbr.rel (%p21) target = $region8
    $region5: #{patchy_vae_forward.8} parent=1 // loop_body
      %s25 = ssub.s32 %s20, 1
      %s26 = ssub.s32 %s20, 2
      %s27 = sadd.s32 %s20, 1
      %s28 = ssub.s32 %s20, %s27
      %p29 = scmp.eq.s32.totalorder %s28, 0
      %s31 = sadd.s32 %s30, 1
      %s32 = scalar_select %p29, %s30, %s31
      %p35 = pneg %p29
      %p36 = scmp.eq.s32.totalorder %s20, 1
      %p37 = por %p35, %p36
      %p38 = scmp.ne.s32.totalorder %s30, %s33
      %p39 = scmp.eq.s32.totalorder %s20, 0
      %p40 = por %p38, %p39
      %p41 = scmp.ne.s32.totalorder %s30, %s33
      %p42 = scmp.eq.s32.totalorder %s25, 1
      %p43 = por %p41, %p42
      %p44 = scmp.ne.s32.totalorder %s33, %s34
      %p45 = scmp.eq.s32.totalorder %s25, 0
      %p46 = por %p44, %p45
      %p47 = scmp.ne.s32.totalorder %s33, %s34
      %p48 = scmp.eq.s32.totalorder %s26, 1
      %p49 = por %p47, %p48
      %p51 = scmp.ne.s32.totalorder %s34, %s50
      %p52 = scmp.eq.s32.totalorder %s26, 0
      %p53 = por %p51, %p52
      %s54 = ssub.s32 %s20, %s27
      %p55 = scmp.eq.s32.totalorder %s54, 0
      %s57 = sadd.s32 %s56, 1
      %s58 = scalar_select %p55, %s56, %s57
      %p61 = pneg %p55
      %p62 = scmp.eq.s32.totalorder %s20, 1
      %p63 = por %p61, %p62
      %p64 = scmp.ne.s32.totalorder %s56, %s59
      %p65 = scmp.eq.s32.totalorder %s20, 0
      %p66 = por %p64, %p65
      %p67 = scmp.ne.s32.totalorder %s56, %s59
      %p68 = scmp.eq.s32.totalorder %s25, 1
      %p69 = por %p67, %p68
      %p70 = scmp.ne.s32.totalorder %s59, %s60
      %p71 = scmp.eq.s32.totalorder %s25, 0
      %p72 = por %p70, %p71
      %p73 = scmp.ne.s32.totalorder %s59, %s60
      %p74 = scmp.eq.s32.totalorder %s26, 1
      %p75 = por %p73, %p74
      %p77 = scmp.ne.s32.totalorder %s60, %s76
      %p78 = scmp.eq.s32.totalorder %s26, 0
      %p79 = por %p77, %p78
      %s80 = ssub.s32 %s20, %s27
      %p81 = scmp.eq.s32.totalorder %s80, 0
      %s83 = sadd.s32 %s82, 1
      %s84 = scalar_select %p81, %s82, %s83
      %p87 = pneg %p81
      %p88 = scmp.eq.s32.totalorder %s20, 1
      %p89 = por %p87, %p88
      %p90 = scmp.ne.s32.totalorder %s82, %s85
      %p91 = scmp.eq.s32.totalorder %s20, 0
      %p92 = por %p90, %p91
      %p93 = scmp.ne.s32.totalorder %s82, %s85
      %p94 = scmp.eq.s32.totalorder %s25, 1
      %p95 = por %p93, %p94
      %p96 = scmp.ne.s32.totalorder %s85, %s86
      %p97 = scmp.eq.s32.totalorder %s25, 0
      %p98 = por %p96, %p97
      %p99 = scmp.ne.s32.totalorder %s85, %s86
      %p100 = scmp.eq.s32.totalorder %s26, 1
      %p101 = por %p99, %p100
      %p103 = scmp.ne.s32.totalorder %s86, %s102
      %p104 = scmp.eq.s32.totalorder %s26, 0
      %p105 = por %p103, %p104
      %s106 = ssub.s32 %s20, %s27
      %p107 = scmp.eq.s32.totalorder %s106, 0
      %s109 = sadd.s32 %s108, 1
      %s110 = scalar_select %p107, %s108, %s109
      %p113 = pneg %p107
      %p114 = scmp.eq.s32.totalorder %s20, 1
      %p115 = por %p113, %p114
      %p116 = scmp.ne.s32.totalorder %s108, %s111
      %p117 = scmp.eq.s32.totalorder %s20, 0
      %p118 = por %p116, %p117
      %p119 = scmp.ne.s32.totalorder %s108, %s111
      %p120 = scmp.eq.s32.totalorder %s25, 1
      %p121 = por %p119, %p120
      %p122 = scmp.ne.s32.totalorder %s111, %s112
      %p123 = scmp.eq.s32.totalorder %s25, 0
      %p124 = por %p122, %p123
      %p125 = scmp.ne.s32.totalorder %s111, %s112
      %p126 = scmp.eq.s32.totalorder %s26, 1
      %p127 = por %p125, %p126
      %p129 = scmp.ne.s32.totalorder %s112, %s128
      %p130 = scmp.eq.s32.totalorder %s26, 0
      %p131 = por %p129, %p130
      %s133 = sadd.s32 %s132, 1
      %p136 = scmp.eq.s32.totalorder %s20, 1
      %p137 = scmp.ne.s32.totalorder %s132, %s134
      %p138 = scmp.eq.s32.totalorder %s20, 0
      %p139 = por %p137, %p138
      %p140 = scmp.ne.s32.totalorder %s132, %s134
      %p141 = scmp.eq.s32.totalorder %s25, 1
      %p142 = por %p140, %p141
      %p143 = scmp.ne.s32.totalorder %s134, %s135
      %p144 = scmp.eq.s32.totalorder %s25, 0
      %p145 = por %p143, %p144
      %p146 = scmp.ne.s32.totalorder %s134, %s135
      %p147 = scmp.eq.s32.totalorder %s26, 1
      %p148 = por %p146, %p147
      %p150 = scmp.ne.s32.totalorder %s135, %s149
      %p151 = scmp.eq.s32.totalorder %s26, 0
      %p152 = por %p150, %p151
      %s153 = ssub.s32 %s20, %s27
      %p154 = scmp.eq.s32.totalorder %s153, 0
      %s156 = sadd.s32 %s155, 1
      %s157 = scalar_select %p154, %s155, %s156
      %p160 = pneg %p154
      %p161 = scmp.eq.s32.totalorder %s20, 1
      %p162 = por %p160, %p161
      %p163 = scmp.ne.s32.totalorder %s155, %s158
      %p164 = scmp.eq.s32.totalorder %s20, 0
      %p165 = por %p163, %p164
      %p166 = scmp.ne.s32.totalorder %s155, %s158
      %p167 = scmp.eq.s32.totalorder %s25, 1
      %p168 = por %p166, %p167
      %p169 = scmp.ne.s32.totalorder %s158, %s159
      %p170 = scmp.eq.s32.totalorder %s25, 0
      %p171 = por %p169, %p170
      %p172 = scmp.ne.s32.totalorder %s158, %s159
      %p173 = scmp.eq.s32.totalorder %s26, 1
      %p174 = por %p172, %p173
      %p176 = scmp.ne.s32.totalorder %s159, %s175
      %p177 = scmp.eq.s32.totalorder %s26, 0
      %p178 = por %p176, %p177
      %s179 = ssub.s32 %s20, %s27
      %p180 = scmp.eq.s32.totalorder %s179, 0
      %s182 = sadd.s32 %s181, 1
      %s183 = scalar_select %p180, %s181, %s182
      %p186 = pneg %p180
      %p187 = scmp.eq.s32.totalorder %s20, 1
      %p188 = por %p186, %p187
      %p189 = scmp.ne.s32.totalorder %s181, %s184
      %p190 = scmp.eq.s32.totalorder %s20, 0
      %p191 = por %p189, %p190
      %p192 = scmp.ne.s32.totalorder %s181, %s184
      %p193 = scmp.eq.s32.totalorder %s25, 1
      %p194 = por %p192, %p193
      %p195 = scmp.ne.s32.totalorder %s184, %s185
      %p196 = scmp.eq.s32.totalorder %s25, 0
      %p197 = por %p195, %p196
      %p198 = scmp.ne.s32.totalorder %s184, %s185
      %p199 = scmp.eq.s32.totalorder %s26, 1
      %p200 = por %p198, %p199
      %p202 = scmp.ne.s32.totalorder %s185, %s201
      %p203 = scmp.eq.s32.totalorder %s26, 0
      %p204 = por %p202, %p203
      %s205 = ssub.s32 %s20, %s27
      %p206 = scmp.eq.s32.totalorder %s205, 0
      %s208 = sadd.s32 %s207, 1
      %s209 = scalar_select %p206, %s207, %s208
      %p212 = pneg %p206
      %p213 = scmp.eq.s32.totalorder %s20, 1
      %p214 = por %p212, %p213
      %p215 = scmp.ne.s32.totalorder %s207, %s210
      %p216 = scmp.eq.s32.totalorder %s20, 0
      %p217 = por %p215, %p216
      %p218 = scmp.ne.s32.totalorder %s207, %s210
      %p219 = scmp.eq.s32.totalorder %s25, 1
      %p220 = por %p218, %p219
      %p221 = scmp.ne.s32.totalorder %s210, %s211
      %p222 = scmp.eq.s32.totalorder %s25, 0
      %p223 = por %p221, %p222
      %p224 = scmp.ne.s32.totalorder %s210, %s211
      %p225 = scmp.eq.s32.totalorder %s26, 1
      %p226 = por %p224, %p225
      %p228 = scmp.ne.s32.totalorder %s211, %s227
      %p229 = scmp.eq.s32.totalorder %s26, 0
      %p230 = por %p228, %p229
      %p231 = scmp.le.s32.totalorder 1, %s20
      %p232 = scmp.lt.s32.totalorder %s20, 3
      %p233 = pnand %p231, %p232
      %p234 = pneg %p233
      // Predicated region
      $region9: #{patchy_vae_forward.8} parent=5 // pred_check
        _
      $region10: #{patchy_vae_forward.8} parent=5 // pred_check_branch
        %236 = sbr.rel (%p233) target = $region12
      $region11: #{patchy_vae_forward.8} parent=5 // pred_region
        %s237 = ssub.s32 %s20, 1
        // Predicated region
        $region13: #{patchy_vae_forward.8} parent=11 // pred_check
          %p238 = pneg %p145
        $region14: #{patchy_vae_forward.8} parent=11 // pred_check_branch
          %240 = sbr.rel (%p238) target = $region16
        $region15: #{patchy_vae_forward.8} parent=11 // pred_region
          _
        $region16: #{patchy_vae_forward.8} parent=11 // pred_fallthru
          _
      $region12: #{patchy_vae_forward.8} parent=5 // pred_fallthru
        _
      %p241 = scmp.lt.s32.totalorder %s20, 2
      // Predicated region
      $region17: #{patchy_vae_forward.8} parent=5 // pred_check
        %p242 = pneg %p241
      $region18: #{patchy_vae_forward.8} parent=5 // pred_check_branch
        %244 = sbr.rel (%p242) target = $region20
      $region19: #{patchy_vae_forward.8} parent=5 // pred_region
        // Predicated region
        $region21: #{patchy_vae_forward.8} parent=19 // pred_check
          %p245 = pneg %p40
        $region22: #{patchy_vae_forward.8} parent=19 // pred_check_branch
          %247 = sbr.rel (%p245) target = $region24
        $region23: #{patchy_vae_forward.8} parent=19 // pred_region
          %p248 = scmp.lt.s32.totalorder %s20, 1
          %s249 = scalar_select %p248, %s20, 1
          %s250 = smul.addr %s249, 2
          %s251 = smul.addr %s250, 8
          %s252 = scalar_lea.vmem %s0, %s251
        $region24: #{patchy_vae_forward.8} parent=19 // pred_fallthru
          _
        // Predicated region
        $region25: #{patchy_vae_forward.8} parent=19 // pred_check
          %p253 = pneg %p66
        $region26: #{patchy_vae_forward.8} parent=19 // pred_check_branch
          %255 = sbr.rel (%p253) target = $region28
        $region27: #{patchy_vae_forward.8} parent=19 // pred_region
          %p256 = scmp.lt.s32.totalorder %s20, 1
          %s257 = scalar_select %p256, %s20, 1
          %s258 = smul.addr %s257, 2
          %s259 = smul.addr %s258, 8
          %s260 = scalar_lea.vmem %s1, %s259
        $region28: #{patchy_vae_forward.8} parent=19 // pred_fallthru
          _
        // Predicated region
        $region29: #{patchy_vae_forward.8} parent=19 // pred_check
          %p261 = pneg %p92
        $region30: #{patchy_vae_forward.8} parent=19 // pred_check_branch
          %263 = sbr.rel (%p261) target = $region32
        $region31: #{patchy_vae_forward.8} parent=19 // pred_region
          %p264 = scmp.lt.s32.totalorder %s20, 1
          %s265 = scalar_select %p264, %s20, 1
          %s266 = smul.addr %s265, 2
          %s267 = smul.addr %s266, 8
          %s268 = scalar_lea.vmem %s2, %s267
        $region32: #{patchy_vae_forward.8} parent=19 // pred_fallthru
          _
        // Predicated region
        $region33: #{patchy_vae_forward.8} parent=19 // pred_check
          %p269 = pneg %p118
        $region34: #{patchy_vae_forward.8} parent=19 // pred_check_branch
          %271 = sbr.rel (%p269) target = $region36
        $region35: #{patchy_vae_forward.8} parent=19 // pred_region
          %p272 = scmp.lt.s32.totalorder %s20, 1
          %s273 = scalar_select %p272, %s20, 1
          %s274 = scalar_lea.vmem %s3, %s273
        $region36: #{patchy_vae_forward.8} parent=19 // pred_fallthru
          _
      $region20: #{patchy_vae_forward.8} parent=5 // pred_fallthru
        _
      %p275 = scmp.le.s32.totalorder 1, %s20
      %p276 = scmp.lt.s32.totalorder %s20, 3
      %p277 = pnand %p275, %p276
      %p278 = pneg %p277
      // Predicated region
      $region37: #{patchy_vae_forward.8} parent=5 // pred_check
        _
      $region38: #{patchy_vae_forward.8} parent=5 // pred_check_branch
        %280 = sbr.rel (%p277) target = $region40
      $region39: #{patchy_vae_forward.8} parent=5 // pred_region
        %s281 = ssub.s32 %s20, 1
        %p282 = scmp.lt.s32.totalorder %s25, 1
        %s283 = scalar_select %p282, %s25, 1
        %s284 = smul.addr %s283, 2
        %s285 = smul.addr %s284, 8
        %s286 = scalar_lea.vmem %s0, %s285
        %p287 = pneg %p46
        %p288 = pneg %p43
        %p289 = scmp.lt.s32.totalorder %s25, 1
        %s290 = scalar_select %p289, %s25, 1
        %s291 = smul.addr %s290, 2
        %s292 = smul.addr %s291, 8
        %s293 = scalar_lea.vmem %s1, %s292
        %p294 = pneg %p72
        %p295 = pneg %p69
        %p296 = scmp.lt.s32.totalorder %s25, 1
        %s297 = scalar_select %p296, %s25, 1
        %s298 = smul.addr %s297, 2
        %s299 = smul.addr %s298, 8
        %s300 = scalar_lea.vmem %s2, %s299
        %p301 = pneg %p98
        %p302 = pneg %p95
        %p303 = scmp.lt.s32.totalorder %s25, 1
        %s304 = scalar_select %p303, %s25, 1
        %s305 = scalar_lea.vmem %s3, %s304
        %p306 = pneg %p124
        %p307 = pneg %p121
        %p308 = pneg %p145
        %p309 = pneg %p142
        %p310 = pneg %p171
        %p311 = pneg %p168
        %s312 = sand.u32 %s158, 1
        %s313 = scalar_lea.sflag [#allocation3], %s312
        %s314 = sand.u32 %s158, 1
        %s315 = scalar_lea.vmem [#allocation2], %s314
        %p316 = pneg %p197
        %p317 = pneg %p194
        %s318 = sand.u32 %s184, 1
        %s319 = scalar_lea.sflag [#allocation5], %s318
        %s320 = sand.u32 %s184, 1
        %s321 = scalar_lea.vmem [#allocation4], %s320
        %p322 = pneg %p223
        %p323 = pneg %p220
        %p324 = scmp.lt.s32.totalorder %s25, 1
        %s325 = scalar_select %p324, %s25, 1
        %s326 = scalar_lea.vmem %s7, %s325
        %p327 = scmp.lt.s32.totalorder %s25, 1
        %s328 = scalar_select %p327, %s25, 1
        %s329 = smul.addr %s328, 2
        %s330 = smul.addr %s329, 8
        %s331 = scalar_lea.vmem %s0, %s330
        %p332 = scmp.lt.s32.totalorder %s25, 1
        %s333 = scalar_select %p332, %s25, 1
        %s334 = smul.addr %s333, 2
        %s335 = smul.addr %s334, 8
        %s336 = scalar_lea.vmem %s1, %s335
        %p337 = scmp.lt.s32.totalorder %s25, 1
        %s338 = scalar_select %p337, %s25, 1
        %s339 = smul.addr %s338, 2
        %s340 = smul.addr %s339, 8
        %s341 = scalar_lea.vmem %s2, %s340
        %p342 = scmp.lt.s32.totalorder %s25, 1
        %s343 = scalar_select %p342, %s25, 1
        %s344 = scalar_lea.vmem %s3, %s343
        %p345 = scmp.lt.s32.totalorder %s25, 1
        %s346 = scalar_select %p345, %s25, 1
        %s347 = scalar_lea.vmem %s7, %s346
        %v348 = vld [vmem:[%s331] sm:$0xff]
        %v349 = vld [vmem:[%s331 + $0x8] sm:$0xff]
        %v350 = vld [vmem:[%s336] sm:$0xff]
        %v351 = vld [vmem:[%s336 + $0x8] sm:$0xff]
        %v352 = vmul.f32 %v350, 1.442695
        %v353 = vpow.pop %v352
        %v354 = vmul.f32 %v351, 1.442695
        %v355 = vpow.pop %v354
        %v356 = vmax.f32 %v353, 1e-07
        %v357 = vmax.f32 %v355, 1e-07
        %v358 = vmin.f32 %v356, 10000000.0
        %v359 = vmin.f32 %v357, 10000000.0
        %v360 = vld [vmem:[%s341] sm:$0xff]
        %v361 = vld [vmem:[%s341 + $0x8] sm:$0xff]
        %v362 = vld [vmem:[%s4] sm:$0xf]
        %vm363 = vcmask 31744
        %v365 = vsel %vm363, %v360, 0
        %v368 = vsel %vm363, %v361, 0
        %vm370 = vcmask 1043456
        %v372 = vsel %vm370, %v362, 0
        %374 = vmatprep.subr.mxu0 0.0
        %375 = vmatpush1.msra.mxu0 0.0
        %376 = vmatprep.subr.mxu0 0.0
        %377 = vmatpush1.msra.mxu0 0.0
        %378 = vmatprep.subr.mxu0 0.0
        %379 = vmatpush1.msra.mxu0 0.0
        %380 = vmatprep.subr.mxu0 0.0
        %381 = vmatpush1.msra.mxu0 0.0
        %382 = vmatprep.subr.mxu0 0.0
        %383 = vmatpush1.msra.mxu0 0.0
        %384 = vmatprep.subr.mxu0 0.0
        %385 = vmatpush1.msra.mxu0 0.0
        %386 = vmatprep.subr.mxu0 0.0
        %387 = vmatpush1.msra.mxu0 0.0
        %388 = vmatprep.subr.mxu0 0.0
        %389 = vmatpush1.msra.mxu0 0.0
        %390 = vmatprep.subr.mxu0 0.0
        %391 = vmatpush1.msra.mxu0 0.0
        %392 = vmatprep.subr.mxu0 0.0
        %393 = vmatpush1.msra.mxu0 0.0
        %394 = vmatprep.subr.mxu0 0.0
        %395 = vmatpush1.msra.mxu0 0.0
        %396 = vmatprep.subr.mxu0 0.0
        %397 = vmatpush1.msra.mxu0 0.0
        %398 = vmatprep.subr.mxu0 0.0
        %399 = vmatpush1.msra.mxu0 0.0
        %400 = vmatprep.subr.mxu0 0.0
        %401 = vmatpush1.msra.mxu0 0.0
        %402 = vmatprep.subr.mxu0 0.0
        %403 = vmatpush1.msra.mxu0 0.0
        %404 = vmatprep.subr.mxu0 0.0
        %405 = vmatpush1.msra.mxu0 %v372
        %406 = vmatprep.subr.mxu0 0.0
        %407 = vmatpush2.msra.mxu0 0.0
        %408 = vmatprep.subr.mxu0 0.0
        %409 = vmatpush2.msra.mxu0 0.0
        %410 = vmatprep.subr.mxu0 0.0
        %411 = vmatpush2.msra.mxu0 0.0
        %412 = vmatprep.subr.mxu0 0.0
        %413 = vmatpush2.msra.mxu0 0.0
        %414 = vmatprep.subr.mxu0 0.0
        %415 = vmatpush2.msra.mxu0 0.0
        %416 = vmatprep.subr.mxu0 0.0
        %417 = vmatpush2.msra.mxu0 0.0
        %418 = vmatprep.subr.mxu0 0.0
        %419 = vmatpush2.msra.mxu0 0.0
        %420 = vmatprep.subr.mxu0 0.0
        %421 = vmatpush2.msra.mxu0 0.0
        %422 = vmatprep.subr.mxu0 0.0
        %423 = vmatpush2.msra.mxu0 0.0
        %424 = vmatprep.subr.mxu0 0.0
        %425 = vmatpush2.msra.mxu0 0.0
        %426 = vmatprep.subr.mxu0 0.0
        %427 = vmatpush2.msra.mxu0 0.0
        %428 = vmatprep.subr.mxu0 0.0
        %429 = vmatpush2.msra.mxu0 0.0
        %430 = vmatprep.subr.mxu0 0.0
        %431 = vmatpush2.msra.mxu0 0.0
        %432 = vmatprep.subr.mxu0 0.0
        %433 = vmatpush2.msra.mxu0 0.0
        %434 = vmatprep.subr.mxu0 0.0
        %435 = vmatpush2.msra.mxu0 0.0
        %436 = vmatprep.subr.mxu0 0.0
        %437 = vmatpush2.msra.mxu0 0.0
        %438 = vmatprep.mubr.f32.mxu0 0.0
        %439 = vmatmul.mubr.f32.gmra.mxu0 %v365
        %v440 = vpop.f32.mrf.mxu0
        %v441 = vadd.f32 0.0, %v440
        %v442 = vpop.f32.mrf.mxu0
        %443 = vmatprep.mubr.f32.mxu0 0.0
        %444 = vmatmul.mubr.f32.gmra.mxu0 %v368
        %v445 = vpop.f32.mrf.mxu0
        %v446 = vadd.f32 0.0, %v445
        %v447 = vpop.f32.mrf.mxu0
        %448 = vdwg.mxu0
        %vm449 = vcmask 130048
        %v451 = vsel %vm449, 1.0, 0
        %453 = vmatprep.subr.mxu0 0.0
        %454 = vmatpush1.msra.mxu0 0.0
        %455 = vmatprep.subr.mxu0 0.0
        %456 = vmatpush1.msra.mxu0 0.0
        %457 = vmatprep.subr.mxu0 0.0
        %458 = vmatpush1.msra.mxu0 0.0
        %459 = vmatprep.subr.mxu0 0.0
        %460 = vmatpush1.msra.mxu0 0.0
        %461 = vmatprep.subr.mxu0 0.0
        %462 = vmatpush1.msra.mxu0 0.0
        %463 = vmatprep.subr.mxu0 0.0
        %464 = vmatpush1.msra.mxu0 0.0
        %465 = vmatprep.subr.mxu0 0.0
        %466 = vmatpush1.msra.mxu0 0.0
        %467 = vmatprep.subr.mxu0 0.0
        %468 = vmatpush1.msra.mxu0 0.0
        %469 = vmatprep.subr.mxu0 0.0
        %470 = vmatpush1.msra.mxu0 0.0
        %471 = vmatprep.subr.mxu0 0.0
        %472 = vmatpush1.msra.mxu0 0.0
        %473 = vmatprep.subr.mxu0 0.0
        %474 = vmatpush1.msra.mxu0 0.0
        %475 = vmatprep.subr.mxu0 0.0
        %476 = vmatpush1.msra.mxu0 0.0
        %477 = vmatprep.subr.mxu0 0.0
        %478 = vmatpush1.msra.mxu0 0.0
        %479 = vmatprep.subr.mxu0 0.0
        %480 = vmatpush1.msra.mxu0 0.0
        %481 = vmatprep.subr.mxu0 0.0
        %482 = vmatpush1.msra.mxu0 %v446
        %483 = vmatprep.subr.mxu0 0.0
        %484 = vmatpush1.msra.mxu0 %v441
        %485 = vmatprep.subr.mxu0 0.0
        %486 = vmatpush2.msra.mxu0 0.0
        %487 = vmatprep.subr.mxu0 0.0
        %488 = vmatpush2.msra.mxu0 0.0
        %489 = vmatprep.subr.mxu0 0.0
        %490 = vmatpush2.msra.mxu0 0.0
        %491 = vmatprep.subr.mxu0 0.0
        %492 = vmatpush2.msra.mxu0 0.0
        %493 = vmatprep.subr.mxu0 0.0
        %494 = vmatpush2.msra.mxu0 0.0
        %495 = vmatprep.subr.mxu0 0.0
        %496 = vmatpush2.msra.mxu0 0.0
        %497 = vmatprep.subr.mxu0 0.0
        %498 = vmatpush2.msra.mxu0 0.0
        %499 = vmatprep.subr.mxu0 0.0
        %500 = vmatpush2.msra.mxu0 0.0
        %501 = vmatprep.subr.mxu0 0.0
        %502 = vmatpush2.msra.mxu0 0.0
        %503 = vmatprep.subr.mxu0 0.0
        %504 = vmatpush2.msra.mxu0 0.0
        %505 = vmatprep.subr.mxu0 0.0
        %506 = vmatpush2.msra.mxu0 0.0
        %507 = vmatprep.subr.mxu0 0.0
        %508 = vmatpush2.msra.mxu0 0.0
        %509 = vmatprep.subr.mxu0 0.0
        %510 = vmatpush2.msra.mxu0 0.0
        %511 = vmatprep.subr.mxu0 0.0
        %512 = vmatpush2.msra.mxu0 0.0
        %513 = vmatprep.subr.mxu0 0.0
        %514 = vmatpush2.msra.mxu0 0.0
        %515 = vmatprep.subr.mxu0 0.0
        %516 = vmatpush2.msra.mxu0 0.0
        %517 = vmatprep.mubr.f32.mxu0 0.0
        %518 = vmatmul.mubr.f32.gmra.mxu0 %v451
        %v519 = vpop.f32.mrf.mxu0
        %v520 = vadd.f32 1e-07, %v519
        %v521 = vpop.f32.mrf.mxu0
        %522 = vdwg.mxu0
        %v523 = vmul.f32 %v348, %v441
        %v524 = vmul.f32 %v349, %v446
        %525 = vmatprep.subr.mxu0 0.0
        %526 = vmatpush1.msra.mxu0 0.0
        %527 = vmatprep.subr.mxu0 0.0
        %528 = vmatpush1.msra.mxu0 0.0
        %529 = vmatprep.subr.mxu0 0.0
        %530 = vmatpush1.msra.mxu0 0.0
        %531 = vmatprep.subr.mxu0 0.0
        %532 = vmatpush1.msra.mxu0 0.0
        %533 = vmatprep.subr.mxu0 0.0
        %534 = vmatpush1.msra.mxu0 0.0
        %535 = vmatprep.subr.mxu0 0.0
        %536 = vmatpush1.msra.mxu0 0.0
        %537 = vmatprep.subr.mxu0 0.0
        %538 = vmatpush1.msra.mxu0 0.0
        %539 = vmatprep.subr.mxu0 0.0
        %540 = vmatpush1.msra.mxu0 0.0
        %541 = vmatprep.subr.mxu0 0.0
        %542 = vmatpush1.msra.mxu0 0.0
        %543 = vmatprep.subr.mxu0 0.0
        %544 = vmatpush1.msra.mxu0 0.0
        %545 = vmatprep.subr.mxu0 0.0
        %546 = vmatpush1.msra.mxu0 0.0
        %547 = vmatprep.subr.mxu0 0.0
        %548 = vmatpush1.msra.mxu0 0.0
        %549 = vmatprep.subr.mxu0 0.0
        %550 = vmatpush1.msra.mxu0 0.0
        %551 = vmatprep.subr.mxu0 0.0
        %552 = vmatpush1.msra.mxu0 0.0
        %553 = vmatprep.subr.mxu0 0.0
        %554 = vmatpush1.msra.mxu0 %v524
        %555 = vmatprep.subr.mxu0 0.0
        %556 = vmatpush1.msra.mxu0 %v523
        %557 = vmatprep.subr.mxu0 0.0
        %558 = vmatpush2.msra.mxu0 0.0
        %559 = vmatprep.subr.mxu0 0.0
        %560 = vmatpush2.msra.mxu0 0.0
        %561 = vmatprep.subr.mxu0 0.0
        %562 = vmatpush2.msra.mxu0 0.0
        %563 = vmatprep.subr.mxu0 0.0
        %564 = vmatpush2.msra.mxu0 0.0
        %565 = vmatprep.subr.mxu0 0.0
        %566 = vmatpush2.msra.mxu0 0.0
        %567 = vmatprep.subr.mxu0 0.0
        %568 = vmatpush2.msra.mxu0 0.0
        %569 = vmatprep.subr.mxu0 0.0
        %570 = vmatpush2.msra.mxu0 0.0
        %571 = vmatprep.subr.mxu0 0.0
        %572 = vmatpush2.msra.mxu0 0.0
        %573 = vmatprep.subr.mxu0 0.0
        %574 = vmatpush2.msra.mxu0 0.0
        %575 = vmatprep.subr.mxu0 0.0
        %576 = vmatpush2.msra.mxu0 0.0
        %577 = vmatprep.subr.mxu0 0.0
        %578 = vmatpush2.msra.mxu0 0.0
        %579 = vmatprep.subr.mxu0 0.0
        %580 = vmatpush2.msra.mxu0 0.0
        %581 = vmatprep.subr.mxu0 0.0
        %582 = vmatpush2.msra.mxu0 0.0
        %583 = vmatprep.subr.mxu0 0.0
        %584 = vmatpush2.msra.mxu0 0.0
        %585 = vmatprep.subr.mxu0 0.0
        %586 = vmatpush2.msra.mxu0 0.0
        %587 = vmatprep.subr.mxu0 0.0
        %588 = vmatpush2.msra.mxu0 0.0
        %589 = vmatprep.mubr.f32.mxu0 0.0
        %590 = vmatmul.mubr.f32.gmra.mxu0 %v451
        %v591 = vpop.f32.mrf.mxu0
        %v592 = vadd.f32 0.0, %v591
        %v593 = vpop.f32.mrf.mxu0
        %594 = vdwg.mxu0
        %v595 = vrcp.pop %v520
        %v596 = vmul.f32 %v592, %v595
        %v597 = vmul.f32 %v358, %v441
        %v598 = vmul.f32 %v359, %v446
        %599 = vmatprep.subr.mxu0 0.0
        %600 = vmatpush1.msra.mxu0 0.0
        %601 = vmatprep.subr.mxu0 0.0
        %602 = vmatpush1.msra.mxu0 0.0
        %603 = vmatprep.subr.mxu0 0.0
        %604 = vmatpush1.msra.mxu0 0.0
        %605 = vmatprep.subr.mxu0 0.0
        %606 = vmatpush1.msra.mxu0 0.0
        %607 = vmatprep.subr.mxu0 0.0
        %608 = vmatpush1.msra.mxu0 0.0
        %609 = vmatprep.subr.mxu0 0.0
        %610 = vmatpush1.msra.mxu0 0.0
        %611 = vmatprep.subr.mxu0 0.0
        %612 = vmatpush1.msra.mxu0 0.0
        %613 = vmatprep.subr.mxu0 0.0
        %614 = vmatpush1.msra.mxu0 0.0
        %615 = vmatprep.subr.mxu0 0.0
        %616 = vmatpush1.msra.mxu0 0.0
        %617 = vmatprep.subr.mxu0 0.0
        %618 = vmatpush1.msra.mxu0 0.0
        %619 = vmatprep.subr.mxu0 0.0
        %620 = vmatpush1.msra.mxu0 0.0
        %621 = vmatprep.subr.mxu0 0.0
        %622 = vmatpush1.msra.mxu0 0.0
        %623 = vmatprep.subr.mxu0 0.0
        %624 = vmatpush1.msra.mxu0 0.0
        %625 = vmatprep.subr.mxu0 0.0
        %626 = vmatpush1.msra.mxu0 0.0
        %627 = vmatprep.subr.mxu0 0.0
        %628 = vmatpush1.msra.mxu0 %v598
        %629 = vmatprep.subr.mxu0 0.0
        %630 = vmatpush1.msra.mxu0 %v597
        %631 = vmatprep.subr.mxu0 0.0
        %632 = vmatpush2.msra.mxu0 0.0
        %633 = vmatprep.subr.mxu0 0.0
        %634 = vmatpush2.msra.mxu0 0.0
        %635 = vmatprep.subr.mxu0 0.0
        %636 = vmatpush2.msra.mxu0 0.0
        %637 = vmatprep.subr.mxu0 0.0
        %638 = vmatpush2.msra.mxu0 0.0
        %639 = vmatprep.subr.mxu0 0.0
        %640 = vmatpush2.msra.mxu0 0.0
        %641 = vmatprep.subr.mxu0 0.0
        %642 = vmatpush2.msra.mxu0 0.0
        %643 = vmatprep.subr.mxu0 0.0
        %644 = vmatpush2.msra.mxu0 0.0
        %645 = vmatprep.subr.mxu0 0.0
        %646 = vmatpush2.msra.mxu0 0.0
        %647 = vmatprep.subr.mxu0 0.0
        %648 = vmatpush2.msra.mxu0 0.0
        %649 = vmatprep.subr.mxu0 0.0
        %650 = vmatpush2.msra.mxu0 0.0
        %651 = vmatprep.subr.mxu0 0.0
        %652 = vmatpush2.msra.mxu0 0.0
        %653 = vmatprep.subr.mxu0 0.0
        %654 = vmatpush2.msra.mxu0 0.0
        %655 = vmatprep.subr.mxu0 0.0
        %656 = vmatpush2.msra.mxu0 0.0
        %657 = vmatprep.subr.mxu0 0.0
        %658 = vmatpush2.msra.mxu0 0.0
        %659 = vmatprep.subr.mxu0 0.0
        %660 = vmatpush2.msra.mxu0 0.0
        %661 = vmatprep.subr.mxu0 0.0
        %662 = vmatpush2.msra.mxu0 0.0
        %663 = vmatprep.mubr.f32.mxu0 0.0
        %664 = vmatmul.mubr.f32.gmra.mxu0 %v451
        %v665 = vpop.f32.mrf.mxu0
        %v666 = vadd.f32 1e-07, %v665
        %v667 = vpop.f32.mrf.mxu0
        %668 = vdwg.mxu0
        %v669 = vmul.f32 %v666, %v595
        %vm670 = vcmask 253952
        %671 = vst.msk [vmem:[%s315] sm:$0x1] %vm670, %v596
        %672 = vst.msk [vmem:[%s321] sm:$0x1] %vm670, %v669
        %v673 = vld [vmem:[%s344] sm:$0x1]
        %v674 = vrsqrt.pop %v669
        %v675 = vmul.f32 %v669, %v674
        %vm676 = vcmp.eq.f32.partialorder %v669, inf
        %v677 = vsel %vm676, %v669, %v675
        %vm678 = vcmp.eq.f32.partialorder %v669, 0.0
        %v679 = vand.u32 %v669, 2147483648
        %v680 = vsel %vm678, %v679, %v677
        %v681 = vmul.f32 %v673, %v680
        %v682 = vadd.f32 %v596, %v681
        %683 = vst.msk [vmem:[%s347] sm:$0x1] %vm670, %v682
        %s684 = sand.u32 %s158, 1
        %s685 = scalar_lea.sflag [#allocation3], %s684
        %s686 = sand.u32 %s158, 1
        %s687 = scalar_lea.vmem [#allocation2], %s686
        %s688 = sand.u32 %s184, 1
        %s689 = scalar_lea.sflag [#allocation5], %s688
        %s690 = sand.u32 %s184, 1
        %s691 = scalar_lea.vmem [#allocation4], %s690
        %p692 = scmp.lt.s32.totalorder %s25, 1
        %s693 = scalar_select %p692, %s25, 1
        %s694 = scalar_lea.vmem %s7, %s693
        // Predicated region
        $region41: #{patchy_vae_forward.8} parent=39 // pred_check
          %p695 = pneg %p168
        $region42: #{patchy_vae_forward.8} parent=39 // pred_check_branch
          %697 = sbr.rel (%p695) target = $region44
        $region43: #{patchy_vae_forward.8} parent=39 // pred_region
          %s699 = ssub.s32 16, 16
          %700 = vsyncadd %s685, %s699
          %s701 = smul.addr %s25, 16
          %s702 = scalar_lea.hbm %s5, %s701
          %s704 = sshll.u32 %s687, 4
          %s705 = int_to_ptr.vmem [resolvable:$true] %s704
          %707 = dma.vmem_to_hbm [thread:$0]  %s705, 16, %s702, %s685
        $region44: #{patchy_vae_forward.8} parent=39 // pred_fallthru
          _
        // Predicated region
        $region45: #{patchy_vae_forward.8} parent=39 // pred_check
          %p708 = pneg %p194
        $region46: #{patchy_vae_forward.8} parent=39 // pred_check_branch
          %710 = sbr.rel (%p708) target = $region48
        $region47: #{patchy_vae_forward.8} parent=39 // pred_region
          %s712 = ssub.s32 16, 16
          %713 = vsyncadd %s689, %s712
          %s714 = smul.addr %s25, 16
          %s715 = scalar_lea.hbm %s6, %s714
          %s717 = sshll.u32 %s691, 4
          %s718 = int_to_ptr.vmem [resolvable:$true] %s717
          %720 = dma.vmem_to_hbm [thread:$0]  %s718, 16, %s715, %s689
        $region48: #{patchy_vae_forward.8} parent=39 // pred_fallthru
          _
        // Predicated region
        $region49: #{patchy_vae_forward.8} parent=39 // pred_check
          %p721 = pneg %p220
        $region50: #{patchy_vae_forward.8} parent=39 // pred_check_branch
          %723 = sbr.rel (%p721) target = $region52
        $region51: #{patchy_vae_forward.8} parent=39 // pred_region
          _
        $region52: #{patchy_vae_forward.8} parent=39 // pred_fallthru
          _
      $region40: #{patchy_vae_forward.8} parent=5 // pred_fallthru
        _
      %p724 = scmp.le.s32.totalorder 2, %s20
      // Predicated region
      $region53: #{patchy_vae_forward.8} parent=5 // pred_check
        %p725 = pneg %p724
      $region54: #{patchy_vae_forward.8} parent=5 // pred_check_branch
        %727 = sbr.rel (%p725) target = $region56
      $region55: #{patchy_vae_forward.8} parent=5 // pred_region
        %s728 = ssub.s32 %s20, 2
        // Predicated region
        $region57: #{patchy_vae_forward.8} parent=55 // pred_check
          %p729 = pneg %p174
        $region58: #{patchy_vae_forward.8} parent=55 // pred_check_branch
          %731 = sbr.rel (%p729) target = $region60
        $region59: #{patchy_vae_forward.8} parent=55 // pred_region
          %s732 = sand.u32 %s159, 1
          %s733 = scalar_lea.sflag [#allocation3], %s732
          %s734 = sand.u32 %s159, 1
          %s735 = scalar_lea.vmem [#allocation2], %s734
          %736 = dma.done %s733, 16
        $region60: #{patchy_vae_forward.8} parent=55 // pred_fallthru
          _
        // Predicated region
        $region61: #{patchy_vae_forward.8} parent=55 // pred_check
          %p737 = pneg %p200
        $region62: #{patchy_vae_forward.8} parent=55 // pred_check_branch
          %739 = sbr.rel (%p737) target = $region64
        $region63: #{patchy_vae_forward.8} parent=55 // pred_region
          %s740 = sand.u32 %s185, 1
          %s741 = scalar_lea.sflag [#allocation5], %s740
          %s742 = sand.u32 %s185, 1
          %s743 = scalar_lea.vmem [#allocation4], %s742
          %744 = dma.done %s741, 16
        $region64: #{patchy_vae_forward.8} parent=55 // pred_fallthru
          _
        // Predicated region
        $region65: #{patchy_vae_forward.8} parent=55 // pred_check
          %p745 = pneg %p226
        $region66: #{patchy_vae_forward.8} parent=55 // pred_check_branch
          %747 = sbr.rel (%p745) target = $region68
        $region67: #{patchy_vae_forward.8} parent=55 // pred_region
          %p748 = scmp.lt.s32.totalorder %s26, 1
          %s749 = scalar_select %p748, %s26, 1
          %s750 = scalar_lea.vmem %s7, %s749
        $region68: #{patchy_vae_forward.8} parent=55 // pred_fallthru
          _
      $region56: #{patchy_vae_forward.8} parent=5 // pred_fallthru
        _
    $region6: #{patchy_vae_forward.8} parent=1 // loop_footer
      %s24 = sadd.s32 1, %s20
    $region7: #{patchy_vae_forward.8} parent=1 // loop_footer_branch
      %19 = sbr.rel target = $region3
    $region8: #{patchy_vae_forward.8} parent=1 // loop_exit
      _
    %751 = vsyncpa [#allocation3], 1
    %s752 = scalar_lea.sflag [#allocation3], 1
    %753 = vsyncpa %s752, 1
    %754 = vsyncpa [#allocation5], 1
    %s755 = scalar_lea.sflag [#allocation5], 1
    %756 = vsyncpa %s755, 1

// kernel: patchy_vae_forward.6
$region0: #{patchy_vae_forward.6}
  #allocation0 [shape = 'u32[]', space=smem, size = 0x4, offset = 0x4, fixed_abs, tag = 'smem constant byte address 0x4 - core index']
  #allocation1 [shape = 'u32[144,128]{1,0:T(1,128)}', space=vmem, size = 0x12000, scoped, tag = 'internal scratch']
  %s0 = inlined_call_operand.vmem [shape: bf16[32,64], index: 0, kind: input, shape index: {}]
  %s1 = inlined_call_operand.vmem [shape: bf16[64,128], index: 1, kind: input, shape index: {}]
  %s2 = inlined_call_operand.vmem [shape: f32[1,128], index: 2, kind: input, shape index: {}]
  %s3 = inlined_call_operand.vmem [shape: bf16[32,128], index: 3, kind: output, shape index: {}]
  %s4 = sld [smem:[#allocation0]]
  $region22: #{patchy_vae_forward.6} parent=0
    _
  %s6 = ssub.s32 1, %s4
  %s7 = scalar_select 0, %s6, %s4
  // Predicated region
  $region2: #{patchy_vae_forward.6} parent=0 // pred_check
    _
  $region3: #{patchy_vae_forward.6} parent=0 // pred_check_branch
    %9 = sbr.rel (0) target = $region5
  $region4: #{patchy_vae_forward.6} parent=0 // pred_region
    _
  $region5: #{patchy_vae_forward.6} parent=0 // pred_fallthru
    _
  // Predicated region
  $region6: #{patchy_vae_forward.6} parent=0 // pred_check
    _
  $region7: #{patchy_vae_forward.6} parent=0 // pred_check_branch
    %11 = sbr.rel (0) target = $region9
  $region8: #{patchy_vae_forward.6} parent=0 // pred_region
    _
  $region9: #{patchy_vae_forward.6} parent=0 // pred_fallthru
    _
  // Predicated region
  $region10: #{patchy_vae_forward.6} parent=0 // pred_check
    _
  $region11: #{patchy_vae_forward.6} parent=0 // pred_check_branch
    %13 = sbr.rel (0) target = $region13
  $region12: #{patchy_vae_forward.6} parent=0 // pred_region
    _
  $region13: #{patchy_vae_forward.6} parent=0 // pred_fallthru
    _
  %v15 = vld [vmem:[%s0] sm:$0xf]
  %v16 = vld [vmem:[%s0 + $0x4] sm:$0xf]
  %v17 = vld [vmem:[%s0 + $0x8] sm:$0xf]
  %v18 = vld [vmem:[%s0 + $0xc] sm:$0xf]
  %v19 = vld [vmem:[%s1] sm:$0xf]
  %v20 = vld [vmem:[%s1 + $0x4] sm:$0xf]
  %v21 = vld [vmem:[%s1 + $0x8] sm:$0xf]
  %v22 = vld [vmem:[%s1 + $0xc] sm:$0xf]
  %v23 = vld [vmem:[%s1 + $0x10] sm:$0xf]
  %v24 = vld [vmem:[%s1 + $0x14] sm:$0xf]
  %v25 = vld [vmem:[%s1 + $0x18] sm:$0xf]
  %v26 = vld [vmem:[%s1 + $0x1c] sm:$0xf]
  %v27 = vld [vmem:[%s2] sm:$0x1]
  %v29 = vlaneseq
  %v30 = vshrl.u32 %v29, 7
  %v31 = vsub.s32 0, %v30
  %v32 = vrot.slane %v27, %v31
  %v38 = vunpack.c.l.b16 %v15
  %v39 = vunpack.c.l.b16 %v16
  %v40 = vunpack.c.l.b16 %v17
  %v41 = vunpack.c.l.b16 %v18
  %v42 = vpack.c.b16 %v39, %v38
  %v43 = vpack.c.b16 %v41, %v40
  %v52 = vunpack.c.l.b16 %v19
  %v53 = vunpack.c.l.b16 %v20
  %v54 = vunpack.c.l.b16 %v21
  %v55 = vunpack.c.l.b16 %v22
  %v56 = vunpack.c.l.b16 %v23
  %v57 = vunpack.c.l.b16 %v24
  %v58 = vunpack.c.l.b16 %v25
  %v59 = vunpack.c.l.b16 %v26
  %v60 = vpack.c.b16 %v53, %v52
  %v61 = vpack.c.b16 %v55, %v54
  %v62 = vpack.c.b16 %v57, %v56
  %v63 = vpack.c.b16 %v59, %v58
  %vm68 = vcmask 523264
  %v70 = vsel %vm68, %v42, 0
  %v73 = vsel %vm68, %v43, 0
  %75 = vmatprep.subr.bf16.mxu0 0
  %76 = vmatpush1.bf16.msra.mxu0 0
  %77 = vmatprep.subr.bf16.mxu0 0
  %78 = vmatpush1.bf16.msra.mxu0 0
  %79 = vmatprep.subr.bf16.mxu0 0
  %80 = vmatpush1.bf16.msra.mxu0 0
  %81 = vmatprep.subr.bf16.mxu0 0
  %82 = vmatpush1.bf16.msra.mxu0 0
  %83 = vmatprep.subr.bf16.mxu0 0
  %84 = vmatpush1.bf16.msra.mxu0 %v63
  %85 = vmatprep.subr.bf16.mxu0 0
  %86 = vmatpush1.bf16.msra.mxu0 %v62
  %87 = vmatprep.subr.bf16.mxu0 0
  %88 = vmatpush1.bf16.msra.mxu0 %v61
  %89 = vmatprep.subr.bf16.mxu0 0
  %90 = vmatpush1.bf16.msra.mxu0 %v60
  %91 = vmatprep.subr.bf16.mxu0 0
  %92 = vmatpush2.bf16.msra.mxu0 0
  %93 = vmatprep.subr.bf16.mxu0 0
  %94 = vmatpush2.bf16.msra.mxu0 0
  %95 = vmatprep.subr.bf16.mxu0 0
  %96 = vmatpush2.bf16.msra.mxu0 0
  %97 = vmatprep.subr.bf16.mxu0 0
  %98 = vmatpush2.bf16.msra.mxu0 0
  %99 = vmatprep.subr.bf16.mxu0 0
  %100 = vmatpush2.bf16.msra.mxu0 0
  %101 = vmatprep.subr.bf16.mxu0 0
  %102 = vmatpush2.bf16.msra.mxu0 0
  %103 = vmatprep.subr.bf16.mxu0 0
  %104 = vmatpush2.bf16.msra.mxu0 0
  %105 = vmatprep.subr.bf16.mxu0 0
  %106 = vmatpush2.bf16.msra.mxu0 0
  %107 = vmatprep.mubr.bf16.mxu0 0
  %108 = vmatmul.mubr.bf16.gmra.mxu0 %v70
  %v109 = vpop.f32.mrf.mxu0
  %v110 = vadd.f32 %v32, %v109
  %v111 = vpop.f32.mrf.mxu0
  %v112 = vpop.f32.mrf.mxu0
  %v113 = vadd.f32 %v32, %v112
  %v114 = vpop.f32.mrf.mxu0
  %115 = vmatprep.mubr.bf16.mxu0 0
  %116 = vmatmul.mubr.bf16.gmra.mxu0 %v73
  %v117 = vpop.f32.mrf.mxu0
  %v118 = vadd.f32 %v32, %v117
  %v119 = vpop.f32.mrf.mxu0
  %v120 = vpop.f32.mrf.mxu0
  %v121 = vadd.f32 %v32, %v120
  %v122 = vpop.f32.mrf.mxu0
  %123 = vdwg.mxu0
  %v124 = vmax.f32 %v110, 0.0
  %v125 = vmax.f32 %v113, 0.0
  %v126 = vmax.f32 %v118, 0.0
  %v127 = vmax.f32 %v121, 0.0
  %v128 = vpack.c.bf16 %v125, %v124
  %v129 = vpack.c.bf16 %v127, %v126
  %v132 = vunpack.c.l.b16 %v128
  %v133 = vunpack.c.h.b16 %v128
  %v134 = vunpack.c.l.b16 %v129
  %v135 = vunpack.c.h.b16 %v129
  %v136 = vpack.c.b16 %v132, %v132
  %v137 = vpack.c.b16 %v133, %v133
  %v138 = vpack.c.b16 %v134, %v134
  %v139 = vpack.c.b16 %v135, %v135
  %144 = vst [vmem:[%s3] sm:$0xf] %v136
  %145 = vst [vmem:[%s3 + $0x4] sm:$0xf] %v137
  %146 = vst [vmem:[%s3 + $0x8] sm:$0xf] %v138
  %147 = vst [vmem:[%s3 + $0xc] sm:$0xf] %v139
  // Predicated region
  $region14: #{patchy_vae_forward.6} parent=0 // pred_check
    _
  $region15: #{patchy_vae_forward.6} parent=0 // pred_check_branch
    %149 = sbr.rel (0) target = $region17
  $region16: #{patchy_vae_forward.6} parent=0 // pred_region
    _
  $region17: #{patchy_vae_forward.6} parent=0 // pred_fallthru
    _
  // Predicated region
  $region18: #{patchy_vae_forward.6} parent=0 // pred_check
    _
  $region19: #{patchy_vae_forward.6} parent=0 // pred_check_branch
    %151 = sbr.rel (0) target = $region21
  $region20: #{patchy_vae_forward.6} parent=0 // pred_region
    _
  $region21: #{patchy_vae_forward.6} parent=0 // pred_fallthru
    _

// kernel: patchy_vae_forward.7
$region0: #{patchy_vae_forward.7}
  #allocation0 [shape = 'u32[]', space=smem, size = 0x4, offset = 0x4, fixed_abs, tag = 'smem constant byte address 0x4 - core index']
  #allocation1 [shape = 'u32[144,128]{1,0:T(1,128)}', space=vmem, size = 0x12000, scoped, tag = 'internal scratch']
  %s0 = inlined_call_operand.vmem [shape: bf16[2,16,128], index: 0, kind: input, shape index: {}]
  %s1 = inlined_call_operand.vmem [shape: bf16[9,16,16], index: 1, kind: input, shape index: {}]
  %s2 = inlined_call_operand.vmem [shape: bf16[9,128,128], index: 2, kind: input, shape index: {}]
  %s3 = inlined_call_operand.vmem [shape: f32[1,128], index: 3, kind: input, shape index: {}]
  %s4 = inlined_call_operand.vmem [shape: f32[2,16,128], index: 4, kind: input, shape index: {}]
  %s5 = inlined_call_operand.vmem [shape: f32[2,16,128], index: 5, kind: output, shape index: {}]
  %s6 = sld [smem:[#allocation0]]
  $region53: #{patchy_vae_forward.7} parent=0
    _
  %s8 = ssub.s32 1, %s6
  %s9 = scalar_select 0, %s8, %s6
  loop: start=0, step=1, limit=4
  $region2: #{patchy_vae_forward.7} parent=0 // loop_pre_header
    _
  $region3: #{patchy_vae_forward.7} parent=0 // loop_header
    %s11 = sphi 0, %s15
    %p12 = scmp.ge.s32.totalorder %s11, 4
    %s21 = sphi 0, %s23
    %s24 = sphi 0, %s21
    %s25 = sphi 0, %s24
    %s41 = sphi 0, %s25
    %s45 = sphi 0, %s45
    %s47 = sphi 0, %s45
    %s48 = sphi 0, %s47
    %s62 = sphi 0, %s48
    %s66 = sphi 0, %s66
    %s68 = sphi 0, %s66
    %s69 = sphi 0, %s68
    %s83 = sphi 0, %s69
    %s87 = sphi 0, %s87
    %s89 = sphi 0, %s87
    %s90 = sphi 0, %s89
    %s104 = sphi 0, %s90
    %s110 = sphi 0, %s112
    %s113 = sphi 0, %s110
    %s114 = sphi 0, %s113
    %s130 = sphi 0, %s114
    %s136 = sphi 0, %s138
    %s139 = sphi 0, %s136
    %s140 = sphi 0, %s139
    %s156 = sphi 0, %s140
  $region4: #{patchy_vae_forward.7} parent=0 // loop_header_branch
    %14 = sbr.rel (%p12) target = $region8
  $region5: #{patchy_vae_forward.7} parent=0 // loop_body
    %s16 = ssub.s32 %s11, 1
    %s17 = ssub.s32 %s11, 2
    %s18 = sadd.s32 %s11, 1
    %s19 = ssub.s32 %s11, %s18
    %p20 = scmp.eq.s32.totalorder %s19, 0
    %s22 = sadd.s32 %s21, 1
    %s23 = scalar_select %p20, %s21, %s22
    %p26 = pneg %p20
    %p27 = scmp.eq.s32.totalorder %s11, 1
    %p28 = por %p26, %p27
    %p29 = scmp.ne.s32.totalorder %s21, %s24
    %p30 = scmp.eq.s32.totalorder %s11, 0
    %p31 = por %p29, %p30
    %p32 = scmp.ne.s32.totalorder %s21, %s24
    %p33 = scmp.eq.s32.totalorder %s16, 1
    %p34 = por %p32, %p33
    %p35 = scmp.ne.s32.totalorder %s24, %s25
    %p36 = scmp.eq.s32.totalorder %s16, 0
    %p37 = por %p35, %p36
    %p38 = scmp.ne.s32.totalorder %s24, %s25
    %p39 = scmp.eq.s32.totalorder %s17, 1
    %p40 = por %p38, %p39
    %p42 = scmp.ne.s32.totalorder %s25, %s41
    %p43 = scmp.eq.s32.totalorder %s17, 0
    %p44 = por %p42, %p43
    %s46 = sadd.s32 %s45, 1
    %p49 = scmp.eq.s32.totalorder %s11, 1
    %p50 = scmp.ne.s32.totalorder %s45, %s47
    %p51 = scmp.eq.s32.totalorder %s11, 0
    %p52 = por %p50, %p51
    %p53 = scmp.ne.s32.totalorder %s45, %s47
    %p54 = scmp.eq.s32.totalorder %s16, 1
    %p55 = por %p53, %p54
    %p56 = scmp.ne.s32.totalorder %s47, %s48
    %p57 = scmp.eq.s32.totalorder %s16, 0
    %p58 = por %p56, %p57
    %p59 = scmp.ne.s32.totalorder %s47, %s48
    %p60 = scmp.eq.s32.totalorder %s17, 1
    %p61 = por %p59, %p60
    %p63 = scmp.ne.s32.totalorder %s48, %s62
    %p64 = scmp.eq.s32.totalorder %s17, 0
    %p65 = por %p63, %p64
    %s67 = sadd.s32 %s66, 1
    %p70 = scmp.eq.s32.totalorder %s11, 1
    %p71 = scmp.ne.s32.totalorder %s66, %s68
    %p72 = scmp.eq.s32.totalorder %s11, 0
    %p73 = por %p71, %p72
    %p74 = scmp.ne.s32.totalorder %s66, %s68
    %p75 = scmp.eq.s32.totalorder %s16, 1
    %p76 = por %p74, %p75
    %p77 = scmp.ne.s32.totalorder %s68, %s69
    %p78 = scmp.eq.s32.totalorder %s16, 0
    %p79 = por %p77, %p78
    %p80 = scmp.ne.s32.totalorder %s68, %s69
    %p81 = scmp.eq.s32.totalorder %s17, 1
    %p82 = por %p80, %p81
    %p84 = scmp.ne.s32.totalorder %s69, %s83
    %p85 = scmp.eq.s32.totalorder %s17, 0
    %p86 = por %p84, %p85
    %s88 = sadd.s32 %s87, 1
    %p91 = scmp.eq.s32.totalorder %s11, 1
    %p92 = scmp.ne.s32.totalorder %s87, %s89
    %p93 = scmp.eq.s32.totalorder %s11, 0
    %p94 = por %p92, %p93
    %p95 = scmp.ne.s32.totalorder %s87, %s89
    %p96 = scmp.eq.s32.totalorder %s16, 1
    %p97 = por %p95, %p96
    %p98 = scmp.ne.s32.totalorder %s89, %s90
    %p99 = scmp.eq.s32.totalorder %s16, 0
    %p100 = por %p98, %p99
    %p101 = scmp.ne.s32.totalorder %s89, %s90
    %p102 = scmp.eq.s32.totalorder %s17, 1
    %p103 = por %p101, %p102
    %p105 = scmp.ne.s32.totalorder %s90, %s104
    %p106 = scmp.eq.s32.totalorder %s17, 0
    %p107 = por %p105, %p106
    %s108 = ssub.s32 %s11, %s18
    %p109 = scmp.eq.s32.totalorder %s108, 0
    %s111 = sadd.s32 %s110, 1
    %s112 = scalar_select %p109, %s110, %s111
    %p115 = pneg %p109
    %p116 = scmp.eq.s32.totalorder %s11, 1
    %p117 = por %p115, %p116
    %p118 = scmp.ne.s32.totalorder %s110, %s113
    %p119 = scmp.eq.s32.totalorder %s11, 0
    %p120 = por %p118, %p119
    %p121 = scmp.ne.s32.totalorder %s110, %s113
    %p122 = scmp.eq.s32.totalorder %s16, 1
    %p123 = por %p121, %p122
    %p124 = scmp.ne.s32.totalorder %s113, %s114
    %p125 = scmp.eq.s32.totalorder %s16, 0
    %p126 = por %p124, %p125
    %p127 = scmp.ne.s32.totalorder %s113, %s114
    %p128 = scmp.eq.s32.totalorder %s17, 1
    %p129 = por %p127, %p128
    %p131 = scmp.ne.s32.totalorder %s114, %s130
    %p132 = scmp.eq.s32.totalorder %s17, 0
    %p133 = por %p131, %p132
    %s134 = ssub.s32 %s11, %s18
    %p135 = scmp.eq.s32.totalorder %s134, 0
    %s137 = sadd.s32 %s136, 1
    %s138 = scalar_select %p135, %s136, %s137
    %p141 = pneg %p135
    %p142 = scmp.eq.s32.totalorder %s11, 1
    %p143 = por %p141, %p142
    %p144 = scmp.ne.s32.totalorder %s136, %s139
    %p145 = scmp.eq.s32.totalorder %s11, 0
    %p146 = por %p144, %p145
    %p147 = scmp.ne.s32.totalorder %s136, %s139
    %p148 = scmp.eq.s32.totalorder %s16, 1
    %p149 = por %p147, %p148
    %p150 = scmp.ne.s32.totalorder %s139, %s140
    %p151 = scmp.eq.s32.totalorder %s16, 0
    %p152 = por %p150, %p151
    %p153 = scmp.ne.s32.totalorder %s139, %s140
    %p154 = scmp.eq.s32.totalorder %s17, 1
    %p155 = por %p153, %p154
    %p157 = scmp.ne.s32.totalorder %s140, %s156
    %p158 = scmp.eq.s32.totalorder %s17, 0
    %p159 = por %p157, %p158
    %p160 = scmp.le.s32.totalorder 1, %s11
    %p161 = scmp.lt.s32.totalorder %s11, 3
    %p162 = pnand %p160, %p161
    %p163 = pneg %p162
    // Predicated region
    $region9: #{patchy_vae_forward.7} parent=5 // pred_check
      _
    $region10: #{patchy_vae_forward.7} parent=5 // pred_check_branch
      %165 = sbr.rel (%p162) target = $region12
    $region11: #{patchy_vae_forward.7} parent=5 // pred_region
      %s166 = ssub.s32 %s11, 1
      // Predicated region
      $region13: #{patchy_vae_forward.7} parent=11 // pred_check
        %p167 = pneg %p58
      $region14: #{patchy_vae_forward.7} parent=11 // pred_check_branch
        %169 = sbr.rel (%p167) target = $region16
      $region15: #{patchy_vae_forward.7} parent=11 // pred_region
        _
      $region16: #{patchy_vae_forward.7} parent=11 // pred_fallthru
        _
      // Predicated region
      $region17: #{patchy_vae_forward.7} parent=11 // pred_check
        %p170 = pneg %p79
      $region18: #{patchy_vae_forward.7} parent=11 // pred_check_branch
        %172 = sbr.rel (%p170) target = $region20
      $region19: #{patchy_vae_forward.7} parent=11 // pred_region
        _
      $region20: #{patchy_vae_forward.7} parent=11 // pred_fallthru
        _
      // Predicated region
      $region21: #{patchy_vae_forward.7} parent=11 // pred_check
        %p173 = pneg %p100
      $region22: #{patchy_vae_forward.7} parent=11 // pred_check_branch
        %175 = sbr.rel (%p173) target = $region24
      $region23: #{patchy_vae_forward.7} parent=11 // pred_region
        _
      $region24: #{patchy_vae_forward.7} parent=11 // pred_fallthru
        _
    $region12: #{patchy_vae_forward.7} parent=5 // pred_fallthru
      _
    %p176 = scmp.lt.s32.totalorder %s11, 2
    // Predicated region
    $region25: #{patchy_vae_forward.7} parent=5 // pred_check
      %p177 = pneg %p176
    $region26: #{patchy_vae_forward.7} parent=5 // pred_check_branch
      %179 = sbr.rel (%p177) target = $region28
    $region27: #{patchy_vae_forward.7} parent=5 // pred_region
      // Predicated region
      $region29: #{patchy_vae_forward.7} parent=27 // pred_check
        %p180 = pneg %p31
      $region30: #{patchy_vae_forward.7} parent=27 // pred_check_branch
        %182 = sbr.rel (%p180) target = $region32
      $region31: #{patchy_vae_forward.7} parent=27 // pred_region
        %p183 = scmp.lt.s32.totalorder %s11, 1
        %s184 = scalar_select %p183, %s11, 1
        %s185 = smul.addr %s184, 2
        %s186 = smul.addr %s185, 4
        %s187 = scalar_lea.vmem %s0, %s186
      $region32: #{patchy_vae_forward.7} parent=27 // pred_fallthru
        _
      // Predicated region
      $region33: #{patchy_vae_forward.7} parent=27 // pred_check
        %p188 = pneg %p120
      $region34: #{patchy_vae_forward.7} parent=27 // pred_check_branch
        %190 = sbr.rel (%p188) target = $region36
      $region35: #{patchy_vae_forward.7} parent=27 // pred_region
        %p191 = scmp.lt.s32.totalorder %s11, 1
        %s192 = scalar_select %p191, %s11, 1
        %s193 = smul.addr %s192, 2
        %s194 = smul.addr %s193, 8
        %s195 = scalar_lea.vmem %s4, %s194
      $region36: #{patchy_vae_forward.7} parent=27 // pred_fallthru
        _
    $region28: #{patchy_vae_forward.7} parent=5 // pred_fallthru
      _
    %p196 = scmp.le.s32.totalorder 1, %s11
    %p197 = scmp.lt.s32.totalorder %s11, 3
    %p198 = pnand %p196, %p197
    %p199 = pneg %p198
    // Predicated region
    $region37: #{patchy_vae_forward.7} parent=5 // pred_check
      _
    $region38: #{patchy_vae_forward.7} parent=5 // pred_check_branch
      %201 = sbr.rel (%p198) target = $region40
    $region39: #{patchy_vae_forward.7} parent=5 // pred_region
      %s202 = ssub.s32 %s11, 1
      %p203 = scmp.lt.s32.totalorder %s16, 1
      %s204 = scalar_select %p203, %s16, 1
      %s205 = smul.addr %s204, 2
      %s206 = smul.addr %s205, 4
      %s207 = scalar_lea.vmem %s0, %s206
      %p208 = pneg %p37
      %p209 = pneg %p34
      %p210 = pneg %p58
      %p211 = pneg %p55
      %p212 = pneg %p79
      %p213 = pneg %p76
      %p214 = pneg %p100
      %p215 = pneg %p97
      %p216 = scmp.lt.s32.totalorder %s16, 1
      %s217 = scalar_select %p216, %s16, 1
      %s218 = smul.addr %s217, 2
      %s219 = smul.addr %s218, 8
      %s220 = scalar_lea.vmem %s4, %s219
      %p221 = pneg %p126
      %p222 = pneg %p123
      %p223 = pneg %p152
      %p224 = pneg %p149
      %p225 = scmp.lt.s32.totalorder %s16, 1
      %s226 = scalar_select %p225, %s16, 1
      %s227 = smul.addr %s226, 2
      %s228 = smul.addr %s227, 8
      %s229 = scalar_lea.vmem %s5, %s228
      %p230 = scmp.lt.s32.totalorder %s16, 1
      %s231 = scalar_select %p230, %s16, 1
      %s232 = smul.addr %s231, 2
      %s233 = smul.addr %s232, 4
      %s234 = scalar_lea.vmem %s0, %s233
      %p235 = scmp.lt.s32.totalorder %s16, 1
      %s236 = scalar_select %p235, %s16, 1
      %s237 = smul.addr %s236, 2
      %s238 = smul.addr %s237, 8
      %s239 = scalar_lea.vmem %s4, %s238
      %p240 = scmp.lt.s32.totalorder %s16, 1
      %s241 = scalar_select %p240, %s16, 1
      %s242 = smul.addr %s241, 2
      %s243 = smul.addr %s242, 8
      %s244 = scalar_lea.vmem %s5, %s243
      %v246 = vld [vmem:[%s234] sm:$0xf]
      %v247 = vld [vmem:[%s234 + $0x4] sm:$0xf]
      %v248 = vld [vmem:[%s1] sm:$0xf]
      %v249 = vld [vmem:[%s1 + $0x4] sm:$0xf]
      %v252 = vunpack.c.l.b16 %v248
      %v253 = vunpack.c.l.b16 %v249
      %v254 = vpack.c.b16 %v253, %v252
      %v257 = vunpack.c.l.b16 %v246
      %v258 = vunpack.c.l.b16 %v247
      %v259 = vpack.c.b16 %v258, %v257
      %vm261 = vcmask 130048
      %v263 = vsel %vm261, %v254, 0
      %265 = vmatprep.subr.bf16.mxu0 0
      %266 = vmatpush1.bf16.msra.mxu0 0
      %267 = vmatprep.subr.bf16.mxu0 0
      %268 = vmatpush1.bf16.msra.mxu0 0
      %269 = vmatprep.subr.bf16.mxu0 0
      %270 = vmatpush1.bf16.msra.mxu0 0
      %271 = vmatprep.subr.bf16.mxu0 0
      %272 = vmatpush1.bf16.msra.mxu0 0
      %273 = vmatprep.subr.bf16.mxu0 0
      %274 = vmatpush1.bf16.msra.mxu0 0
      %275 = vmatprep.subr.bf16.mxu0 0
      %276 = vmatpush1.bf16.msra.mxu0 0
      %277 = vmatprep.subr.bf16.mxu0 0
      %278 = vmatpush1.bf16.msra.mxu0 0
      %279 = vmatprep.subr.bf16.mxu0 0
      %280 = vmatpush1.bf16.msra.mxu0 %v259
      %281 = vmatprep.subr.bf16.mxu0 0
      %282 = vmatpush2.bf16.msra.mxu0 0
      %283 = vmatprep.subr.bf16.mxu0 0
      %284 = vmatpush2.bf16.msra.mxu0 0
      %285 = vmatprep.subr.bf16.mxu0 0
      %286 = vmatpush2.bf16.msra.mxu0 0
      %287 = vmatprep.subr.bf16.mxu0 0
      %288 = vmatpush2.bf16.msra.mxu0 0
      %289 = vmatprep.subr.bf16.mxu0 0
      %290 = vmatpush2.bf16.msra.mxu0 0
      %291 = vmatprep.subr.bf16.mxu0 0
      %292 = vmatpush2.bf16.msra.mxu0 0
      %293 = vmatprep.subr.bf16.mxu0 0
      %294 = vmatpush2.bf16.msra.mxu0 0
      %295 = vmatprep.subr.bf16.mxu0 0
      %296 = vmatpush2.bf16.msra.mxu0 0
      %297 = vmatprep.mubr.bf16.mxu0 0
      %298 = vmatmul.mubr.bf16.gmra.mxu0 %v263
      %v299 = vpop.f32.mrf.mxu0
      %v300 = vadd.f32 0.0, %v299
      %v301 = vpop.f32.mrf.mxu0
      %v302 = vpop.f32.mrf.mxu0
      %v303 = vadd.f32 0.0, %v302
      %v304 = vpop.f32.mrf.mxu0
      %305 = vdwg.mxu0
      %v306 = vpack.c.bf16 %v303, %v300
      %v307 = vld [vmem:[%s2] sm:$0xf]
      %v308 = vld [vmem:[%s2 + $0x4] sm:$0xf]
      %v309 = vld [vmem:[%s2 + $0x8] sm:$0xf]
      %v310 = vld [vmem:[%s2 + $0xc] sm:$0xf]
      %v311 = vld [vmem:[%s2 + $0x10] sm:$0xf]
      %v312 = vld [vmem:[%s2 + $0x14] sm:$0xf]
      %v313 = vld [vmem:[%s2 + $0x18] sm:$0xf]
      %v314 = vld [vmem:[%s2 + $0x1c] sm:$0xf]
      %v315 = vld [vmem:[%s2 + $0x20] sm:$0xf]
      %v316 = vld [vmem:[%s2 + $0x24] sm:$0xf]
      %v317 = vld [vmem:[%s2 + $0x28] sm:$0xf]
      %v318 = vld [vmem:[%s2 + $0x2c] sm:$0xf]
      %v319 = vld [vmem:[%s2 + $0x30] sm:$0xf]
      %v320 = vld [vmem:[%s2 + $0x34] sm:$0xf]
      %v321 = vld [vmem:[%s2 + $0x38] sm:$0xf]
      %v322 = vld [vmem:[%s2 + $0x3c] sm:$0xf]
      %s323 = scalar_lea.vmem %s1, 8
      %v324 = vld [vmem:[%s323] sm:$0xf]
      %v325 = vld [vmem:[%s323 + $0x4] sm:$0xf]
      %v328 = vunpack.c.l.b16 %v324
      %v329 = vunpack.c.l.b16 %v325
      %v330 = vpack.c.b16 %v329, %v328
      %v332 = vsel %vm261, %v330, 0
      %334 = vmatprep.subr.bf16.mxu0 0
      %335 = vmatpush1.bf16.msra.mxu0 0
      %336 = vmatprep.subr.bf16.mxu0 0
      %337 = vmatpush1.bf16.msra.mxu0 0
      %338 = vmatprep.subr.bf16.mxu0 0
      %339 = vmatpush1.bf16.msra.mxu0 0
      %340 = vmatprep.subr.bf16.mxu0 0
      %341 = vmatpush1.bf16.msra.mxu0 0
      %342 = vmatprep.subr.bf16.mxu0 0
      %343 = vmatpush1.bf16.msra.mxu0 0
      %344 = vmatprep.subr.bf16.mxu0 0
      %345 = vmatpush1.bf16.msra.mxu0 0
      %346 = vmatprep.subr.bf16.mxu0 0
      %347 = vmatpush1.bf16.msra.mxu0 0
      %348 = vmatprep.subr.bf16.mxu0 0
      %349 = vmatpush1.bf16.msra.mxu0 %v259
      %350 = vmatprep.subr.bf16.mxu0 0
      %351 = vmatpush2.bf16.msra.mxu0 0
      %352 = vmatprep.subr.bf16.mxu0 0
      %353 = vmatpush2.bf16.msra.mxu0 0
      %354 = vmatprep.subr.bf16.mxu0 0
      %355 = vmatpush2.bf16.msra.mxu0 0
      %356 = vmatprep.subr.bf16.mxu0 0
      %357 = vmatpush2.bf16.msra.mxu0 0
      %358 = vmatprep.subr.bf16.mxu0 0
      %359 = vmatpush2.bf16.msra.mxu0 0
      %360 = vmatprep.subr.bf16.mxu0 0
      %361 = vmatpush2.bf16.msra.mxu0 0
      %362 = vmatprep.subr.bf16.mxu0 0
      %363 = vmatpush2.bf16.msra.mxu0 0
      %364 = vmatprep.subr.bf16.mxu0 0
      %365 = vmatpush2.bf16.msra.mxu0 0
      %366 = vmatprep.mubr.bf16.mxu0 0
      %367 = vmatmul.mubr.bf16.gmra.mxu0 %v332
      %v368 = vpop.f32.mrf.mxu0
      %v369 = vadd.f32 0.0, %v368
      %v370 = vpop.f32.mrf.mxu0
      %v371 = vpop.f32.mrf.mxu0
      %v372 = vadd.f32 0.0, %v371
      %v373 = vpop.f32.mrf.mxu0
      %374 = vdwg.mxu0
      %v375 = vpack.c.bf16 %v372, %v369
      %s376 = scalar_lea.vmem %s2, 64
      %v377 = vld [vmem:[%s376] sm:$0xf]
      %v378 = vld [vmem:[%s376 + $0x4] sm:$0xf]
      %v379 = vld [vmem:[%s376 + $0x8] sm:$0xf]
      %v380 = vld [vmem:[%s376 + $0xc] sm:$0xf]
      %v381 = vld [vmem:[%s376 + $0x10] sm:$0xf]
      %v382 = vld [vmem:[%s376 + $0x14] sm:$0xf]
      %v383 = vld [vmem:[%s376 + $0x18] sm:$0xf]
      %v384 = vld [vmem:[%s376 + $0x1c] sm:$0xf]
      %v385 = vld [vmem:[%s376 + $0x20] sm:$0xf]
      %v386 = vld [vmem:[%s376 + $0x24] sm:$0xf]
      %v387 = vld [vmem:[%s376 + $0x28] sm:$0xf]
      %v388 = vld [vmem:[%s376 + $0x2c] sm:$0xf]
      %v389 = vld [vmem:[%s376 + $0x30] sm:$0xf]
      %v390 = vld [vmem:[%s376 + $0x34] sm:$0xf]
      %v391 = vld [vmem:[%s376 + $0x38] sm:$0xf]
      %v392 = vld [vmem:[%s376 + $0x3c] sm:$0xf]
      %v409 = vunpack.c.l.b16 %v377
      %v410 = vunpack.c.l.b16 %v378
      %v411 = vunpack.c.l.b16 %v379
      %v412 = vunpack.c.l.b16 %v380
      %v413 = vunpack.c.l.b16 %v381
      %v414 = vunpack.c.l.b16 %v382
      %v415 = vunpack.c.l.b16 %v383
      %v416 = vunpack.c.l.b16 %v384
      %v417 = vunpack.c.l.b16 %v385
      %v418 = vunpack.c.l.b16 %v386
      %v419 = vunpack.c.l.b16 %v387
      %v420 = vunpack.c.l.b16 %v388
      %v421 = vunpack.c.l.b16 %v389
      %v422 = vunpack.c.l.b16 %v390
      %v423 = vunpack.c.l.b16 %v391
      %v424 = vunpack.c.l.b16 %v392
      %v425 = vpack.c.b16 %v410, %v409
      %v426 = vpack.c.b16 %v412, %v411
      %v427 = vpack.c.b16 %v414, %v413
      %v428 = vpack.c.b16 %v416, %v415
      %v429 = vpack.c.b16 %v418, %v417
      %v430 = vpack.c.b16 %v420, %v419
      %v431 = vpack.c.b16 %v422, %v421
      %v432 = vpack.c.b16 %v424, %v423
      %441 = vmatprep.subr.bf16.mxu0 0
      %442 = vmatpush1.bf16.msra.mxu0 %v432
      %443 = vmatprep.subr.bf16.mxu0 0
      %444 = vmatpush1.bf16.msra.mxu0 %v431
      %445 = vmatprep.subr.bf16.mxu0 0
      %446 = vmatpush1.bf16.msra.mxu0 %v430
      %447 = vmatprep.subr.bf16.mxu0 0
      %448 = vmatpush1.bf16.msra.mxu0 %v429
      %449 = vmatprep.subr.bf16.mxu0 0
      %450 = vmatpush1.bf16.msra.mxu0 %v428
      %451 = vmatprep.subr.bf16.mxu0 0
      %452 = vmatpush1.bf16.msra.mxu0 %v427
      %453 = vmatprep.subr.bf16.mxu0 0
      %454 = vmatpush1.bf16.msra.mxu0 %v426
      %455 = vmatprep.subr.bf16.mxu0 0
      %456 = vmatpush1.bf16.msra.mxu0 %v425
      %457 = vmatprep.subr.bf16.mxu0 0
      %458 = vmatpush2.bf16.msra.mxu0 0
      %459 = vmatprep.subr.bf16.mxu0 0
      %460 = vmatpush2.bf16.msra.mxu0 0
      %461 = vmatprep.subr.bf16.mxu0 0
      %462 = vmatpush2.bf16.msra.mxu0 0
      %463 = vmatprep.subr.bf16.mxu0 0
      %464 = vmatpush2.bf16.msra.mxu0 0
      %465 = vmatprep.subr.bf16.mxu0 0
      %466 = vmatpush2.bf16.msra.mxu0 0
      %467 = vmatprep.subr.bf16.mxu0 0
      %468 = vmatpush2.bf16.msra.mxu0 0
      %469 = vmatprep.subr.bf16.mxu0 0
      %470 = vmatpush2.bf16.msra.mxu0 0
      %471 = vmatprep.subr.bf16.mxu0 0
      %472 = vmatpush2.bf16.msra.mxu0 0
      %473 = vmatprep.mubr.bf16.mxu0 0
      %474 = vmatmul.mubr.bf16.gmra.mxu0 %v375
      %v475 = vpop.f32.mrf.mxu0
      %v476 = vadd.f32 0.0, %v475
      %v477 = vpop.f32.mrf.mxu0
      %v478 = vpop.f32.mrf.mxu0
      %v479 = vadd.f32 0.0, %v478
      %v480 = vpop.f32.mrf.mxu0
      %481 = vdwg.mxu0
      %v498 = vunpack.c.l.b16 %v307
      %v499 = vunpack.c.l.b16 %v308
      %v500 = vunpack.c.l.b16 %v309
      %v501 = vunpack.c.l.b16 %v310
      %v502 = vunpack.c.l.b16 %v311
      %v503 = vunpack.c.l.b16 %v312
      %v504 = vunpack.c.l.b16 %v313
      %v505 = vunpack.c.l.b16 %v314
      %v506 = vunpack.c.l.b16 %v315
      %v507 = vunpack.c.l.b16 %v316
      %v508 = vunpack.c.l.b16 %v317
      %v509 = vunpack.c.l.b16 %v318
      %v510 = vunpack.c.l.b16 %v319
      %v511 = vunpack.c.l.b16 %v320
      %v512 = vunpack.c.l.b16 %v321
      %v513 = vunpack.c.l.b16 %v322
      %v514 = vpack.c.b16 %v499, %v498
      %v515 = vpack.c.b16 %v501, %v500
      %v516 = vpack.c.b16 %v503, %v502
      %v517 = vpack.c.b16 %v505, %v504
      %v518 = vpack.c.b16 %v507, %v506
      %v519 = vpack.c.b16 %v509, %v508
      %v520 = vpack.c.b16 %v511, %v510
      %v521 = vpack.c.b16 %v513, %v512
      %530 = vmatprep.subr.bf16.mxu0 0
      %531 = vmatpush1.bf16.msra.mxu0 %v521
      %532 = vmatprep.subr.bf16.mxu0 0
      %533 = vmatpush1.bf16.msra.mxu0 %v520
      %534 = vmatprep.subr.bf16.mxu0 0
      %535 = vmatpush1.bf16.msra.mxu0 %v519
      %536 = vmatprep.subr.bf16.mxu0 0
      %537 = vmatpush1.bf16.msra.mxu0 %v518
      %538 = vmatprep.subr.bf16.mxu0 0
      %539 = vmatpush1.bf16.msra.mxu0 %v517
      %540 = vmatprep.subr.bf16.mxu0 0
      %541 = vmatpush1.bf16.msra.mxu0 %v516
      %542 = vmatprep.subr.bf16.mxu0 0
      %543 = vmatpush1.bf16.msra.mxu0 %v515
      %544 = vmatprep.subr.bf16.mxu0 0
      %545 = vmatpush1.bf16.msra.mxu0 %v514
      %546 = vmatprep.subr.bf16.mxu0 0
      %547 = vmatpush2.bf16.msra.mxu0 0
      %548 = vmatprep.subr.bf16.mxu0 0
      %549 = vmatpush2.bf16.msra.mxu0 0
      %550 = vmatprep.subr.bf16.mxu0 0
      %551 = vmatpush2.bf16.msra.mxu0 0
      %552 = vmatprep.subr.bf16.mxu0 0
      %553 = vmatpush2.bf16.msra.mxu0 0
      %554 = vmatprep.subr.bf16.mxu0 0
      %555 = vmatpush2.bf16.msra.mxu0 0
      %556 = vmatprep.subr.bf16.mxu0 0
      %557 = vmatpush2.bf16.msra.mxu0 0
      %558 = vmatprep.subr.bf16.mxu0 0
      %559 = vmatpush2.bf16.msra.mxu0 0
      %560 = vmatprep.subr.bf16.mxu0 0
      %561 = vmatpush2.bf16.msra.mxu0 0
      %562 = vmatprep.mubr.bf16.mxu0 0
      %563 = vmatmul.mubr.bf16.gmra.mxu0 %v306
      %v564 = vpop.f32.mrf.mxu0
      %v565 = vadd.f32 %v476, %v564
      %v566 = vpop.f32.mrf.mxu0
      %v567 = vpop.f32.mrf.mxu0
      %v568 = vadd.f32 %v479, %v567
      %v569 = vpop.f32.mrf.mxu0
      %570 = vdwg.mxu0
      %s571 = scalar_lea.vmem %s1, 16
      %v572 = vld [vmem:[%s571] sm:$0xf]
      %v573 = vld [vmem:[%s571 + $0x4] sm:$0xf]
      %v576 = vunpack.c.l.b16 %v572
      %v577 = vunpack.c.l.b16 %v573
      %v578 = vpack.c.b16 %v577, %v576
      %v580 = vsel %vm261, %v578, 0
      %582 = vmatprep.subr.bf16.mxu0 0
      %583 = vmatpush1.bf16.msra.mxu0 0
      %584 = vmatprep.subr.bf16.mxu0 0
      %585 = vmatpush1.bf16.msra.mxu0 0
      %586 = vmatprep.subr.bf16.mxu0 0
      %587 = vmatpush1.bf16.msra.mxu0 0
      %588 = vmatprep.subr.bf16.mxu0 0
      %589 = vmatpush1.bf16.msra.mxu0 0
      %590 = vmatprep.subr.bf16.mxu0 0
      %591 = vmatpush1.bf16.msra.mxu0 0
      %592 = vmatprep.subr.bf16.mxu0 0
      %593 = vmatpush1.bf16.msra.mxu0 0
      %594 = vmatprep.subr.bf16.mxu0 0
      %595 = vmatpush1.bf16.msra.mxu0 0
      %596 = vmatprep.subr.bf16.mxu0 0
      %597 = vmatpush1.bf16.msra.mxu0 %v259
      %598 = vmatprep.subr.bf16.mxu0 0
      %599 = vmatpush2.bf16.msra.mxu0 0
      %600 = vmatprep.subr.bf16.mxu0 0
      %601 = vmatpush2.bf16.msra.mxu0 0
      %602 = vmatprep.subr.bf16.mxu0 0
      %603 = vmatpush2.bf16.msra.mxu0 0
      %604 = vmatprep.subr.bf16.mxu0 0
      %605 = vmatpush2.bf16.msra.mxu0 0
      %606 = vmatprep.subr.bf16.mxu0 0
      %607 = vmatpush2.bf16.msra.mxu0 0
      %608 = vmatprep.subr.bf16.mxu0 0
      %609 = vmatpush2.bf16.msra.mxu0 0
      %610 = vmatprep.subr.bf16.mxu0 0
      %611 = vmatpush2.bf16.msra.mxu0 0
      %612 = vmatprep.subr.bf16.mxu0 0
      %613 = vmatpush2.bf16.msra.mxu0 0
      %614 = vmatprep.mubr.bf16.mxu0 0
      %615 = vmatmul.mubr.bf16.gmra.mxu0 %v580
      %v616 = vpop.f32.mrf.mxu0
      %v617 = vadd.f32 0.0, %v616
      %v618 = vpop.f32.mrf.mxu0
      %v619 = vpop.f32.mrf.mxu0
      %v620 = vadd.f32 0.0, %v619
      %v621 = vpop.f32.mrf.mxu0
      %622 = vdwg.mxu0
      %v623 = vpack.c.bf16 %v620, %v617
      %s624 = scalar_lea.vmem %s2, 128
      %v625 = vld [vmem:[%s624] sm:$0xf]
      %v626 = vld [vmem:[%s624 + $0x4] sm:$0xf]
      %v627 = vld [vmem:[%s624 + $0x8] sm:$0xf]
      %v628 = vld [vmem:[%s624 + $0xc] sm:$0xf]
      %v629 = vld [vmem:[%s624 + $0x10] sm:$0xf]
      %v630 = vld [vmem:[%s624 + $0x14] sm:$0xf]
      %v631 = vld [vmem:[%s624 + $0x18] sm:$0xf]
      %v632 = vld [vmem:[%s624 + $0x1c] sm:$0xf]
      %v633 = vld [vmem:[%s624 + $0x20] sm:$0xf]
      %v634 = vld [vmem:[%s624 + $0x24] sm:$0xf]
      %v635 = vld [vmem:[%s624 + $0x28] sm:$0xf]
      %v636 = vld [vmem:[%s624 + $0x2c] sm:$0xf]
      %v637 = vld [vmem:[%s624 + $0x30] sm:$0xf]
      %v638 = vld [vmem:[%s624 + $0x34] sm:$0xf]
      %v639 = vld [vmem:[%s624 + $0x38] sm:$0xf]
      %v640 = vld [vmem:[%s624 + $0x3c] sm:$0xf]
      %v657 = vunpack.c.l.b16 %v625
      %v658 = vunpack.c.l.b16 %v626
      %v659 = vunpack.c.l.b16 %v627
      %v660 = vunpack.c.l.b16 %v628
      %v661 = vunpack.c.l.b16 %v629
      %v662 = vunpack.c.l.b16 %v630
      %v663 = vunpack.c.l.b16 %v631
      %v664 = vunpack.c.l.b16 %v632
      %v665 = vunpack.c.l.b16 %v633
      %v666 = vunpack.c.l.b16 %v634
      %v667 = vunpack.c.l.b16 %v635
      %v668 = vunpack.c.l.b16 %v636
      %v669 = vunpack.c.l.b16 %v637
      %v670 = vunpack.c.l.b16 %v638
      %v671 = vunpack.c.l.b16 %v639
      %v672 = vunpack.c.l.b16 %v640
      %v673 = vpack.c.b16 %v658, %v657
      %v674 = vpack.c.b16 %v660, %v659
      %v675 = vpack.c.b16 %v662, %v661
      %v676 = vpack.c.b16 %v664, %v663
      %v677 = vpack.c.b16 %v666, %v665
      %v678 = vpack.c.b16 %v668, %v667
      %v679 = vpack.c.b16 %v670, %v669
      %v680 = vpack.c.b16 %v672, %v671
      %689 = vmatprep.subr.bf16.mxu0 0
      %690 = vmatpush1.bf16.msra.mxu0 %v680
      %691 = vmatprep.subr.bf16.mxu0 0
      %692 = vmatpush1.bf16.msra.mxu0 %v679
      %693 = vmatprep.subr.bf16.mxu0 0
      %694 = vmatpush1.bf16.msra.mxu0 %v678
      %695 = vmatprep.subr.bf16.mxu0 0
      %696 = vmatpush1.bf16.msra.mxu0 %v677
      %697 = vmatprep.subr.bf16.mxu0 0
      %698 = vmatpush1.bf16.msra.mxu0 %v676
      %699 = vmatprep.subr.bf16.mxu0 0
      %700 = vmatpush1.bf16.msra.mxu0 %v675
      %701 = vmatprep.subr.bf16.mxu0 0
      %702 = vmatpush1.bf16.msra.mxu0 %v674
      %703 = vmatprep.subr.bf16.mxu0 0
      %704 = vmatpush1.bf16.msra.mxu0 %v673
      %705 = vmatprep.subr.bf16.mxu0 0
      %706 = vmatpush2.bf16.msra.mxu0 0
      %707 = vmatprep.subr.bf16.mxu0 0
      %708 = vmatpush2.bf16.msra.mxu0 0
      %709 = vmatprep.subr.bf16.mxu0 0
      %710 = vmatpush2.bf16.msra.mxu0 0
      %711 = vmatprep.subr.bf16.mxu0 0
      %712 = vmatpush2.bf16.msra.mxu0 0
      %713 = vmatprep.subr.bf16.mxu0 0
      %714 = vmatpush2.bf16.msra.mxu0 0
      %715 = vmatprep.subr.bf16.mxu0 0
      %716 = vmatpush2.bf16.msra.mxu0 0
      %717 = vmatprep.subr.bf16.mxu0 0
      %718 = vmatpush2.bf16.msra.mxu0 0
      %719 = vmatprep.subr.bf16.mxu0 0
      %720 = vmatpush2.bf16.msra.mxu0 0
      %721 = vmatprep.mubr.bf16.mxu0 0
      %722 = vmatmul.mubr.bf16.gmra.mxu0 %v623
      %v723 = vpop.f32.mrf.mxu0
      %v724 = vadd.f32 0.0, %v723
      %v725 = vpop.f32.mrf.mxu0
      %v726 = vpop.f32.mrf.mxu0
      %v727 = vadd.f32 0.0, %v726
      %v728 = vpop.f32.mrf.mxu0
      %729 = vdwg.mxu0
      %v730 = vadd.f32 %v565, %v724
      %v731 = vadd.f32 %v568, %v727
      %s732 = scalar_lea.vmem %s1, 24
      %v733 = vld [vmem:[%s732] sm:$0xf]
      %v734 = vld [vmem:[%s732 + $0x4] sm:$0xf]
      %v737 = vunpack.c.l.b16 %v733
      %v738 = vunpack.c.l.b16 %v734
      %v739 = vpack.c.b16 %v738, %v737
      %v741 = vsel %vm261, %v739, 0
      %743 = vmatprep.subr.bf16.mxu0 0
      %744 = vmatpush1.bf16.msra.mxu0 0
      %745 = vmatprep.subr.bf16.mxu0 0
      %746 = vmatpush1.bf16.msra.mxu0 0
      %747 = vmatprep.subr.bf16.mxu0 0
      %748 = vmatpush1.bf16.msra.mxu0 0
      %749 = vmatprep.subr.bf16.mxu0 0
      %750 = vmatpush1.bf16.msra.mxu0 0
      %751 = vmatprep.subr.bf16.mxu0 0
      %752 = vmatpush1.bf16.msra.mxu0 0
      %753 = vmatprep.subr.bf16.mxu0 0
      %754 = vmatpush1.bf16.msra.mxu0 0
      %755 = vmatprep.subr.bf16.mxu0 0
      %756 = vmatpush1.bf16.msra.mxu0 0
      %757 = vmatprep.subr.bf16.mxu0 0
      %758 = vmatpush1.bf16.msra.mxu0 %v259
      %759 = vmatprep.subr.bf16.mxu0 0
      %760 = vmatpush2.bf16.msra.mxu0 0
      %761 = vmatprep.subr.bf16.mxu0 0
      %762 = vmatpush2.bf16.msra.mxu0 0
      %763 = vmatprep.subr.bf16.mxu0 0
      %764 = vmatpush2.bf16.msra.mxu0 0
      %765 = vmatprep.subr.bf16.mxu0 0
      %766 = vmatpush2.bf16.msra.mxu0 0
      %767 = vmatprep.subr.bf16.mxu0 0
      %768 = vmatpush2.bf16.msra.mxu0 0
      %769 = vmatprep.subr.bf16.mxu0 0
      %770 = vmatpush2.bf16.msra.mxu0 0
      %771 = vmatprep.subr.bf16.mxu0 0
      %772 = vmatpush2.bf16.msra.mxu0 0
      %773 = vmatprep.subr.bf16.mxu0 0
      %774 = vmatpush2.bf16.msra.mxu0 0
      %775 = vmatprep.mubr.bf16.mxu0 0
      %776 = vmatmul.mubr.bf16.gmra.mxu0 %v741
      %v777 = vpop.f32.mrf.mxu0
      %v778 = vadd.f32 0.0, %v777
      %v779 = vpop.f32.mrf.mxu0
      %v780 = vpop.f32.mrf.mxu0
      %v781 = vadd.f32 0.0, %v780
      %v782 = vpop.f32.mrf.mxu0
      %783 = vdwg.mxu0
      %v784 = vpack.c.bf16 %v781, %v778
      %s785 = scalar_lea.vmem %s2, 192
      %v786 = vld [vmem:[%s785] sm:$0xf]
      %v787 = vld [vmem:[%s785 + $0x4] sm:$0xf]
      %v788 = vld [vmem:[%s785 + $0x8] sm:$0xf]
      %v789 = vld [vmem:[%s785 + $0xc] sm:$0xf]
      %v790 = vld [vmem:[%s785 + $0x10] sm:$0xf]
      %v791 = vld [vmem:[%s785 + $0x14] sm:$0xf]
      %v792 = vld [vmem:[%s785 + $0x18] sm:$0xf]
      %v793 = vld [vmem:[%s785 + $0x1c] sm:$0xf]
      %v794 = vld [vmem:[%s785 + $0x20] sm:$0xf]
      %v795 = vld [vmem:[%s785 + $0x24] sm:$0xf]
      %v796 = vld [vmem:[%s785 + $0x28] sm:$0xf]
      %v797 = vld [vmem:[%s785 + $0x2c] sm:$0xf]
      %v798 = vld [vmem:[%s785 + $0x30] sm:$0xf]
      %v799 = vld [vmem:[%s785 + $0x34] sm:$0xf]
      %v800 = vld [vmem:[%s785 + $0x38] sm:$0xf]
      %v801 = vld [vmem:[%s785 + $0x3c] sm:$0xf]
      %v818 = vunpack.c.l.b16 %v786
      %v819 = vunpack.c.l.b16 %v787
      %v820 = vunpack.c.l.b16 %v788
      %v821 = vunpack.c.l.b16 %v789
      %v822 = vunpack.c.l.b16 %v790
      %v823 = vunpack.c.l.b16 %v791
      %v824 = vunpack.c.l.b16 %v792
      %v825 = vunpack.c.l.b16 %v793
      %v826 = vunpack.c.l.b16 %v794
      %v827 = vunpack.c.l.b16 %v795
      %v828 = vunpack.c.l.b16 %v796
      %v829 = vunpack.c.l.b16 %v797
      %v830 = vunpack.c.l.b16 %v798
      %v831 = vunpack.c.l.b16 %v799
      %v832 = vunpack.c.l.b16 %v800
      %v833 = vunpack.c.l.b16 %v801
      %v834 = vpack.c.b16 %v819, %v818
      %v835 = vpack.c.b16 %v821, %v820
      %v836 = vpack.c.b16 %v823, %v822
      %v837 = vpack.c.b16 %v825, %v824
      %v838 = vpack.c.b16 %v827, %v826
      %v839 = vpack.c.b16 %v829, %v828
      %v840 = vpack.c.b16 %v831, %v830
      %v841 = vpack.c.b16 %v833, %v832
      %850 = vmatprep.subr.bf16.mxu0 0
      %851 = vmatpush1.bf16.msra.mxu0 %v841
      %852 = vmatprep.subr.bf16.mxu0 0
      %853 = vmatpush1.bf16.msra.mxu0 %v840
      %854 = vmatprep.subr.bf16.mxu0 0
      %855 = vmatpush1.bf16.msra.mxu0 %v839
      %856 = vmatprep.subr.bf16.mxu0 0
      %857 = vmatpush1.bf16.msra.mxu0 %v838
      %858 = vmatprep.subr.bf16.mxu0 0
      %859 = vmatpush1.bf16.msra.mxu0 %v837
      %860 = vmatprep.subr.bf16.mxu0 0
      %861 = vmatpush1.bf16.msra.mxu0 %v836
      %862 = vmatprep.subr.bf16.mxu0 0
      %863 = vmatpush1.bf16.msra.mxu0 %v835
      %864 = vmatprep.subr.bf16.mxu0 0
      %865 = vmatpush1.bf16.msra.mxu0 %v834
      %866 = vmatprep.subr.bf16.mxu0 0
      %867 = vmatpush2.bf16.msra.mxu0 0
      %868 = vmatprep.subr.bf16.mxu0 0
      %869 = vmatpush2.bf16.msra.mxu0 0
      %870 = vmatprep.subr.bf16.mxu0 0
      %871 = vmatpush2.bf16.msra.mxu0 0
      %872 = vmatprep.subr.bf16.mxu0 0
      %873 = vmatpush2.bf16.msra.mxu0 0
      %874 = vmatprep.subr.bf16.mxu0 0
      %875 = vmatpush2.bf16.msra.mxu0 0
      %876 = vmatprep.subr.bf16.mxu0 0
      %877 = vmatpush2.bf16.msra.mxu0 0
      %878 = vmatprep.subr.bf16.mxu0 0
      %879 = vmatpush2.bf16.msra.mxu0 0
      %880 = vmatprep.subr.bf16.mxu0 0
      %881 = vmatpush2.bf16.msra.mxu0 0
      %882 = vmatprep.mubr.bf16.mxu0 0
      %883 = vmatmul.mubr.bf16.gmra.mxu0 %v784
      %v884 = vpop.f32.mrf.mxu0
      %v885 = vadd.f32 0.0, %v884
      %v886 = vpop.f32.mrf.mxu0
      %v887 = vpop.f32.mrf.mxu0
      %v888 = vadd.f32 0.0, %v887
      %v889 = vpop.f32.mrf.mxu0
      %890 = vdwg.mxu0
      %v891 = vadd.f32 %v730, %v885
      %v892 = vadd.f32 %v731, %v888
      %s893 = scalar_lea.vmem %s1, 32
      %v894 = vld [vmem:[%s893] sm:$0xf]
      %v895 = vld [vmem:[%s893 + $0x4] sm:$0xf]
      %v898 = vunpack.c.l.b16 %v894
      %v899 = vunpack.c.l.b16 %v895
      %v900 = vpack.c.b16 %v899, %v898
      %v902 = vsel %vm261, %v900, 0
      %904 = vmatprep.subr.bf16.mxu0 0
      %905 = vmatpush1.bf16.msra.mxu0 0
      %906 = vmatprep.subr.bf16.mxu0 0
      %907 = vmatpush1.bf16.msra.mxu0 0
      %908 = vmatprep.subr.bf16.mxu0 0
      %909 = vmatpush1.bf16.msra.mxu0 0
      %910 = vmatprep.subr.bf16.mxu0 0
      %911 = vmatpush1.bf16.msra.mxu0 0
      %912 = vmatprep.subr.bf16.mxu0 0
      %913 = vmatpush1.bf16.msra.mxu0 0
      %914 = vmatprep.subr.bf16.mxu0 0
      %915 = vmatpush1.bf16.msra.mxu0 0
      %916 = vmatprep.subr.bf16.mxu0 0
      %917 = vmatpush1.bf16.msra.mxu0 0
      %918 = vmatprep.subr.bf16.mxu0 0
      %919 = vmatpush1.bf16.msra.mxu0 %v259
      %920 = vmatprep.subr.bf16.mxu0 0
      %921 = vmatpush2.bf16.msra.mxu0 0
      %922 = vmatprep.subr.bf16.mxu0 0
      %923 = vmatpush2.bf16.msra.mxu0 0
      %924 = vmatprep.subr.bf16.mxu0 0
      %925 = vmatpush2.bf16.msra.mxu0 0
      %926 = vmatprep.subr.bf16.mxu0 0
      %927 = vmatpush2.bf16.msra.mxu0 0
      %928 = vmatprep.subr.bf16.mxu0 0
      %929 = vmatpush2.bf16.msra.mxu0 0
      %930 = vmatprep.subr.bf16.mxu0 0
      %931 = vmatpush2.bf16.msra.mxu0 0
      %932 = vmatprep.subr.bf16.mxu0 0
      %933 = vmatpush2.bf16.msra.mxu0 0
      %934 = vmatprep.subr.bf16.mxu0 0
      %935 = vmatpush2.bf16.msra.mxu0 0
      %936 = vmatprep.mubr.bf16.mxu0 0
      %937 = vmatmul.mubr.bf16.gmra.mxu0 %v902
      %v938 = vpop.f32.mrf.mxu0
      %v939 = vadd.f32 0.0, %v938
      %v940 = vpop.f32.mrf.mxu0
      %v941 = vpop.f32.mrf.mxu0
      %v942 = vadd.f32 0.0, %v941
      %v943 = vpop.f32.mrf.mxu0
      %944 = vdwg.mxu0
      %v945 = vpack.c.bf16 %v942, %v939
      %s946 = scalar_lea.vmem %s2, 256
      %v947 = vld [vmem:[%s946] sm:$0xf]
      %v948 = vld [vmem:[%s946 + $0x4] sm:$0xf]
      %v949 = vld [vmem:[%s946 + $0x8] sm:$0xf]
      %v950 = vld [vmem:[%s946 + $0xc] sm:$0xf]
      %v951 = vld [vmem:[%s946 + $0x10] sm:$0xf]
      %v952 = vld [vmem:[%s946 + $0x14] sm:$0xf]
      %v953 = vld [vmem:[%s946 + $0x18] sm:$0xf]
      %v954 = vld [vmem:[%s946 + $0x1c] sm:$0xf]
      %v955 = vld [vmem:[%s946 + $0x20] sm:$0xf]
      %v956 = vld [vmem:[%s946 + $0x24] sm:$0xf]
      %v957 = vld [vmem:[%s946 + $0x28] sm:$0xf]
      %v958 = vld [vmem:[%s946 + $0x2c] sm:$0xf]
      %v959 = vld [vmem:[%s946 + $0x30] sm:$0xf]
      %v960 = vld [vmem:[%s946 + $0x34] sm:$0xf]
      %v961 = vld [vmem:[%s946 + $0x38] sm:$0xf]
      %v962 = vld [vmem:[%s946 + $0x3c] sm:$0xf]
      %v979 = vunpack.c.l.b16 %v947
      %v980 = vunpack.c.l.b16 %v948
      %v981 = vunpack.c.l.b16 %v949
      %v982 = vunpack.c.l.b16 %v950
      %v983 = vunpack.c.l.b16 %v951
      %v984 = vunpack.c.l.b16 %v952
      %v985 = vunpack.c.l.b16 %v953
      %v986 = vunpack.c.l.b16 %v954
      %v987 = vunpack.c.l.b16 %v955
      %v988 = vunpack.c.l.b16 %v956
      %v989 = vunpack.c.l.b16 %v957
      %v990 = vunpack.c.l.b16 %v958
      %v991 = vunpack.c.l.b16 %v959
      %v992 = vunpack.c.l.b16 %v960
      %v993 = vunpack.c.l.b16 %v961
      %v994 = vunpack.c.l.b16 %v962
      %v995 = vpack.c.b16 %v980, %v979
      %v996 = vpack.c.b16 %v982, %v981
      %v997 = vpack.c.b16 %v984, %v983
      %v998 = vpack.c.b16 %v986, %v985
      %v999 = vpack.c.b16 %v988, %v987
      %v1000 = vpack.c.b16 %v990, %v989
      %v1001 = vpack.c.b16 %v992, %v991
      %v1002 = vpack.c.b16 %v994, %v993
      %1011 = vmatprep.subr.bf16.mxu0 0
      %1012 = vmatpush1.bf16.msra.mxu0 %v1002
      %1013 = vmatprep.subr.bf16.mxu0 0
      %1014 = vmatpush1.bf16.msra.mxu0 %v1001
      %1015 = vmatprep.subr.bf16.mxu0 0
      %1016 = vmatpush1.bf16.msra.mxu0 %v1000
      %1017 = vmatprep.subr.bf16.mxu0 0
      %1018 = vmatpush1.bf16.msra.mxu0 %v999
      %1019 = vmatprep.subr.bf16.mxu0 0
      %1020 = vmatpush1.bf16.msra.mxu0 %v998
      %1021 = vmatprep.subr.bf16.mxu0 0
      %1022 = vmatpush1.bf16.msra.mxu0 %v997
      %1023 = vmatprep.subr.bf16.mxu0 0
      %1024 = vmatpush1.bf16.msra.mxu0 %v996
      %1025 = vmatprep.subr.bf16.mxu0 0
      %1026 = vmatpush1.bf16.msra.mxu0 %v995
      %1027 = vmatprep.subr.bf16.mxu0 0
      %1028 = vmatpush2.bf16.msra.mxu0 0
      %1029 = vmatprep.subr.bf16.mxu0 0
      %1030 = vmatpush2.bf16.msra.mxu0 0
      %1031 = vmatprep.subr.bf16.mxu0 0
      %1032 = vmatpush2.bf16.msra.mxu0 0
      %1033 = vmatprep.subr.bf16.mxu0 0
      %1034 = vmatpush2.bf16.msra.mxu0 0
      %1035 = vmatprep.subr.bf16.mxu0 0
      %1036 = vmatpush2.bf16.msra.mxu0 0
      %1037 = vmatprep.subr.bf16.mxu0 0
      %1038 = vmatpush2.bf16.msra.mxu0 0
      %1039 = vmatprep.subr.bf16.mxu0 0
      %1040 = vmatpush2.bf16.msra.mxu0 0
      %1041 = vmatprep.subr.bf16.mxu0 0
      %1042 = vmatpush2.bf16.msra.mxu0 0
      %1043 = vmatprep.mubr.bf16.mxu0 0
      %1044 = vmatmul.mubr.bf16.gmra.mxu0 %v945
      %v1045 = vpop.f32.mrf.mxu0
      %v1046 = vadd.f32 0.0, %v1045
      %v1047 = vpop.f32.mrf.mxu0
      %v1048 = vpop.f32.mrf.mxu0
      %v1049 = vadd.f32 0.0, %v1048
      %v1050 = vpop.f32.mrf.mxu0
      %1051 = vdwg.mxu0
      %v1052 = vadd.f32 %v891, %v1046
      %v1053 = vadd.f32 %v892, %v1049
      %s1054 = scalar_lea.vmem %s1, 40
      %v1055 = vld [vmem:[%s1054] sm:$0xf]
      %v1056 = vld [vmem:[%s1054 + $0x4] sm:$0xf]
      %v1059 = vunpack.c.l.b16 %v1055
      %v1060 = vunpack.c.l.b16 %v1056
      %v1061 = vpack.c.b16 %v1060, %v1059
      %v1063 = vsel %vm261, %v1061, 0
      %1065 = vmatprep.subr.bf16.mxu0 0
      %1066 = vmatpush1.bf16.msra.mxu0 0
      %1067 = vmatprep.subr.bf16.mxu0 0
      %1068 = vmatpush1.bf16.msra.mxu0 0
      %1069 = vmatprep.subr.bf16.mxu0 0
      %1070 = vmatpush1.bf16.msra.mxu0 0
      %1071 = vmatprep.subr.bf16.mxu0 0
      %1072 = vmatpush1.bf16.msra.mxu0 0
      %1073 = vmatprep.subr.bf16.mxu0 0
      %1074 = vmatpush1.bf16.msra.mxu0 0
      %1075 = vmatprep.subr.bf16.mxu0 0
      %1076 = vmatpush1.bf16.msra.mxu0 0
      %1077 = vmatprep.subr.bf16.mxu0 0
      %1078 = vmatpush1.bf16.msra.mxu0 0
      %1079 = vmatprep.subr.bf16.mxu0 0
      %1080 = vmatpush1.bf16.msra.mxu0 %v259
      %1081 = vmatprep.subr.bf16.mxu0 0
      %1082 = vmatpush2.bf16.msra.mxu0 0
      %1083 = vmatprep.subr.bf16.mxu0 0
      %1084 = vmatpush2.bf16.msra.mxu0 0
      %1085 = vmatprep.subr.bf16.mxu0 0
      %1086 = vmatpush2.bf16.msra.mxu0 0
      %1087 = vmatprep.subr.bf16.mxu0 0
      %1088 = vmatpush2.bf16.msra.mxu0 0
      %1089 = vmatprep.subr.bf16.mxu0 0
      %1090 = vmatpush2.bf16.msra.mxu0 0
      %1091 = vmatprep.subr.bf16.mxu0 0
      %1092 = vmatpush2.bf16.msra.mxu0 0
      %1093 = vmatprep.subr.bf16.mxu0 0
      %1094 = vmatpush2.bf16.msra.mxu0 0
      %1095 = vmatprep.subr.bf16.mxu0 0
      %1096 = vmatpush2.bf16.msra.mxu0 0
      %1097 = vmatprep.mubr.bf16.mxu0 0
      %1098 = vmatmul.mubr.bf16.gmra.mxu0 %v1063
      %v1099 = vpop.f32.mrf.mxu0
      %v1100 = vadd.f32 0.0, %v1099
      %v1101 = vpop.f32.mrf.mxu0
      %v1102 = vpop.f32.mrf.mxu0
      %v1103 = vadd.f32 0.0, %v1102
      %v1104 = vpop.f32.mrf.mxu0
      %1105 = vdwg.mxu0
      %v1106 = vpack.c.bf16 %v1103, %v1100
      %s1107 = scalar_lea.vmem %s2, 320
      %v1108 = vld [vmem:[%s1107] sm:$0xf]
      %v1109 = vld [vmem:[%s1107 + $0x4] sm:$0xf]
      %v1110 = vld [vmem:[%s1107 + $0x8] sm:$0xf]
      %v1111 = vld [vmem:[%s1107 + $0xc] sm:$0xf]
      %v1112 = vld [vmem:[%s1107 + $0x10] sm:$0xf]
      %v1113 = vld [vmem:[%s1107 + $0x14] sm:$0xf]
      %v1114 = vld [vmem:[%s1107 + $0x18] sm:$0xf]
      %v1115 = vld [vmem:[%s1107 + $0x1c] sm:$0xf]
      %v1116 = vld [vmem:[%s1107 + $0x20] sm:$0xf]
      %v1117 = vld [vmem:[%s1107 + $0x24] sm:$0xf]
      %v1118 = vld [vmem:[%s1107 + $0x28] sm:$0xf]
      %v1119 = vld [vmem:[%s1107 + $0x2c] sm:$0xf]
      %v1120 = vld [vmem:[%s1107 + $0x30] sm:$0xf]
      %v1121 = vld [vmem:[%s1107 + $0x34] sm:$0xf]
      %v1122 = vld [vmem:[%s1107 + $0x38] sm:$0xf]
      %v1123 = vld [vmem:[%s1107 + $0x3c] sm:$0xf]
      %v1140 = vunpack.c.l.b16 %v1108
      %v1141 = vunpack.c.l.b16 %v1109
      %v1142 = vunpack.c.l.b16 %v1110
      %v1143 = vunpack.c.l.b16 %v1111
      %v1144 = vunpack.c.l.b16 %v1112
      %v1145 = vunpack.c.l.b16 %v1113
      %v1146 = vunpack.c.l.b16 %v1114
      %v1147 = vunpack.c.l.b16 %v1115
      %v1148 = vunpack.c.l.b16 %v1116
      %v1149 = vunpack.c.l.b16 %v1117
      %v1150 = vunpack.c.l.b16 %v1118
      %v1151 = vunpack.c.l.b16 %v1119
      %v1152 = vunpack.c.l.b16 %v1120
      %v1153 = vunpack.c.l.b16 %v1121
      %v1154 = vunpack.c.l.b16 %v1122
      %v1155 = vunpack.c.l.b16 %v1123
      %v1156 = vpack.c.b16 %v1141, %v1140
      %v1157 = vpack.c.b16 %v1143, %v1142
      %v1158 = vpack.c.b16 %v1145, %v1144
      %v1159 = vpack.c.b16 %v1147, %v1146
      %v1160 = vpack.c.b16 %v1149, %v1148
      %v1161 = vpack.c.b16 %v1151, %v1150
      %v1162 = vpack.c.b16 %v1153, %v1152
      %v1163 = vpack.c.b16 %v1155, %v1154
      %1172 = vmatprep.subr.bf16.mxu0 0
      %1173 = vmatpush1.bf16.msra.mxu0 %v1163
      %1174 = vmatprep.subr.bf16.mxu0 0
      %1175 = vmatpush1.bf16.msra.mxu0 %v1162
      %1176 = vmatprep.subr.bf16.mxu0 0
      %1177 = vmatpush1.bf16.msra.mxu0 %v1161
      %1178 = vmatprep.subr.bf16.mxu0 0
      %1179 = vmatpush1.bf16.msra.mxu0 %v1160
      %1180 = vmatprep.subr.bf16.mxu0 0
      %1181 = vmatpush1.bf16.msra.mxu0 %v1159
      %1182 = vmatprep.subr.bf16.mxu0 0
      %1183 = vmatpush1.bf16.msra.mxu0 %v1158
      %1184 = vmatprep.subr.bf16.mxu0 0
      %1185 = vmatpush1.bf16.msra.mxu0 %v1157
      %1186 = vmatprep.subr.bf16.mxu0 0
      %1187 = vmatpush1.bf16.msra.mxu0 %v1156
      %1188 = vmatprep.subr.bf16.mxu0 0
      %1189 = vmatpush2.bf16.msra.mxu0 0
      %1190 = vmatprep.subr.bf16.mxu0 0
      %1191 = vmatpush2.bf16.msra.mxu0 0
      %1192 = vmatprep.subr.bf16.mxu0 0
      %1193 = vmatpush2.bf16.msra.mxu0 0
      %1194 = vmatprep.subr.bf16.mxu0 0
      %1195 = vmatpush2.bf16.msra.mxu0 0
      %1196 = vmatprep.subr.bf16.mxu0 0
      %1197 = vmatpush2.bf16.msra.mxu0 0
      %1198 = vmatprep.subr.bf16.mxu0 0
      %1199 = vmatpush2.bf16.msra.mxu0 0
      %1200 = vmatprep.subr.bf16.mxu0 0
      %1201 = vmatpush2.bf16.msra.mxu0 0
      %1202 = vmatprep.subr.bf16.mxu0 0
      %1203 = vmatpush2.bf16.msra.mxu0 0
      %1204 = vmatprep.mubr.bf16.mxu0 0
      %1205 = vmatmul.mubr.bf16.gmra.mxu0 %v1106
      %v1206 = vpop.f32.mrf.mxu0
      %v1207 = vadd.f32 0.0, %v1206
      %v1208 = vpop.f32.mrf.mxu0
      %v1209 = vpop.f32.mrf.mxu0
      %v1210 = vadd.f32 0.0, %v1209
      %v1211 = vpop.f32.mrf.mxu0
      %1212 = vdwg.mxu0
      %v1213 = vadd.f32 %v1052, %v1207
      %v1214 = vadd.f32 %v1053, %v1210
      %s1215 = scalar_lea.vmem %s1, 48
      %v1216 = vld [vmem:[%s1215] sm:$0xf]
      %v1217 = vld [vmem:[%s1215 + $0x4] sm:$0xf]
      %v1220 = vunpack.c.l.b16 %v1216
      %v1221 = vunpack.c.l.b16 %v1217
      %v1222 = vpack.c.b16 %v1221, %v1220
      %v1224 = vsel %vm261, %v1222, 0
      %1226 = vmatprep.subr.bf16.mxu0 0
      %1227 = vmatpush1.bf16.msra.mxu0 0
      %1228 = vmatprep.subr.bf16.mxu0 0
      %1229 = vmatpush1.bf16.msra.mxu0 0
      %1230 = vmatprep.subr.bf16.mxu0 0
      %1231 = vmatpush1.bf16.msra.mxu0 0
      %1232 = vmatprep.subr.bf16.mxu0 0
      %1233 = vmatpush1.bf16.msra.mxu0 0
      %1234 = vmatprep.subr.bf16.mxu0 0
      %1235 = vmatpush1.bf16.msra.mxu0 0
      %1236 = vmatprep.subr.bf16.mxu0 0
      %1237 = vmatpush1.bf16.msra.mxu0 0
      %1238 = vmatprep.subr.bf16.mxu0 0
      %1239 = vmatpush1.bf16.msra.mxu0 0
      %1240 = vmatprep.subr.bf16.mxu0 0
      %1241 = vmatpush1.bf16.msra.mxu0 %v259
      %1242 = vmatprep.subr.bf16.mxu0 0
      %1243 = vmatpush2.bf16.msra.mxu0 0
      %1244 = vmatprep.subr.bf16.mxu0 0
      %1245 = vmatpush2.bf16.msra.mxu0 0
      %1246 = vmatprep.subr.bf16.mxu0 0
      %1247 = vmatpush2.bf16.msra.mxu0 0
      %1248 = vmatprep.subr.bf16.mxu0 0
      %1249 = vmatpush2.bf16.msra.mxu0 0
      %1250 = vmatprep.subr.bf16.mxu0 0
      %1251 = vmatpush2.bf16.msra.mxu0 0
      %1252 = vmatprep.subr.bf16.mxu0 0
      %1253 = vmatpush2.bf16.msra.mxu0 0
      %1254 = vmatprep.subr.bf16.mxu0 0
      %1255 = vmatpush2.bf16.msra.mxu0 0
      %1256 = vmatprep.subr.bf16.mxu0 0
      %1257 = vmatpush2.bf16.msra.mxu0 0
      %1258 = vmatprep.mubr.bf16.mxu0 0
      %1259 = vmatmul.mubr.bf16.gmra.mxu0 %v1224
      %v1260 = vpop.f32.mrf.mxu0
      %v1261 = vadd.f32 0.0, %v1260
      %v1262 = vpop.f32.mrf.mxu0
      %v1263 = vpop.f32.mrf.mxu0
      %v1264 = vadd.f32 0.0, %v1263
      %v1265 = vpop.f32.mrf.mxu0
      %1266 = vdwg.mxu0
      %v1267 = vpack.c.bf16 %v1264, %v1261
      %s1268 = scalar_lea.vmem %s2, 384
      %v1269 = vld [vmem:[%s1268] sm:$0xf]
      %v1270 = vld [vmem:[%s1268 + $0x4] sm:$0xf]
      %v1271 = vld [vmem:[%s1268 + $0x8] sm:$0xf]
      %v1272 = vld [vmem:[%s1268 + $0xc] sm:$0xf]
      %v1273 = vld [vmem:[%s1268 + $0x10] sm:$0xf]
      %v1274 = vld [vmem:[%s1268 + $0x14] sm:$0xf]
      %v1275 = vld [vmem:[%s1268 + $0x18] sm:$0xf]
      %v1276 = vld [vmem:[%s1268 + $0x1c] sm:$0xf]
      %v1277 = vld [vmem:[%s1268 + $0x20] sm:$0xf]
      %v1278 = vld [vmem:[%s1268 + $0x24] sm:$0xf]
      %v1279 = vld [vmem:[%s1268 + $0x28] sm:$0xf]
      %v1280 = vld [vmem:[%s1268 + $0x2c] sm:$0xf]
      %v1281 = vld [vmem:[%s1268 + $0x30] sm:$0xf]
      %v1282 = vld [vmem:[%s1268 + $0x34] sm:$0xf]
      %v1283 = vld [vmem:[%s1268 + $0x38] sm:$0xf]
      %v1284 = vld [vmem:[%s1268 + $0x3c] sm:$0xf]
      %v1301 = vunpack.c.l.b16 %v1269
      %v1302 = vunpack.c.l.b16 %v1270
      %v1303 = vunpack.c.l.b16 %v1271
      %v1304 = vunpack.c.l.b16 %v1272
      %v1305 = vunpack.c.l.b16 %v1273
      %v1306 = vunpack.c.l.b16 %v1274
      %v1307 = vunpack.c.l.b16 %v1275
      %v1308 = vunpack.c.l.b16 %v1276
      %v1309 = vunpack.c.l.b16 %v1277
      %v1310 = vunpack.c.l.b16 %v1278
      %v1311 = vunpack.c.l.b16 %v1279
      %v1312 = vunpack.c.l.b16 %v1280
      %v1313 = vunpack.c.l.b16 %v1281
      %v1314 = vunpack.c.l.b16 %v1282
      %v1315 = vunpack.c.l.b16 %v1283
      %v1316 = vunpack.c.l.b16 %v1284
      %v1317 = vpack.c.b16 %v1302, %v1301
      %v1318 = vpack.c.b16 %v1304, %v1303
      %v1319 = vpack.c.b16 %v1306, %v1305
      %v1320 = vpack.c.b16 %v1308, %v1307
      %v1321 = vpack.c.b16 %v1310, %v1309
      %v1322 = vpack.c.b16 %v1312, %v1311
      %v1323 = vpack.c.b16 %v1314, %v1313
      %v1324 = vpack.c.b16 %v1316, %v1315
      %1333 = vmatprep.subr.bf16.mxu0 0
      %1334 = vmatpush1.bf16.msra.mxu0 %v1324
      %1335 = vmatprep.subr.bf16.mxu0 0
      %1336 = vmatpush1.bf16.msra.mxu0 %v1323
      %1337 = vmatprep.subr.bf16.mxu0 0
      %1338 = vmatpush1.bf16.msra.mxu0 %v1322
      %1339 = vmatprep.subr.bf16.mxu0 0
      %1340 = vmatpush1.bf16.msra.mxu0 %v1321
      %1341 = vmatprep.subr.bf16.mxu0 0
      %1342 = vmatpush1.bf16.msra.mxu0 %v1320
      %1343 = vmatprep.subr.bf16.mxu0 0
      %1344 = vmatpush1.bf16.msra.mxu0 %v1319
      %1345 = vmatprep.subr.bf16.mxu0 0
      %1346 = vmatpush1.bf16.msra.mxu0 %v1318
      %1347 = vmatprep.subr.bf16.mxu0 0
      %1348 = vmatpush1.bf16.msra.mxu0 %v1317
      %1349 = vmatprep.subr.bf16.mxu0 0
      %1350 = vmatpush2.bf16.msra.mxu0 0
      %1351 = vmatprep.subr.bf16.mxu0 0
      %1352 = vmatpush2.bf16.msra.mxu0 0
      %1353 = vmatprep.subr.bf16.mxu0 0
      %1354 = vmatpush2.bf16.msra.mxu0 0
      %1355 = vmatprep.subr.bf16.mxu0 0
      %1356 = vmatpush2.bf16.msra.mxu0 0
      %1357 = vmatprep.subr.bf16.mxu0 0
      %1358 = vmatpush2.bf16.msra.mxu0 0
      %1359 = vmatprep.subr.bf16.mxu0 0
      %1360 = vmatpush2.bf16.msra.mxu0 0
      %1361 = vmatprep.subr.bf16.mxu0 0
      %1362 = vmatpush2.bf16.msra.mxu0 0
      %1363 = vmatprep.subr.bf16.mxu0 0
      %1364 = vmatpush2.bf16.msra.mxu0 0
      %1365 = vmatprep.mubr.bf16.mxu0 0
      %1366 = vmatmul.mubr.bf16.gmra.mxu0 %v1267
      %v1367 = vpop.f32.mrf.mxu0
      %v1368 = vadd.f32 0.0, %v1367
      %v1369 = vpop.f32.mrf.mxu0
      %v1370 = vpop.f32.mrf.mxu0
      %v1371 = vadd.f32 0.0, %v1370
      %v1372 = vpop.f32.mrf.mxu0
      %1373 = vdwg.mxu0
      %v1374 = vadd.f32 %v1213, %v1368
      %v1375 = vadd.f32 %v1214, %v1371
      %s1376 = scalar_lea.vmem %s1, 56
      %v1377 = vld [vmem:[%s1376] sm:$0xf]
      %v1378 = vld [vmem:[%s1376 + $0x4] sm:$0xf]
      %v1381 = vunpack.c.l.b16 %v1377
      %v1382 = vunpack.c.l.b16 %v1378
      %v1383 = vpack.c.b16 %v1382, %v1381
      %v1385 = vsel %vm261, %v1383, 0
      %1387 = vmatprep.subr.bf16.mxu0 0
      %1388 = vmatpush1.bf16.msra.mxu0 0
      %1389 = vmatprep.subr.bf16.mxu0 0
      %1390 = vmatpush1.bf16.msra.mxu0 0
      %1391 = vmatprep.subr.bf16.mxu0 0
      %1392 = vmatpush1.bf16.msra.mxu0 0
      %1393 = vmatprep.subr.bf16.mxu0 0
      %1394 = vmatpush1.bf16.msra.mxu0 0
      %1395 = vmatprep.subr.bf16.mxu0 0
      %1396 = vmatpush1.bf16.msra.mxu0 0
      %1397 = vmatprep.subr.bf16.mxu0 0
      %1398 = vmatpush1.bf16.msra.mxu0 0
      %1399 = vmatprep.subr.bf16.mxu0 0
      %1400 = vmatpush1.bf16.msra.mxu0 0
      %1401 = vmatprep.subr.bf16.mxu0 0
      %1402 = vmatpush1.bf16.msra.mxu0 %v259
      %1403 = vmatprep.subr.bf16.mxu0 0
      %1404 = vmatpush2.bf16.msra.mxu0 0
      %1405 = vmatprep.subr.bf16.mxu0 0
      %1406 = vmatpush2.bf16.msra.mxu0 0
      %1407 = vmatprep.subr.bf16.mxu0 0
      %1408 = vmatpush2.bf16.msra.mxu0 0
      %1409 = vmatprep.subr.bf16.mxu0 0
      %1410 = vmatpush2.bf16.msra.mxu0 0
      %1411 = vmatprep.subr.bf16.mxu0 0
      %1412 = vmatpush2.bf16.msra.mxu0 0
      %1413 = vmatprep.subr.bf16.mxu0 0
      %1414 = vmatpush2.bf16.msra.mxu0 0
      %1415 = vmatprep.subr.bf16.mxu0 0
      %1416 = vmatpush2.bf16.msra.mxu0 0
      %1417 = vmatprep.subr.bf16.mxu0 0
      %1418 = vmatpush2.bf16.msra.mxu0 0
      %1419 = vmatprep.mubr.bf16.mxu0 0
      %1420 = vmatmul.mubr.bf16.gmra.mxu0 %v1385
      %v1421 = vpop.f32.mrf.mxu0
      %v1422 = vadd.f32 0.0, %v1421
      %v1423 = vpop.f32.mrf.mxu0
      %v1424 = vpop.f32.mrf.mxu0
      %v1425 = vadd.f32 0.0, %v1424
      %v1426 = vpop.f32.mrf.mxu0
      %1427 = vdwg.mxu0
      %v1428 = vpack.c.bf16 %v1425, %v1422
      %s1429 = scalar_lea.vmem %s2, 448
      %v1430 = vld [vmem:[%s1429] sm:$0xf]
      %v1431 = vld [vmem:[%s1429 + $0x4] sm:$0xf]
      %v1432 = vld [vmem:[%s1429 + $0x8] sm:$0xf]
      %v1433 = vld [vmem:[%s1429 + $0xc] sm:$0xf]
      %v1434 = vld [vmem:[%s1429 + $0x10] sm:$0xf]
      %v1435 = vld [vmem:[%s1429 + $0x14] sm:$0xf]
      %v1436 = vld [vmem:[%s1429 + $0x18] sm:$0xf]
      %v1437 = vld [vmem:[%s1429 + $0x1c] sm:$0xf]
      %v1438 = vld [vmem:[%s1429 + $0x20] sm:$0xf]
      %v1439 = vld [vmem:[%s1429 + $0x24] sm:$0xf]
      %v1440 = vld [vmem:[%s1429 + $0x28] sm:$0xf]
      %v1441 = vld [vmem:[%s1429 + $0x2c] sm:$0xf]
      %v1442 = vld [vmem:[%s1429 + $0x30] sm:$0xf]
      %v1443 = vld [vmem:[%s1429 + $0x34] sm:$0xf]
      %v1444 = vld [vmem:[%s1429 + $0x38] sm:$0xf]
      %v1445 = vld [vmem:[%s1429 + $0x3c] sm:$0xf]
      %v1462 = vunpack.c.l.b16 %v1430
      %v1463 = vunpack.c.l.b16 %v1431
      %v1464 = vunpack.c.l.b16 %v1432
      %v1465 = vunpack.c.l.b16 %v1433
      %v1466 = vunpack.c.l.b16 %v1434
      %v1467 = vunpack.c.l.b16 %v1435
      %v1468 = vunpack.c.l.b16 %v1436
      %v1469 = vunpack.c.l.b16 %v1437
      %v1470 = vunpack.c.l.b16 %v1438
      %v1471 = vunpack.c.l.b16 %v1439
      %v1472 = vunpack.c.l.b16 %v1440
      %v1473 = vunpack.c.l.b16 %v1441
      %v1474 = vunpack.c.l.b16 %v1442
      %v1475 = vunpack.c.l.b16 %v1443
      %v1476 = vunpack.c.l.b16 %v1444
      %v1477 = vunpack.c.l.b16 %v1445
      %v1478 = vpack.c.b16 %v1463, %v1462
      %v1479 = vpack.c.b16 %v1465, %v1464
      %v1480 = vpack.c.b16 %v1467, %v1466
      %v1481 = vpack.c.b16 %v1469, %v1468
      %v1482 = vpack.c.b16 %v1471, %v1470
      %v1483 = vpack.c.b16 %v1473, %v1472
      %v1484 = vpack.c.b16 %v1475, %v1474
      %v1485 = vpack.c.b16 %v1477, %v1476
      %1494 = vmatprep.subr.bf16.mxu0 0
      %1495 = vmatpush1.bf16.msra.mxu0 %v1485
      %1496 = vmatprep.subr.bf16.mxu0 0
      %1497 = vmatpush1.bf16.msra.mxu0 %v1484
      %1498 = vmatprep.subr.bf16.mxu0 0
      %1499 = vmatpush1.bf16.msra.mxu0 %v1483
      %1500 = vmatprep.subr.bf16.mxu0 0
      %1501 = vmatpush1.bf16.msra.mxu0 %v1482
      %1502 = vmatprep.subr.bf16.mxu0 0
      %1503 = vmatpush1.bf16.msra.mxu0 %v1481
      %1504 = vmatprep.subr.bf16.mxu0 0
      %1505 = vmatpush1.bf16.msra.mxu0 %v1480
      %1506 = vmatprep.subr.bf16.mxu0 0
      %1507 = vmatpush1.bf16.msra.mxu0 %v1479
      %1508 = vmatprep.subr.bf16.mxu0 0
      %1509 = vmatpush1.bf16.msra.mxu0 %v1478
      %1510 = vmatprep.subr.bf16.mxu0 0
      %1511 = vmatpush2.bf16.msra.mxu0 0
      %1512 = vmatprep.subr.bf16.mxu0 0
      %1513 = vmatpush2.bf16.msra.mxu0 0
      %1514 = vmatprep.subr.bf16.mxu0 0
      %1515 = vmatpush2.bf16.msra.mxu0 0
      %1516 = vmatprep.subr.bf16.mxu0 0
      %1517 = vmatpush2.bf16.msra.mxu0 0
      %1518 = vmatprep.subr.bf16.mxu0 0
      %1519 = vmatpush2.bf16.msra.mxu0 0
      %1520 = vmatprep.subr.bf16.mxu0 0
      %1521 = vmatpush2.bf16.msra.mxu0 0
      %1522 = vmatprep.subr.bf16.mxu0 0
      %1523 = vmatpush2.bf16.msra.mxu0 0
      %1524 = vmatprep.subr.bf16.mxu0 0
      %1525 = vmatpush2.bf16.msra.mxu0 0
      %1526 = vmatprep.mubr.bf16.mxu0 0
      %1527 = vmatmul.mubr.bf16.gmra.mxu0 %v1428
      %v1528 = vpop.f32.mrf.mxu0
      %v1529 = vadd.f32 0.0, %v1528
      %v1530 = vpop.f32.mrf.mxu0
      %v1531 = vpop.f32.mrf.mxu0
      %v1532 = vadd.f32 0.0, %v1531
      %v1533 = vpop.f32.mrf.mxu0
      %1534 = vdwg.mxu0
      %v1535 = vadd.f32 %v1374, %v1529
      %v1536 = vadd.f32 %v1375, %v1532
      %s1537 = scalar_lea.vmem %s1, 64
      %v1538 = vld [vmem:[%s1537] sm:$0xf]
      %v1539 = vld [vmem:[%s1537 + $0x4] sm:$0xf]
      %v1542 = vunpack.c.l.b16 %v1538
      %v1543 = vunpack.c.l.b16 %v1539
      %v1544 = vpack.c.b16 %v1543, %v1542
      %v1546 = vsel %vm261, %v1544, 0
      %1548 = vmatprep.subr.bf16.mxu0 0
      %1549 = vmatpush1.bf16.msra.mxu0 0
      %1550 = vmatprep.subr.bf16.mxu0 0
      %1551 = vmatpush1.bf16.msra.mxu0 0
      %1552 = vmatprep.subr.bf16.mxu0 0
      %1553 = vmatpush1.bf16.msra.mxu0 0
      %1554 = vmatprep.subr.bf16.mxu0 0
      %1555 = vmatpush1.bf16.msra.mxu0 0
      %1556 = vmatprep.subr.bf16.mxu0 0
      %1557 = vmatpush1.bf16.msra.mxu0 0
      %1558 = vmatprep.subr.bf16.mxu0 0
      %1559 = vmatpush1.bf16.msra.mxu0 0
      %1560 = vmatprep.subr.bf16.mxu0 0
      %1561 = vmatpush1.bf16.msra.mxu0 0
      %1562 = vmatprep.subr.bf16.mxu0 0
      %1563 = vmatpush1.bf16.msra.mxu0 %v259
      %1564 = vmatprep.subr.bf16.mxu0 0
      %1565 = vmatpush2.bf16.msra.mxu0 0
      %1566 = vmatprep.subr.bf16.mxu0 0
      %1567 = vmatpush2.bf16.msra.mxu0 0
      %1568 = vmatprep.subr.bf16.mxu0 0
      %1569 = vmatpush2.bf16.msra.mxu0 0
      %1570 = vmatprep.subr.bf16.mxu0 0
      %1571 = vmatpush2.bf16.msra.mxu0 0
      %1572 = vmatprep.subr.bf16.mxu0 0
      %1573 = vmatpush2.bf16.msra.mxu0 0
      %1574 = vmatprep.subr.bf16.mxu0 0
      %1575 = vmatpush2.bf16.msra.mxu0 0
      %1576 = vmatprep.subr.bf16.mxu0 0
      %1577 = vmatpush2.bf16.msra.mxu0 0
      %1578 = vmatprep.subr.bf16.mxu0 0
      %1579 = vmatpush2.bf16.msra.mxu0 0
      %1580 = vmatprep.mubr.bf16.mxu0 0
      %1581 = vmatmul.mubr.bf16.gmra.mxu0 %v1546
      %v1582 = vpop.f32.mrf.mxu0
      %v1583 = vadd.f32 0.0, %v1582
      %v1584 = vpop.f32.mrf.mxu0
      %v1585 = vpop.f32.mrf.mxu0
      %v1586 = vadd.f32 0.0, %v1585
      %v1587 = vpop.f32.mrf.mxu0
      %1588 = vdwg.mxu0
      %v1589 = vpack.c.bf16 %v1586, %v1583
      %s1590 = scalar_lea.vmem %s2, 512
      %v1591 = vld [vmem:[%s1590] sm:$0xf]
      %v1592 = vld [vmem:[%s1590 + $0x4] sm:$0xf]
      %v1593 = vld [vmem:[%s1590 + $0x8] sm:$0xf]
      %v1594 = vld [vmem:[%s1590 + $0xc] sm:$0xf]
      %v1595 = vld [vmem:[%s1590 + $0x10] sm:$0xf]
      %v1596 = vld [vmem:[%s1590 + $0x14] sm:$0xf]
      %v1597 = vld [vmem:[%s1590 + $0x18] sm:$0xf]
      %v1598 = vld [vmem:[%s1590 + $0x1c] sm:$0xf]
      %v1599 = vld [vmem:[%s1590 + $0x20] sm:$0xf]
      %v1600 = vld [vmem:[%s1590 + $0x24] sm:$0xf]
      %v1601 = vld [vmem:[%s1590 + $0x28] sm:$0xf]
      %v1602 = vld [vmem:[%s1590 + $0x2c] sm:$0xf]
      %v1603 = vld [vmem:[%s1590 + $0x30] sm:$0xf]
      %v1604 = vld [vmem:[%s1590 + $0x34] sm:$0xf]
      %v1605 = vld [vmem:[%s1590 + $0x38] sm:$0xf]
      %v1606 = vld [vmem:[%s1590 + $0x3c] sm:$0xf]
      %v1623 = vunpack.c.l.b16 %v1591
      %v1624 = vunpack.c.l.b16 %v1592
      %v1625 = vunpack.c.l.b16 %v1593
      %v1626 = vunpack.c.l.b16 %v1594
      %v1627 = vunpack.c.l.b16 %v1595
      %v1628 = vunpack.c.l.b16 %v1596
      %v1629 = vunpack.c.l.b16 %v1597
      %v1630 = vunpack.c.l.b16 %v1598
      %v1631 = vunpack.c.l.b16 %v1599
      %v1632 = vunpack.c.l.b16 %v1600
      %v1633 = vunpack.c.l.b16 %v1601
      %v1634 = vunpack.c.l.b16 %v1602
      %v1635 = vunpack.c.l.b16 %v1603
      %v1636 = vunpack.c.l.b16 %v1604
      %v1637 = vunpack.c.l.b16 %v1605
      %v1638 = vunpack.c.l.b16 %v1606
      %v1639 = vpack.c.b16 %v1624, %v1623
      %v1640 = vpack.c.b16 %v1626, %v1625
      %v1641 = vpack.c.b16 %v1628, %v1627
      %v1642 = vpack.c.b16 %v1630, %v1629
      %v1643 = vpack.c.b16 %v1632, %v1631
      %v1644 = vpack.c.b16 %v1634, %v1633
      %v1645 = vpack.c.b16 %v1636, %v1635
      %v1646 = vpack.c.b16 %v1638, %v1637
      %1655 = vmatprep.subr.bf16.mxu0 0
      %1656 = vmatpush1.bf16.msra.mxu0 %v1646
      %1657 = vmatprep.subr.bf16.mxu0 0
      %1658 = vmatpush1.bf16.msra.mxu0 %v1645
      %1659 = vmatprep.subr.bf16.mxu0 0
      %1660 = vmatpush1.bf16.msra.mxu0 %v1644
      %1661 = vmatprep.subr.bf16.mxu0 0
      %1662 = vmatpush1.bf16.msra.mxu0 %v1643
      %1663 = vmatprep.subr.bf16.mxu0 0
      %1664 = vmatpush1.bf16.msra.mxu0 %v1642
      %1665 = vmatprep.subr.bf16.mxu0 0
      %1666 = vmatpush1.bf16.msra.mxu0 %v1641
      %1667 = vmatprep.subr.bf16.mxu0 0
      %1668 = vmatpush1.bf16.msra.mxu0 %v1640
      %1669 = vmatprep.subr.bf16.mxu0 0
      %1670 = vmatpush1.bf16.msra.mxu0 %v1639
      %1671 = vmatprep.subr.bf16.mxu0 0
      %1672 = vmatpush2.bf16.msra.mxu0 0
      %1673 = vmatprep.subr.bf16.mxu0 0
      %1674 = vmatpush2.bf16.msra.mxu0 0
      %1675 = vmatprep.subr.bf16.mxu0 0
      %1676 = vmatpush2.bf16.msra.mxu0 0
      %1677 = vmatprep.subr.bf16.mxu0 0
      %1678 = vmatpush2.bf16.msra.mxu0 0
      %1679 = vmatprep.subr.bf16.mxu0 0
      %1680 = vmatpush2.bf16.msra.mxu0 0
      %1681 = vmatprep.subr.bf16.mxu0 0
      %1682 = vmatpush2.bf16.msra.mxu0 0
      %1683 = vmatprep.subr.bf16.mxu0 0
      %1684 = vmatpush2.bf16.msra.mxu0 0
      %1685 = vmatprep.subr.bf16.mxu0 0
      %1686 = vmatpush2.bf16.msra.mxu0 0
      %1687 = vmatprep.mubr.bf16.mxu0 0
      %1688 = vmatmul.mubr.bf16.gmra.mxu0 %v1589
      %v1689 = vpop.f32.mrf.mxu0
      %v1690 = vadd.f32 0.0, %v1689
      %v1691 = vpop.f32.mrf.mxu0
      %v1692 = vpop.f32.mrf.mxu0
      %v1693 = vadd.f32 0.0, %v1692
      %v1694 = vpop.f32.mrf.mxu0
      %1695 = vdwg.mxu0
      %v1696 = vadd.f32 %v1535, %v1690
      %v1697 = vadd.f32 %v1536, %v1693
      %v1698 = vld [vmem:[%s3] sm:$0x1]
      %v1700 = vlaneseq
      %v1701 = vshrl.u32 %v1700, 7
      %v1702 = vsub.s32 0, %v1701
      %v1703 = vrot.slane %v1698, %v1702
      %v1705 = vadd.f32 %v1696, %v1703
      %v1706 = vadd.f32 %v1697, %v1703
      %v1707 = vlaneseq
      %v1708 = vand.u32 %v1707, 127
      %v1709 = vxor.u32 %v1705, 2147483648
      %v1710 = vxor.u32 %v1706, 2147483648
      %v1711 = vmul.f32 %v1709, 1.442695
      %v1712 = vpow.pop %v1711
      %v1713 = vmul.f32 %v1710, 1.442695
      %v1714 = vpow.pop %v1713
      %v1715 = vadd.f32 %v1712, 1.0
      %v1716 = vadd.f32 %v1714, 1.0
      %v1717 = vrcp.pop %v1715
      %v1718 = vmul.f32 1.0, %v1717
      %v1719 = vrcp.pop %v1716
      %v1720 = vmul.f32 1.0, %v1719
      %v1721 = vld [vmem:[%s239] sm:$0xff]
      %v1722 = vld [vmem:[%s239 + $0x8] sm:$0xff]
      %v1723 = vadd.f32 %v1705, %v1721
      %v1724 = vadd.f32 %v1706, %v1722
      %v1725 = vmul.f32 %v1723, 2.0
      %v1726 = vmul.f32 %v1724, 2.0
      %v1727 = vxor.u32 %v1725, 2147483648
      %v1728 = vxor.u32 %v1726, 2147483648
      %v1729 = vmul.f32 %v1727, 1.442695
      %v1730 = vpow.pop %v1729
      %v1731 = vmul.f32 %v1728, 1.442695
      %v1732 = vpow.pop %v1731
      %v1733 = vadd.f32 %v1730, 1.0
      %v1734 = vadd.f32 %v1732, 1.0
      %v1735 = vrcp.pop %v1733
      %v1736 = vmul.f32 1.0, %v1735
      %v1737 = vrcp.pop %v1734
      %v1738 = vmul.f32 1.0, %v1737
      %vm1739 = vcmp.ge.s32.totalorder %v1708, 64
      %vm1740 = vcmp.lt.s32.totalorder %v1708, 68
      %vm1741 = vmand %vm1739, %vm1740
      %vm1742 = vcmp.ge.s32.totalorder %v1708, 68
      %vm1743 = vcmp.lt.s32.totalorder %v1708, 72
      %vm1744 = vmand %vm1742, %vm1743
      %v1745 = vsel %vm1744, %v1736, %v1705
      %v1746 = vsel %vm1744, %v1738, %v1706
      %v1747 = vsel %vm1741, %v1718, %v1745
      %v1748 = vsel %vm1741, %v1720, %v1746
      %1749 = vst [vmem:[%s244] sm:$0xff] %v1747
      %1750 = vst [vmem:[%s244 + $0x8] sm:$0xff] %v1748
      %p1751 = scmp.lt.s32.totalorder %s16, 1
      %s1752 = scalar_select %p1751, %s16, 1
      %s1753 = smul.addr %s1752, 2
      %s1754 = smul.addr %s1753, 8
      %s1755 = scalar_lea.vmem %s5, %s1754
      // Predicated region
      $region41: #{patchy_vae_forward.7} parent=39 // pred_check
        %p1756 = pneg %p149
      $region42: #{patchy_vae_forward.7} parent=39 // pred_check_branch
        %1758 = sbr.rel (%p1756) target = $region44
      $region43: #{patchy_vae_forward.7} parent=39 // pred_region
        _
      $region44: #{patchy_vae_forward.7} parent=39 // pred_fallthru
        _
    $region40: #{patchy_vae_forward.7} parent=5 // pred_fallthru
      _
    %p1759 = scmp.le.s32.totalorder 2, %s11
    // Predicated region
    $region45: #{patchy_vae_forward.7} parent=5 // pred_check
      %p1760 = pneg %p1759
    $region46: #{patchy_vae_forward.7} parent=5 // pred_check_branch
      %1762 = sbr.rel (%p1760) target = $region48
    $region47: #{patchy_vae_forward.7} parent=5 // pred_region
      %s1763 = ssub.s32 %s11, 2
      // Predicated region
      $region49: #{patchy_vae_forward.7} parent=47 // pred_check
        %p1764 = pneg %p155
      $region50: #{patchy_vae_forward.7} parent=47 // pred_check_branch
        %1766 = sbr.rel (%p1764) target = $region52
      $region51: #{patchy_vae_forward.7} parent=47 // pred_region
        %p1767 = scmp.lt.s32.totalorder %s17, 1
        %s1768 = scalar_select %p1767, %s17, 1
        %s1769 = smul.addr %s1768, 2
        %s1770 = smul.addr %s1769, 8
        %s1771 = scalar_lea.vmem %s5, %s1770
      $region52: #{patchy_vae_forward.7} parent=47 // pred_fallthru
        _
    $region48: #{patchy_vae_forward.7} parent=5 // pred_fallthru
      _
  $region6: #{patchy_vae_forward.7} parent=0 // loop_footer
    %s15 = sadd.s32 1, %s11
  $region7: #{patchy_vae_forward.7} parent=0 // loop_footer_branch
    %10 = sbr.rel target = $region3
  $region8: #{patchy_vae_forward.7} parent=0 // loop_exit
    _

</llo_original>
